<compile_context>
chip_gen: v5e
topology: v5e:2x2
jax: 0.10.0
libtpu: 0.0.40
codegen_flags: <defaults>
</compile_context>

<pallas_src>
import functools
import numpy as np
import jax
import jax.numpy as jnp
from jax import lax
from jax.experimental import pallas as pl
from jax.experimental.pallas import tpu as pltpu

PAD = 0          # Constants.PAD
LN_EPS = 1e-5    # torch.nn.LayerNorm default
NEG_BIG = -1e9   # finite "masked out" additive bias (avoids inf-inf NaNs)

# Ordered key lists shared between param init, the wrapper arg list and the kernel signature.
ENC_KEYS  = ("wqkv", "bqkv", "wo", "bo", "ln1_g", "ln1_b",
             "w1", "b1", "w2", "b2", "ln2_g", "ln2_b")
DSLF_KEYS = ("wqkv", "bqkv", "wo", "bo", "ln_g", "ln_b")
DCRS_KEYS = ("wq", "bq", "wkv", "bkv", "wo", "bo", "ln_g", "ln_b")
DFFN_KEYS = ("w1", "b1", "w2", "b2", "ln_g", "ln_b")


# ----------------------------- fused whole-forward kernel -----------------------------

def _transformer_kernel(
        # per-batch-element inputs (grid axis 0 splits the batch)
        src_x_ref, tgt_x_ref, bias_ref, npm_ref,
        # encoder input projection
        vid_w, vid_b,
        # encoder layer stack (stacked over layers)
        e_wqkv, e_bqkv, e_wo, e_bo, e_g1, e_be1,
        e_w1, e_bi1, e_w2, e_bi2, e_g2, e_be2,
        # decoder self-attention stack
        s_wqkv, s_bqkv, s_wo, s_bo, s_g, s_be,
        # decoder cross-attention stack
        c_wq, c_bq, c_wkv, c_bkv, c_wo, c_bo, c_g, c_be,
        # decoder FFN stack
        f_w1, f_bi1, f_w2, f_bi2, f_g, f_be,
        # tied logits projection (lane-dense padded)
        prj_w,
        # output
        out_ref,
        *, n_layers, n_head, d_k, d_v, inv_temp, logit_scale):

    hk = n_head * d_k

    def layer_norm(x, g, b):
        mu = jnp.mean(x, axis=-1, keepdims=True)
        var = jnp.mean(jnp.square(x - mu), axis=-1, keepdims=True)
        return (x - mu) * lax.rsqrt(var + LN_EPS) * g + b

    def attention(q, k, v, bias):
        # q:(Lq,H*dk) k:(Lk,H*dk) v:(Lk,H*dv); heads looped (small), outputs concatenated so
        # the output projection is a single wide matmul with no serial accumulate chain.
        outs = []
        for h in range(n_head):
            qh = q[:, h * d_k:(h + 1) * d_k]
            kh = k[:, h * d_k:(h + 1) * d_k]
            vh = v[:, h * d_v:(h + 1) * d_v]
            # contraction on the last dims -> no materialized K transpose
            s = lax.dot_general(qh, kh, (((1,), (1,)), ((), ())),
                                preferred_element_type=jnp.float32) * inv_temp
            if bias is not None:
                s = s + bias
            s = s - jnp.max(s, axis=-1, keepdims=True)
            p = jnp.exp(s)
            p = p * pl.reciprocal(jnp.sum(p, axis=-1, keepdims=True), approx=True)
            outs.append(jnp.dot(p, vh, preferred_element_type=jnp.float32))
        return outs[0] if n_head == 1 else jnp.concatenate(outs, axis=-1)

    def self_block(x, wqkv, bqkv, wo, bo, g, be, bias, npm):
        qkv = jnp.dot(x, wqkv, preferred_element_type=jnp.float32) + bqkv
        o = attention(qkv[:, :hk], qkv[:, hk:2 * hk], qkv[:, 2 * hk:], bias)
        y = layer_norm(jnp.dot(o, wo, preferred_element_type=jnp.float32) + bo + x, g, be)
        return y * npm if npm is not None else y

    def cross_block(x, mem, wq, bq, wkv, bkv, wo, bo, g, be, npm):
        q = jnp.dot(x, wq, preferred_element_type=jnp.float32) + bq
        kv = jnp.dot(mem, wkv, preferred_element_type=jnp.float32) + bkv
        o = attention(q, kv[:, :hk], kv[:, hk:], None)   # dec_enc_attn_mask is None in the spec
        y = layer_norm(jnp.dot(o, wo, preferred_element_type=jnp.float32) + bo + x, g, be)
        return y * npm if npm is not None else y

    def ffn_block(x, w1, b1, w2, b2, g, be, npm):
        h = jnp.maximum(jnp.dot(x, w1, preferred_element_type=jnp.float32) + b1, 0.0)
        y = layer_norm(jnp.dot(h, w2, preferred_element_type=jnp.float32) + b2 + x, g, be)
        return y * npm if npm is not None else y

    # ---------------- encoder (no masks: slf_attn_mask=None, non_pad_mask=None) ----------------
    ex = jnp.dot(src_x_ref[0], vid_w[...], preferred_element_type=jnp.float32) + vid_b[...]
    for l in range(n_layers):
        ex = self_block(ex, e_wqkv[l], e_bqkv[l], e_wo[l], e_bo[l], e_g1[l], e_be1[l],
                        bias=None, npm=None)
        ex = ffn_block(ex, e_w1[l], e_bi1[l], e_w2[l], e_bi2[l], e_g2[l], e_be2[l], npm=None)

    # ---------------- decoder (enc_out never leaves VMEM) ----------------
    bias = bias_ref[0]          # (Lt, Lt) additive mask (0 / -1e9)
    npm = npm_ref[0]            # (Lt, 1) non-pad mask
    dx = tgt_x_ref[0]           # (Lt, D)
    for l in range(n_layers):
        dx = self_block(dx, s_wqkv[l], s_bqkv[l], s_wo[l], s_bo[l], s_g[l], s_be[l], bias, npm)
        dx = cross_block(dx, ex, c_wq[l], c_bq[l], c_wkv[l], c_bkv[l],
                         c_wo[l], c_bo[l], c_g[l], c_be[l], npm)
        dx = ffn_block(dx, f_w1[l], f_bi1[l], f_w2[l], f_bi2[l], f_g[l], f_be[l], npm)

    # ---------------- tied-embedding logits (lane-dense padded, scale fused) ----------------
    out_ref[0] = jnp.dot(dx, prj_w[...], preferred_element_type=jnp.float32) * logit_scale


# ----------------------------- wrapper -----------------------------

def transformer_forward(params, cfg, src_emb, src_pos, tgt_seq, tgt_pos):
    tgt_seq = tgt_seq[:, :-1]
    tgt_pos = tgt_pos[:, :-1]

    B, Ls, dvid = src_emb.shape
    Lt = tgt_seq.shape[1]
    D = cfg["d_model"]
    H, dk, dv = cfg["n_head"], cfg["d_k"], cfg["d_v"]
    L = cfg["n_layers"]
    d_inner = cfg["d_inner"]
    Vp = params["prj_w"].shape[1]

    # JAX glue: embedding / position gathers and mask construction (single XLA program under jit).
    src_x = src_emb + jnp.take(params["enc_pos_table"], src_pos, axis=0)       # (B, Ls, dvid)
    tgt_x = (jnp.take(params["tgt_word_emb"], tgt_seq, axis=0)
             + jnp.take(params["dec_pos_table"], tgt_pos, axis=0))             # (B, Lt, D)
    npm = (tgt_seq != PAD).astype(jnp.float32)[:, :, None]                     # (B, Lt, 1)
    subseq = jnp.triu(jnp.ones((Lt, Lt), jnp.int32), k=1)[None, :, :]
    keypad = (tgt_seq == PAD).astype(jnp.int32)[:, None, :]
    slf_bias = jnp.where((keypad + subseq) > 0, NEG_BIG, 0.0).astype(jnp.float32)  # (B,Lt,Lt)

    batch_inputs = [src_x, tgt_x, slf_bias, npm]
    weights = ([params["vid_w"], params["vid_b"]]
               + [params["enc"][k] for k in ENC_KEYS]
               + [params["dec_slf"][k] for k in DSLF_KEYS]
               + [params["dec_crs"][k] for k in DCRS_KEYS]
               + [params["dec_ffn"][k] for k in DFFN_KEYS]
               + [params["prj_w"]])

    def batch_spec(a):     # split only the leading batch axis
        nd = a.ndim
        return pl.BlockSpec((1,) + a.shape[1:], lambda b, _nd=nd: (b,) + (0,) * (_nd - 1))

    def resident_spec(a):  # constant index map -> fetched once, stays in VMEM across grid steps
        nd = a.ndim
        return pl.BlockSpec(a.shape, lambda b, _nd=nd: (0,) * _nd)

    kern = functools.partial(_transformer_kernel, n_layers=L, n_head=H, d_k=dk, d_v=dv,
                             inv_temp=float(dk) ** -0.5, logit_scale=float(D) ** -0.5)

    # Rough, advisory cost estimate (matmul flops + softmax exps) for the XLA scheduler.
    flops = 2 * B * (
        Ls * dvid * D
        + L * (Ls * D * H * (2 * dk + dv) + 2 * H * Ls * Ls * dk + Ls * H * dv * D
               + 2 * Ls * D * d_inner)
        + L * (Lt * D * H * (2 * dk + dv) + 2 * H * Lt * Lt * dk + Lt * H * dv * D
               + Lt * D * H * dk + Ls * D * H * (dk + dv) + 2 * H * Lt * Ls * dk
               + Lt * H * dv * D + 2 * Lt * D * d_inner)
        + Lt * D * Vp)
    trans = B * L * H * (Ls * Ls + Lt * Lt + Lt * Ls)
    bytes_acc = sum(int(a.size) * a.dtype.itemsize for a in batch_inputs + weights) + B * Lt * Vp * 4
    cost = pl.CostEstimate(flops=int(flops), transcendentals=int(trans),
                           bytes_accessed=int(bytes_acc))

    out = pl.pallas_call(
        kern,
        grid=(B,),
        in_specs=[batch_spec(a) for a in batch_inputs] + [resident_spec(a) for a in weights],
        out_specs=pl.BlockSpec((1, Lt, Vp), lambda b: (b, 0, 0)),
        out_shape=jax.ShapeDtypeStruct((B, Lt, Vp), jnp.float32),
        compiler_params=pltpu.CompilerParams(dimension_semantics=("parallel",)),
        cost_estimate=cost,
    )(*batch_inputs, *weights)

    return out.reshape(B * Lt, Vp)[:, :cfg["n_tgt_vocab"]]     # (B*Lt, n_tgt_vocab)


# ----------------------------- parameter init (kernel layout) -----------------------------

def _normal(key, shape, std=0.02):
    return jax.random.normal(key, shape, jnp.float32) * std


def sinusoid_table(n_position, d_hid, padding_idx=None):
    def cal_angle(position, hid_idx):
        return position / np.power(10000, 2 * (hid_idx // 2) / d_hid)
    table = np.array([[cal_angle(p, j) for j in range(d_hid)]
                      for p in range(n_position)], dtype=np.float64)
    table[:, 0::2] = np.sin(table[:, 0::2])
    table[:, 1::2] = np.cos(table[:, 1::2])
    if padding_idx is not None:
        table[padding_idx] = 0.0
    return jnp.asarray(table, dtype=jnp.float32)


def _mha_self_params(key, D, H, dk, dv):
    k1, k2, k3, k4 = jax.random.split(key, 4)
    wq = _normal(k1, (H * dk, D))       # torch Linear layout (out, in)
    wk = _normal(k2, (H * dk, D))
    wv = _normal(k3, (H * dv, D))
    fc = _normal(k4, (D, H * dv))
    return {
        "wqkv": jnp.concatenate([wq.T, wk.T, wv.T], axis=1),   # (D, H*(2dk+dv)) fused QKV
        "bqkv": jnp.zeros((1, H * (2 * dk + dv)), jnp.float32),
        "wo": fc.T, "bo": jnp.zeros((1, D), jnp.float32),
        "ln_g": jnp.ones((1, D), jnp.float32), "ln_b": jnp.zeros((1, D), jnp.float32),
    }


def _mha_cross_params(key, D, H, dk, dv):
    k1, k2, k3, k4 = jax.random.split(key, 4)
    wq = _normal(k1, (H * dk, D))
    wk = _normal(k2, (H * dk, D))
    wv = _normal(k3, (H * dv, D))
    fc = _normal(k4, (D, H * dv))
    return {
        "wq": wq.T, "bq": jnp.zeros((1, H * dk), jnp.float32),
        "wkv": jnp.concatenate([wk.T, wv.T], axis=1),          # (D, H*(dk+dv)) fused KV
        "bkv": jnp.zeros((1, H * (dk + dv)), jnp.float32),
        "wo": fc.T, "bo": jnp.zeros((1, D), jnp.float32),
        "ln_g": jnp.ones((1, D), jnp.float32), "ln_b": jnp.zeros((1, D), jnp.float32),
    }


def _ffn_params(key, D, d_inner):
    k1, k2 = jax.random.split(key)
    return {
        "w1": _normal(k1, (d_inner, D)).T, "b1": jnp.zeros((1, d_inner), jnp.float32),
        "w2": _normal(k2, (D, d_inner)).T, "b2": jnp.zeros((1, D), jnp.float32),
        "ln_g": jnp.ones((1, D), jnp.float32), "ln_b": jnp.zeros((1, D), jnp.float32),
    }


def init_transformer(key, cfg):
    D, d_inner = cfg["d_model"], cfg["d_inner"]
    H, dk, dv = cfg["n_head"], cfg["d_k"], cfg["d_v"]
    L = cfg["n_layers"]
    keys = jax.random.split(key, 2 * L + 4)
    ki = iter(keys)

    enc_layers = []
    for _ in range(L):
        ka, kf = jax.random.split(next(ki))
        a = _mha_self_params(ka, D, H, dk, dv)
        f = _ffn_params(kf, D, d_inner)
        enc_layers.append({
            "wqkv": a["wqkv"], "bqkv": a["bqkv"], "wo": a["wo"], "bo": a["bo"],
            "ln1_g": a["ln_g"], "ln1_b": a["ln_b"],
            "w1": f["w1"], "b1": f["b1"], "w2": f["w2"], "b2": f["b2"],
            "ln2_g": f["ln_g"], "ln2_b": f["ln_b"],
        })
    enc = {k: jnp.stack([lyr[k] for lyr in enc_layers]) for k in ENC_KEYS}

    slf_layers, crs_layers, ffn_layers = [], [], []
    for _ in range(L):
        ks_, kc_, kf_ = jax.random.split(next(ki), 3)
        slf_layers.append(_mha_self_params(ks_, D, H, dk, dv))
        crs_layers.append(_mha_cross_params(kc_, D, H, dk, dv))
        ffn_layers.append(_ffn_params(kf_, D, d_inner))
    dec_slf = {k: jnp.stack([lyr[k] for lyr in slf_layers]) for k in DSLF_KEYS}
    dec_crs = {k: jnp.stack([lyr[k] for lyr in crs_layers]) for k in DCRS_KEYS}
    dec_ffn = {k: jnp.stack([lyr[k] for lyr in ffn_layers]) for k in DFFN_KEYS}

    vid = _normal(next(ki), (D, cfg["vis_emb"]))                # torch layout (out, in)
    emb = _normal(next(ki), (cfg["n_tgt_vocab"], cfg["d_word_vec"]))
    emb = emb.at[PAD].set(0.0)                                  # padding_idx=PAD

    # Tied projection weight, pre-transposed, zero-padded to a 128-multiple lane-dense width.
    Vp = int(pl.cdiv(cfg["n_tgt_vocab"], 128) * 128)
    prj_w = jnp.zeros((cfg["d_word_vec"], Vp), jnp.float32).at[:, :cfg["n_tgt_vocab"]].set(emb.T)

    return {
        "vid_w": vid.T, "vid_b": jnp.zeros((1, D), jnp.float32),
        "enc": enc, "dec_slf": dec_slf, "dec_crs": dec_crs, "dec_ffn": dec_ffn,
        "tgt_word_emb": emb, "prj_w": prj_w,
        "enc_pos_table": sinusoid_table(cfg["n_frames"] + 1, cfg["vis_emb"], padding_idx=0),
        "dec_pos_table": sinusoid_table(cfg["len_max_seq"] + 1, cfg["d_word_vec"], padding_idx=0),
    }


# ----------------------------- main -----------------------------

if __name__ == "__main__":
    cfg = dict(n_tgt_vocab=50, len_max_seq=9, vis_emb=32, n_frames=8,
               d_word_vec=32, d_model=32, d_inner=64, n_layers=2, n_head=2,
               d_k=16, d_v=16)

    key = jax.random.PRNGKey(0)
    k_param, k_src, k_tgt = jax.random.split(key, 3)
    params = init_transformer(k_param, cfg)

    B = 2
    Lt = 8  # <= len_max_seq
    src_emb = jax.random.normal(k_src, (B, cfg["n_frames"], cfg["vis_emb"]), jnp.float32)
    src_pos = jnp.tile(jnp.arange(1, cfg["n_frames"] + 1, dtype=jnp.int32)[None, :], (B, 1))
    tgt_seq = jax.random.randint(k_tgt, (B, Lt), 1, cfg["n_tgt_vocab"], dtype=jnp.int32)
    tgt_pos = jnp.tile(jnp.arange(1, Lt + 1, dtype=jnp.int32)[None, :], (B, 1))

    @jax.jit
    def fwd(p, se, sp, ts, tp):
        return transformer_forward(p, cfg, se, sp, ts, tp)

    out = jax.block_until_ready(fwd(params, src_emb, src_pos, tgt_seq, tgt_pos))

    assert out.shape == (B * (Lt - 1), cfg["n_tgt_vocab"]), out.shape
    assert bool(jnp.all(jnp.isfinite(out)))
    print("KERNEL_OK")
</pallas_src>

<mosaic_0001>
module attributes {stable_mosaic.version = 11 : i64} {
  func.func @_transformer_kernel(%arg0: i32, %arg1: memref<1x8x32xf32, #tpu.memory_space<vmem>>, %arg2: memref<1x7x32xf32, #tpu.memory_space<vmem>>, %arg3: memref<1x7x7xf32, #tpu.memory_space<vmem>>, %arg4: memref<1x7x1xf32, #tpu.memory_space<vmem>>, %arg5: memref<32x32xf32, #tpu.memory_space<vmem>>, %arg6: memref<1x32xf32, #tpu.memory_space<vmem>>, %arg7: memref<2x32x96xf32, #tpu.memory_space<vmem>>, %arg8: memref<2x1x96xf32, #tpu.memory_space<vmem>>, %arg9: memref<2x32x32xf32, #tpu.memory_space<vmem>>, %arg10: memref<2x1x32xf32, #tpu.memory_space<vmem>>, %arg11: memref<2x1x32xf32, #tpu.memory_space<vmem>>, %arg12: memref<2x1x32xf32, #tpu.memory_space<vmem>>, %arg13: memref<2x32x64xf32, #tpu.memory_space<vmem>>, %arg14: memref<2x1x64xf32, #tpu.memory_space<vmem>>, %arg15: memref<2x64x32xf32, #tpu.memory_space<vmem>>, %arg16: memref<2x1x32xf32, #tpu.memory_space<vmem>>, %arg17: memref<2x1x32xf32, #tpu.memory_space<vmem>>, %arg18: memref<2x1x32xf32, #tpu.memory_space<vmem>>, %arg19: memref<2x32x96xf32, #tpu.memory_space<vmem>>, %arg20: memref<2x1x96xf32, #tpu.memory_space<vmem>>, %arg21: memref<2x32x32xf32, #tpu.memory_space<vmem>>, %arg22: memref<2x1x32xf32, #tpu.memory_space<vmem>>, %arg23: memref<2x1x32xf32, #tpu.memory_space<vmem>>, %arg24: memref<2x1x32xf32, #tpu.memory_space<vmem>>, %arg25: memref<2x32x32xf32, #tpu.memory_space<vmem>>, %arg26: memref<2x1x32xf32, #tpu.memory_space<vmem>>, %arg27: memref<2x32x64xf32, #tpu.memory_space<vmem>>, %arg28: memref<2x1x64xf32, #tpu.memory_space<vmem>>, %arg29: memref<2x32x32xf32, #tpu.memory_space<vmem>>, %arg30: memref<2x1x32xf32, #tpu.memory_space<vmem>>, %arg31: memref<2x1x32xf32, #tpu.memory_space<vmem>>, %arg32: memref<2x1x32xf32, #tpu.memory_space<vmem>>, %arg33: memref<2x32x64xf32, #tpu.memory_space<vmem>>, %arg34: memref<2x1x64xf32, #tpu.memory_space<vmem>>, %arg35: memref<2x64x32xf32, #tpu.memory_space<vmem>>, %arg36: memref<2x1x32xf32, #tpu.memory_space<vmem>>, %arg37: memref<2x1x32xf32, #tpu.memory_space<vmem>>, %arg38: memref<2x1x32xf32, #tpu.memory_space<vmem>>, %arg39: memref<32x128xf32, #tpu.memory_space<vmem>>, %arg40: memref<1x7x128xf32, #tpu.memory_space<vmem>>) attributes {dimension_semantics = [#tpu.dimension_semantics<parallel>], iteration_bounds = array<i64: 2>, scalar_prefetch = 0 : i64, scratch_operands = 0 : i64, tpu.core_type = #tpu.core_type<tc>, window_params = [{transform_indices = @transform_0, window_bounds = array<i64: 1, 8, 32>}, {transform_indices = @transform_1, window_bounds = array<i64: 1, 7, 32>}, {transform_indices = @transform_2, window_bounds = array<i64: 1, 7, 7>}, {transform_indices = @transform_3, window_bounds = array<i64: 1, 7, 1>}, {pipeline_mode = #tpu.pipeline_mode<synchronous>, transform_indices = @transform_4, window_bounds = array<i64: 32, 32>}, {pipeline_mode = #tpu.pipeline_mode<synchronous>, transform_indices = @transform_5, window_bounds = array<i64: 1, 32>}, {pipeline_mode = #tpu.pipeline_mode<synchronous>, transform_indices = @transform_6, window_bounds = array<i64: 2, 32, 96>}, {pipeline_mode = #tpu.pipeline_mode<synchronous>, transform_indices = @transform_7, window_bounds = array<i64: 2, 1, 96>}, {pipeline_mode = #tpu.pipeline_mode<synchronous>, transform_indices = @transform_8, window_bounds = array<i64: 2, 32, 32>}, {pipeline_mode = #tpu.pipeline_mode<synchronous>, transform_indices = @transform_9, window_bounds = array<i64: 2, 1, 32>}, {pipeline_mode = #tpu.pipeline_mode<synchronous>, transform_indices = @transform_10, window_bounds = array<i64: 2, 1, 32>}, {pipeline_mode = #tpu.pipeline_mode<synchronous>, transform_indices = @transform_11, window_bounds = array<i64: 2, 1, 32>}, {pipeline_mode = #tpu.pipeline_mode<synchronous>, transform_indices = @transform_12, window_bounds = array<i64: 2, 32, 64>}, {pipeline_mode = #tpu.pipeline_mode<synchronous>, transform_indices = @transform_13, window_bounds = array<i64: 2, 1, 64>}, {pipeline_mode = #tpu.pipeline_mode<synchronous>, transform_indices = @transform_14, window_bounds = array<i64: 2, 64, 32>}, {pipeline_mode = #tpu.pipeline_mode<synchronous>, transform_indices = @transform_15, window_bounds = array<i64: 2, 1, 32>}, {pipeline_mode = #tpu.pipeline_mode<synchronous>, transform_indices = @transform_16, window_bounds = array<i64: 2, 1, 32>}, {pipeline_mode = #tpu.pipeline_mode<synchronous>, transform_indices = @transform_17, window_bounds = array<i64: 2, 1, 32>}, {pipeline_mode = #tpu.pipeline_mode<synchronous>, transform_indices = @transform_18, window_bounds = array<i64: 2, 32, 96>}, {pipeline_mode = #tpu.pipeline_mode<synchronous>, transform_indices = @transform_19, window_bounds = array<i64: 2, 1, 96>}, {pipeline_mode = #tpu.pipeline_mode<synchronous>, transform_indices = @transform_20, window_bounds = array<i64: 2, 32, 32>}, {pipeline_mode = #tpu.pipeline_mode<synchronous>, transform_indices = @transform_21, window_bounds = array<i64: 2, 1, 32>}, {pipeline_mode = #tpu.pipeline_mode<synchronous>, transform_indices = @transform_22, window_bounds = array<i64: 2, 1, 32>}, {pipeline_mode = #tpu.pipeline_mode<synchronous>, transform_indices = @transform_23, window_bounds = array<i64: 2, 1, 32>}, {pipeline_mode = #tpu.pipeline_mode<synchronous>, transform_indices = @transform_24, window_bounds = array<i64: 2, 32, 32>}, {pipeline_mode = #tpu.pipeline_mode<synchronous>, transform_indices = @transform_25, window_bounds = array<i64: 2, 1, 32>}, {pipeline_mode = #tpu.pipeline_mode<synchronous>, transform_indices = @transform_26, window_bounds = array<i64: 2, 32, 64>}, {pipeline_mode = #tpu.pipeline_mode<synchronous>, transform_indices = @transform_27, window_bounds = array<i64: 2, 1, 64>}, {pipeline_mode = #tpu.pipeline_mode<synchronous>, transform_indices = @transform_28, window_bounds = array<i64: 2, 32, 32>}, {pipeline_mode = #tpu.pipeline_mode<synchronous>, transform_indices = @transform_29, window_bounds = array<i64: 2, 1, 32>}, {pipeline_mode = #tpu.pipeline_mode<synchronous>, transform_indices = @transform_30, window_bounds = array<i64: 2, 1, 32>}, {pipeline_mode = #tpu.pipeline_mode<synchronous>, transform_indices = @transform_31, window_bounds = array<i64: 2, 1, 32>}, {pipeline_mode = #tpu.pipeline_mode<synchronous>, transform_indices = @transform_32, window_bounds = array<i64: 2, 32, 64>}, {pipeline_mode = #tpu.pipeline_mode<synchronous>, transform_indices = @transform_33, window_bounds = array<i64: 2, 1, 64>}, {pipeline_mode = #tpu.pipeline_mode<synchronous>, transform_indices = @transform_34, window_bounds = array<i64: 2, 64, 32>}, {pipeline_mode = #tpu.pipeline_mode<synchronous>, transform_indices = @transform_35, window_bounds = array<i64: 2, 1, 32>}, {pipeline_mode = #tpu.pipeline_mode<synchronous>, transform_indices = @transform_36, window_bounds = array<i64: 2, 1, 32>}, {pipeline_mode = #tpu.pipeline_mode<synchronous>, transform_indices = @transform_37, window_bounds = array<i64: 2, 1, 32>}, {pipeline_mode = #tpu.pipeline_mode<synchronous>, transform_indices = @transform_38, window_bounds = array<i64: 32, 128>}, {transform_indices = @transform_39, window_bounds = array<i64: 1, 7, 128>}]} {
    %c0 = arith.constant 0 : index
    %c0_0 = arith.constant 0 : index
    %c0_1 = arith.constant 0 : index
    %0 = vector.load %arg1[%c0, %c0_0, %c0_1] : memref<1x8x32xf32, #tpu.memory_space<vmem>>, vector<1x8x32xf32>
    %1 = vector.shape_cast %0 : vector<1x8x32xf32> to vector<8x32xf32>
    %c0_2 = arith.constant 0 : index
    %c0_3 = arith.constant 0 : index
    %2 = vector.load %arg5[%c0_2, %c0_3] : memref<32x32xf32, #tpu.memory_space<vmem>>, vector<32x32xf32>
    %cst = arith.constant dense<0.000000e+00> : vector<8x32xf32>
    %3 = tpu.matmul %1, %2, %cst {dimension_numbers = #tpu.dot_dimension_numbers<[1], [0], [0], [1], [0, 0, 1, 1], [], []>} : vector<8x32xf32>, vector<32x32xf32>, vector<8x32xf32> -> vector<8x32xf32>
    %c0_4 = arith.constant 0 : index
    %c0_5 = arith.constant 0 : index
    %4 = vector.load %arg6[%c0_4, %c0_5] : memref<1x32xf32, #tpu.memory_space<vmem>>, vector<1x32xf32>
    %5 = vector.broadcast %4 : vector<1x32xf32> to vector<8x32xf32>
    %6 = arith.addf %3, %5 : vector<8x32xf32>
    %c0_6 = arith.constant 0 : index
    %c0_7 = arith.constant 0 : index
    %c0_8 = arith.constant 0 : index
    %7 = vector.load %arg7[%c0_6, %c0_7, %c0_8] : memref<2x32x96xf32, #tpu.memory_space<vmem>>, vector<1x32x96xf32>
    %8 = vector.shape_cast %7 : vector<1x32x96xf32> to vector<32x96xf32>
    %c0_9 = arith.constant 0 : index
    %c0_10 = arith.constant 0 : index
    %c0_11 = arith.constant 0 : index
    %9 = vector.load %arg8[%c0_9, %c0_10, %c0_11] : memref<2x1x96xf32, #tpu.memory_space<vmem>>, vector<1x1x96xf32>
    %10 = vector.shape_cast %9 : vector<1x1x96xf32> to vector<1x96xf32>
    %c0_12 = arith.constant 0 : index
    %c0_13 = arith.constant 0 : index
    %c0_14 = arith.constant 0 : index
    %11 = vector.load %arg9[%c0_12, %c0_13, %c0_14] : memref<2x32x32xf32, #tpu.memory_space<vmem>>, vector<1x32x32xf32>
    %12 = vector.shape_cast %11 : vector<1x32x32xf32> to vector<32x32xf32>
    %c0_15 = arith.constant 0 : index
    %c0_16 = arith.constant 0 : index
    %c0_17 = arith.constant 0 : index
    %13 = vector.load %arg10[%c0_15, %c0_16, %c0_17] : memref<2x1x32xf32, #tpu.memory_space<vmem>>, vector<1x1x32xf32>
    %14 = vector.shape_cast %13 : vector<1x1x32xf32> to vector<1x32xf32>
    %c0_18 = arith.constant 0 : index
    %c0_19 = arith.constant 0 : index
    %c0_20 = arith.constant 0 : index
    %15 = vector.load %arg11[%c0_18, %c0_19, %c0_20] : memref<2x1x32xf32, #tpu.memory_space<vmem>>, vector<1x1x32xf32>
    %16 = vector.shape_cast %15 : vector<1x1x32xf32> to vector<1x32xf32>
    %c0_21 = arith.constant 0 : index
    %c0_22 = arith.constant 0 : index
    %c0_23 = arith.constant 0 : index
    %17 = vector.load %arg12[%c0_21, %c0_22, %c0_23] : memref<2x1x32xf32, #tpu.memory_space<vmem>>, vector<1x1x32xf32>
    %18 = vector.shape_cast %17 : vector<1x1x32xf32> to vector<1x32xf32>
    %cst_24 = arith.constant dense<0.000000e+00> : vector<8x96xf32>
    %19 = tpu.matmul %6, %8, %cst_24 {dimension_numbers = #tpu.dot_dimension_numbers<[1], [0], [0], [1], [0, 0, 1, 1], [], []>} : vector<8x32xf32>, vector<32x96xf32>, vector<8x96xf32> -> vector<8x96xf32>
    %20 = vector.broadcast %10 : vector<1x96xf32> to vector<8x96xf32>
    %21 = arith.addf %19, %20 : vector<8x96xf32>
    %22 = vector.extract_strided_slice %21 {offsets = [0, 0], sizes = [8, 32], strides = [1, 1]} : vector<8x96xf32> to vector<8x32xf32>
    %23 = vector.extract_strided_slice %21 {offsets = [0, 32], sizes = [8, 32], strides = [1, 1]} : vector<8x96xf32> to vector<8x32xf32>
    %24 = vector.extract_strided_slice %21 {offsets = [0, 64], sizes = [8, 32], strides = [1, 1]} : vector<8x96xf32> to vector<8x32xf32>
    %25 = vector.extract_strided_slice %22 {offsets = [0, 0], sizes = [8, 16], strides = [1, 1]} : vector<8x32xf32> to vector<8x16xf32>
    %26 = vector.extract_strided_slice %23 {offsets = [0, 0], sizes = [8, 16], strides = [1, 1]} : vector<8x32xf32> to vector<8x16xf32>
    %27 = vector.extract_strided_slice %24 {offsets = [0, 0], sizes = [8, 16], strides = [1, 1]} : vector<8x32xf32> to vector<8x16xf32>
    %cst_25 = arith.constant dense<0.000000e+00> : vector<8x8xf32>
    %28 = tpu.matmul %25, %26, %cst_25 {dimension_numbers = #tpu.dot_dimension_numbers<[1], [1], [0], [0], [0, 0, 1, 0], [], []>} : vector<8x16xf32>, vector<8x16xf32>, vector<8x8xf32> -> vector<8x8xf32>
    %cst_26 = arith.constant 2.500000e-01 : f32
    %29 = vector.broadcast %cst_26 : f32 to vector<8x8xf32>
    %30 = arith.mulf %28, %29 : vector<8x8xf32>
    %cst_27 = arith.constant dense<0xFF800000> : vector<8xf32>
    %31 = vector.multi_reduction <maximumf>, %30, %cst_27 [1] : vector<8x8xf32> to vector<8xf32>
    %32 = vector.shape_cast %31 : vector<8xf32> to vector<8x1xf32>
    %33 = vector.broadcast %32 : vector<8x1xf32> to vector<8x8xf32>
    %34 = arith.subf %30, %33 : vector<8x8xf32>
    %35 = math.exp %34 : vector<8x8xf32>
    %cst_28 = arith.constant dense<0.000000e+00> : vector<8xf32>
    %36 = vector.multi_reduction <add>, %35, %cst_28 [1] : vector<8x8xf32> to vector<8xf32>
    %37 = vector.shape_cast %36 : vector<8xf32> to vector<8x1xf32>
    %38 = tpu.reciprocal %37 {approx = true} : vector<8x1xf32> -> vector<8x1xf32>
    %39 = vector.broadcast %38 : vector<8x1xf32> to vector<8x8xf32>
    %40 = arith.mulf %35, %39 : vector<8x8xf32>
    %cst_29 = arith.constant dense<0.000000e+00> : vector<8x16xf32>
    %41 = tpu.matmul %40, %27, %cst_29 {dimension_numbers = #tpu.dot_dimension_numbers<[1], [0], [0], [1], [0, 0, 1, 1], [], []>} : vector<8x8xf32>, vector<8x16xf32>, vector<8x16xf32> -> vector<8x16xf32>
    %42 = vector.extract_strided_slice %22 {offsets = [0, 16], sizes = [8, 16], strides = [1, 1]} : vector<8x32xf32> to vector<8x16xf32>
    %43 = vector.extract_strided_slice %23 {offsets = [0, 16], sizes = [8, 16], strides = [1, 1]} : vector<8x32xf32> to vector<8x16xf32>
    %44 = vector.extract_strided_slice %24 {offsets = [0, 16], sizes = [8, 16], strides = [1, 1]} : vector<8x32xf32> to vector<8x16xf32>
    %cst_30 = arith.constant dense<0.000000e+00> : vector<8x8xf32>
    %45 = tpu.matmul %42, %43, %cst_30 {dimension_numbers = #tpu.dot_dimension_numbers<[1], [1], [0], [0], [0, 0, 1, 0], [], []>} : vector<8x16xf32>, vector<8x16xf32>, vector<8x8xf32> -> vector<8x8xf32>
    %cst_31 = arith.constant 2.500000e-01 : f32
    %46 = vector.broadcast %cst_31 : f32 to vector<8x8xf32>
    %47 = arith.mulf %45, %46 : vector<8x8xf32>
    %cst_32 = arith.constant dense<0xFF800000> : vector<8xf32>
    %48 = vector.multi_reduction <maximumf>, %47, %cst_32 [1] : vector<8x8xf32> to vector<8xf32>
    %49 = vector.shape_cast %48 : vector<8xf32> to vector<8x1xf32>
    %50 = vector.broadcast %49 : vector<8x1xf32> to vector<8x8xf32>
    %51 = arith.subf %47, %50 : vector<8x8xf32>
    %52 = math.exp %51 : vector<8x8xf32>
    %cst_33 = arith.constant dense<0.000000e+00> : vector<8xf32>
    %53 = vector.multi_reduction <add>, %52, %cst_33 [1] : vector<8x8xf32> to vector<8xf32>
    %54 = vector.shape_cast %53 : vector<8xf32> to vector<8x1xf32>
    %55 = tpu.reciprocal %54 {approx = true} : vector<8x1xf32> -> vector<8x1xf32>
    %56 = vector.broadcast %55 : vector<8x1xf32> to vector<8x8xf32>
    %57 = arith.mulf %52, %56 : vector<8x8xf32>
    %cst_34 = arith.constant dense<0.000000e+00> : vector<8x16xf32>
    %58 = tpu.matmul %57, %44, %cst_34 {dimension_numbers = #tpu.dot_dimension_numbers<[1], [0], [0], [1], [0, 0, 1, 1], [], []>} : vector<8x8xf32>, vector<8x16xf32>, vector<8x16xf32> -> vector<8x16xf32>
    %59 = tpu.concatenate %41, %58 in 1 : vector<8x16xf32>, vector<8x16xf32> -> vector<8x32xf32>
    %cst_35 = arith.constant dense<0.000000e+00> : vector<8x32xf32>
    %60 = tpu.matmul %59, %12, %cst_35 {dimension_numbers = #tpu.dot_dimension_numbers<[1], [0], [0], [1], [0, 0, 1, 1], [], []>} : vector<8x32xf32>, vector<32x32xf32>, vector<8x32xf32> -> vector<8x32xf32>
    %61 = vector.broadcast %14 : vector<1x32xf32> to vector<8x32xf32>
    %62 = arith.addf %60, %61 : vector<8x32xf32>
    %63 = arith.addf %62, %6 : vector<8x32xf32>
    %cst_36 = arith.constant dense<0.000000e+00> : vector<8xf32>
    %64 = vector.multi_reduction <add>, %63, %cst_36 [1] : vector<8x32xf32> to vector<8xf32>
    %65 = vector.shape_cast %64 : vector<8xf32> to vector<8x1xf32>
    %cst_37 = arith.constant 3.200000e+01 : f32
    %66 = vector.broadcast %cst_37 : f32 to vector<8x1xf32>
    %67 = arith.divf %65, %66 : vector<8x1xf32>
    %68 = vector.broadcast %67 : vector<8x1xf32> to vector<8x32xf32>
    %69 = arith.subf %63, %68 : vector<8x32xf32>
    %70 = arith.mulf %69, %69 : vector<8x32xf32>
    %cst_38 = arith.constant dense<0.000000e+00> : vector<8xf32>
    %71 = vector.multi_reduction <add>, %70, %cst_38 [1] : vector<8x32xf32> to vector<8xf32>
    %72 = vector.shape_cast %71 : vector<8xf32> to vector<8x1xf32>
    %cst_39 = arith.constant 3.200000e+01 : f32
    %73 = vector.broadcast %cst_39 : f32 to vector<8x1xf32>
    %74 = arith.divf %72, %73 : vector<8x1xf32>
    %75 = vector.broadcast %67 : vector<8x1xf32> to vector<8x32xf32>
    %76 = arith.subf %63, %75 : vector<8x32xf32>
    %cst_40 = arith.constant 9.99999974E-6 : f32
    %77 = vector.broadcast %cst_40 : f32 to vector<8x1xf32>
    %78 = arith.addf %74, %77 : vector<8x1xf32>
    %79 = math.rsqrt %78 : vector<8x1xf32>
    %80 = vector.broadcast %79 : vector<8x1xf32> to vector<8x32xf32>
    %81 = arith.mulf %76, %80 : vector<8x32xf32>
    %82 = vector.broadcast %16 : vector<1x32xf32> to vector<8x32xf32>
    %83 = arith.mulf %81, %82 : vector<8x32xf32>
    %84 = vector.broadcast %18 : vector<1x32xf32> to vector<8x32xf32>
    %85 = arith.addf %83, %84 : vector<8x32xf32>
    %c0_41 = arith.constant 0 : index
    %c0_42 = arith.constant 0 : index
    %c0_43 = arith.constant 0 : index
    %86 = vector.load %arg13[%c0_41, %c0_42, %c0_43] : memref<2x32x64xf32, #tpu.memory_space<vmem>>, vector<1x32x64xf32>
    %87 = vector.shape_cast %86 : vector<1x32x64xf32> to vector<32x64xf32>
    %c0_44 = arith.constant 0 : index
    %c0_45 = arith.constant 0 : index
    %c0_46 = arith.constant 0 : index
    %88 = vector.load %arg14[%c0_44, %c0_45, %c0_46] : memref<2x1x64xf32, #tpu.memory_space<vmem>>, vector<1x1x64xf32>
    %89 = vector.shape_cast %88 : vector<1x1x64xf32> to vector<1x64xf32>
    %c0_47 = arith.constant 0 : index
    %c0_48 = arith.constant 0 : index
    %c0_49 = arith.constant 0 : index
    %90 = vector.load %arg15[%c0_47, %c0_48, %c0_49] : memref<2x64x32xf32, #tpu.memory_space<vmem>>, vector<1x64x32xf32>
    %91 = vector.shape_cast %90 : vector<1x64x32xf32> to vector<64x32xf32>
    %c0_50 = arith.constant 0 : index
    %c0_51 = arith.constant 0 : index
    %c0_52 = arith.constant 0 : index
    %92 = vector.load %arg16[%c0_50, %c0_51, %c0_52] : memref<2x1x32xf32, #tpu.memory_space<vmem>>, vector<1x1x32xf32>
    %93 = vector.shape_cast %92 : vector<1x1x32xf32> to vector<1x32xf32>
    %c0_53 = arith.constant 0 : index
    %c0_54 = arith.constant 0 : index
    %c0_55 = arith.constant 0 : index
    %94 = vector.load %arg17[%c0_53, %c0_54, %c0_55] : memref<2x1x32xf32, #tpu.memory_space<vmem>>, vector<1x1x32xf32>
    %95 = vector.shape_cast %94 : vector<1x1x32xf32> to vector<1x32xf32>
    %c0_56 = arith.constant 0 : index
    %c0_57 = arith.constant 0 : index
    %c0_58 = arith.constant 0 : index
    %96 = vector.load %arg18[%c0_56, %c0_57, %c0_58] : memref<2x1x32xf32, #tpu.memory_space<vmem>>, vector<1x1x32xf32>
    %97 = vector.shape_cast %96 : vector<1x1x32xf32> to vector<1x32xf32>
    %cst_59 = arith.constant dense<0.000000e+00> : vector<8x64xf32>
    %98 = tpu.matmul %85, %87, %cst_59 {dimension_numbers = #tpu.dot_dimension_numbers<[1], [0], [0], [1], [0, 0, 1, 1], [], []>} : vector<8x32xf32>, vector<32x64xf32>, vector<8x64xf32> -> vector<8x64xf32>
    %99 = vector.broadcast %89 : vector<1x64xf32> to vector<8x64xf32>
    %100 = arith.addf %98, %99 : vector<8x64xf32>
    %cst_60 = arith.constant 0.000000e+00 : f32
    %101 = vector.broadcast %cst_60 : f32 to vector<8x64xf32>
    %102 = arith.maximumf %100, %101 : vector<8x64xf32>
    %cst_61 = arith.constant dense<0.000000e+00> : vector<8x32xf32>
    %103 = tpu.matmul %102, %91, %cst_61 {dimension_numbers = #tpu.dot_dimension_numbers<[1], [0], [0], [1], [0, 0, 1, 1], [], []>} : vector<8x64xf32>, vector<64x32xf32>, vector<8x32xf32> -> vector<8x32xf32>
    %104 = vector.broadcast %93 : vector<1x32xf32> to vector<8x32xf32>
    %105 = arith.addf %103, %104 : vector<8x32xf32>
    %106 = arith.addf %105, %85 : vector<8x32xf32>
    %cst_62 = arith.constant dense<0.000000e+00> : vector<8xf32>
    %107 = vector.multi_reduction <add>, %106, %cst_62 [1] : vector<8x32xf32> to vector<8xf32>
    %108 = vector.shape_cast %107 : vector<8xf32> to vector<8x1xf32>
    %cst_63 = arith.constant 3.200000e+01 : f32
    %109 = vector.broadcast %cst_63 : f32 to vector<8x1xf32>
    %110 = arith.divf %108, %109 : vector<8x1xf32>
    %111 = vector.broadcast %110 : vector<8x1xf32> to vector<8x32xf32>
    %112 = arith.subf %106, %111 : vector<8x32xf32>
    %113 = arith.mulf %112, %112 : vector<8x32xf32>
    %cst_64 = arith.constant dense<0.000000e+00> : vector<8xf32>
    %114 = vector.multi_reduction <add>, %113, %cst_64 [1] : vector<8x32xf32> to vector<8xf32>
    %115 = vector.shape_cast %114 : vector<8xf32> to vector<8x1xf32>
    %cst_65 = arith.constant 3.200000e+01 : f32
    %116 = vector.broadcast %cst_65 : f32 to vector<8x1xf32>
    %117 = arith.divf %115, %116 : vector<8x1xf32>
    %118 = vector.broadcast %110 : vector<8x1xf32> to vector<8x32xf32>
    %119 = arith.subf %106, %118 : vector<8x32xf32>
    %cst_66 = arith.constant 9.99999974E-6 : f32
    %120 = vector.broadcast %cst_66 : f32 to vector<8x1xf32>
    %121 = arith.addf %117, %120 : vector<8x1xf32>
    %122 = math.rsqrt %121 : vector<8x1xf32>
    %123 = vector.broadcast %122 : vector<8x1xf32> to vector<8x32xf32>
    %124 = arith.mulf %119, %123 : vector<8x32xf32>
    %125 = vector.broadcast %95 : vector<1x32xf32> to vector<8x32xf32>
    %126 = arith.mulf %124, %125 : vector<8x32xf32>
    %127 = vector.broadcast %97 : vector<1x32xf32> to vector<8x32xf32>
    %128 = arith.addf %126, %127 : vector<8x32xf32>
    %c1 = arith.constant 1 : index
    %c0_67 = arith.constant 0 : index
    %c0_68 = arith.constant 0 : index
    %129 = vector.load %arg7[%c1, %c0_67, %c0_68] : memref<2x32x96xf32, #tpu.memory_space<vmem>>, vector<1x32x96xf32>
    %130 = vector.shape_cast %129 : vector<1x32x96xf32> to vector<32x96xf32>
    %c1_69 = arith.constant 1 : index
    %c0_70 = arith.constant 0 : index
    %c0_71 = arith.constant 0 : index
    %131 = vector.load %arg8[%c1_69, %c0_70, %c0_71] : memref<2x1x96xf32, #tpu.memory_space<vmem>>, vector<1x1x96xf32>
    %132 = vector.shape_cast %131 : vector<1x1x96xf32> to vector<1x96xf32>
    %c1_72 = arith.constant 1 : index
    %c0_73 = arith.constant 0 : index
    %c0_74 = arith.constant 0 : index
    %133 = vector.load %arg9[%c1_72, %c0_73, %c0_74] : memref<2x32x32xf32, #tpu.memory_space<vmem>>, vector<1x32x32xf32>
    %134 = vector.shape_cast %133 : vector<1x32x32xf32> to vector<32x32xf32>
    %c1_75 = arith.constant 1 : index
    %c0_76 = arith.constant 0 : index
    %c0_77 = arith.constant 0 : index
    %135 = vector.load %arg10[%c1_75, %c0_76, %c0_77] : memref<2x1x32xf32, #tpu.memory_space<vmem>>, vector<1x1x32xf32>
    %136 = vector.shape_cast %135 : vector<1x1x32xf32> to vector<1x32xf32>
    %c1_78 = arith.constant 1 : index
    %c0_79 = arith.constant 0 : index
    %c0_80 = arith.constant 0 : index
    %137 = vector.load %arg11[%c1_78, %c0_79, %c0_80] : memref<2x1x32xf32, #tpu.memory_space<vmem>>, vector<1x1x32xf32>
    %138 = vector.shape_cast %137 : vector<1x1x32xf32> to vector<1x32xf32>
    %c1_81 = arith.constant 1 : index
    %c0_82 = arith.constant 0 : index
    %c0_83 = arith.constant 0 : index
    %139 = vector.load %arg12[%c1_81, %c0_82, %c0_83] : memref<2x1x32xf32, #tpu.memory_space<vmem>>, vector<1x1x32xf32>
    %140 = vector.shape_cast %139 : vector<1x1x32xf32> to vector<1x32xf32>
    %cst_84 = arith.constant dense<0.000000e+00> : vector<8x96xf32>
    %141 = tpu.matmul %128, %130, %cst_84 {dimension_numbers = #tpu.dot_dimension_numbers<[1], [0], [0], [1], [0, 0, 1, 1], [], []>} : vector<8x32xf32>, vector<32x96xf32>, vector<8x96xf32> -> vector<8x96xf32>
    %142 = vector.broadcast %132 : vector<1x96xf32> to vector<8x96xf32>
    %143 = arith.addf %141, %142 : vector<8x96xf32>
    %144 = vector.extract_strided_slice %143 {offsets = [0, 0], sizes = [8, 32], strides = [1, 1]} : vector<8x96xf32> to vector<8x32xf32>
    %145 = vector.extract_strided_slice %143 {offsets = [0, 32], sizes = [8, 32], strides = [1, 1]} : vector<8x96xf32> to vector<8x32xf32>
    %146 = vector.extract_strided_slice %143 {offsets = [0, 64], sizes = [8, 32], strides = [1, 1]} : vector<8x96xf32> to vector<8x32xf32>
    %147 = vector.extract_strided_slice %144 {offsets = [0, 0], sizes = [8, 16], strides = [1, 1]} : vector<8x32xf32> to vector<8x16xf32>
    %148 = vector.extract_strided_slice %145 {offsets = [0, 0], sizes = [8, 16], strides = [1, 1]} : vector<8x32xf32> to vector<8x16xf32>
    %149 = vector.extract_strided_slice %146 {offsets = [0, 0], sizes = [8, 16], strides = [1, 1]} : vector<8x32xf32> to vector<8x16xf32>
    %cst_85 = arith.constant dense<0.000000e+00> : vector<8x8xf32>
    %150 = tpu.matmul %147, %148, %cst_85 {dimension_numbers = #tpu.dot_dimension_numbers<[1], [1], [0], [0], [0, 0, 1, 0], [], []>} : vector<8x16xf32>, vector<8x16xf32>, vector<8x8xf32> -> vector<8x8xf32>
    %cst_86 = arith.constant 2.500000e-01 : f32
    %151 = vector.broadcast %cst_86 : f32 to vector<8x8xf32>
    %152 = arith.mulf %150, %151 : vector<8x8xf32>
    %cst_87 = arith.constant dense<0xFF800000> : vector<8xf32>
    %153 = vector.multi_reduction <maximumf>, %152, %cst_87 [1] : vector<8x8xf32> to vector<8xf32>
    %154 = vector.shape_cast %153 : vector<8xf32> to vector<8x1xf32>
    %155 = vector.broadcast %154 : vector<8x1xf32> to vector<8x8xf32>
    %156 = arith.subf %152, %155 : vector<8x8xf32>
    %157 = math.exp %156 : vector<8x8xf32>
    %cst_88 = arith.constant dense<0.000000e+00> : vector<8xf32>
    %158 = vector.multi_reduction <add>, %157, %cst_88 [1] : vector<8x8xf32> to vector<8xf32>
    %159 = vector.shape_cast %158 : vector<8xf32> to vector<8x1xf32>
    %160 = tpu.reciprocal %159 {approx = true} : vector<8x1xf32> -> vector<8x1xf32>
    %161 = vector.broadcast %160 : vector<8x1xf32> to vector<8x8xf32>
    %162 = arith.mulf %157, %161 : vector<8x8xf32>
    %cst_89 = arith.constant dense<0.000000e+00> : vector<8x16xf32>
    %163 = tpu.matmul %162, %149, %cst_89 {dimension_numbers = #tpu.dot_dimension_numbers<[1], [0], [0], [1], [0, 0, 1, 1], [], []>} : vector<8x8xf32>, vector<8x16xf32>, vector<8x16xf32> -> vector<8x16xf32>
    %164 = vector.extract_strided_slice %144 {offsets = [0, 16], sizes = [8, 16], strides = [1, 1]} : vector<8x32xf32> to vector<8x16xf32>
    %165 = vector.extract_strided_slice %145 {offsets = [0, 16], sizes = [8, 16], strides = [1, 1]} : vector<8x32xf32> to vector<8x16xf32>
    %166 = vector.extract_strided_slice %146 {offsets = [0, 16], sizes = [8, 16], strides = [1, 1]} : vector<8x32xf32> to vector<8x16xf32>
    %cst_90 = arith.constant dense<0.000000e+00> : vector<8x8xf32>
    %167 = tpu.matmul %164, %165, %cst_90 {dimension_numbers = #tpu.dot_dimension_numbers<[1], [1], [0], [0], [0, 0, 1, 0], [], []>} : vector<8x16xf32>, vector<8x16xf32>, vector<8x8xf32> -> vector<8x8xf32>
    %cst_91 = arith.constant 2.500000e-01 : f32
    %168 = vector.broadcast %cst_91 : f32 to vector<8x8xf32>
    %169 = arith.mulf %167, %168 : vector<8x8xf32>
    %cst_92 = arith.constant dense<0xFF800000> : vector<8xf32>
    %170 = vector.multi_reduction <maximumf>, %169, %cst_92 [1] : vector<8x8xf32> to vector<8xf32>
    %171 = vector.shape_cast %170 : vector<8xf32> to vector<8x1xf32>
    %172 = vector.broadcast %171 : vector<8x1xf32> to vector<8x8xf32>
    %173 = arith.subf %169, %172 : vector<8x8xf32>
    %174 = math.exp %173 : vector<8x8xf32>
    %cst_93 = arith.constant dense<0.000000e+00> : vector<8xf32>
    %175 = vector.multi_reduction <add>, %174, %cst_93 [1] : vector<8x8xf32> to vector<8xf32>
    %176 = vector.shape_cast %175 : vector<8xf32> to vector<8x1xf32>
    %177 = tpu.reciprocal %176 {approx = true} : vector<8x1xf32> -> vector<8x1xf32>
    %178 = vector.broadcast %177 : vector<8x1xf32> to vector<8x8xf32>
    %179 = arith.mulf %174, %178 : vector<8x8xf32>
    %cst_94 = arith.constant dense<0.000000e+00> : vector<8x16xf32>
    %180 = tpu.matmul %179, %166, %cst_94 {dimension_numbers = #tpu.dot_dimension_numbers<[1], [0], [0], [1], [0, 0, 1, 1], [], []>} : vector<8x8xf32>, vector<8x16xf32>, vector<8x16xf32> -> vector<8x16xf32>
    %181 = tpu.concatenate %163, %180 in 1 : vector<8x16xf32>, vector<8x16xf32> -> vector<8x32xf32>
    %cst_95 = arith.constant dense<0.000000e+00> : vector<8x32xf32>
    %182 = tpu.matmul %181, %134, %cst_95 {dimension_numbers = #tpu.dot_dimension_numbers<[1], [0], [0], [1], [0, 0, 1, 1], [], []>} : vector<8x32xf32>, vector<32x32xf32>, vector<8x32xf32> -> vector<8x32xf32>
    %183 = vector.broadcast %136 : vector<1x32xf32> to vector<8x32xf32>
    %184 = arith.addf %182, %183 : vector<8x32xf32>
    %185 = arith.addf %184, %128 : vector<8x32xf32>
    %cst_96 = arith.constant dense<0.000000e+00> : vector<8xf32>
    %186 = vector.multi_reduction <add>, %185, %cst_96 [1] : vector<8x32xf32> to vector<8xf32>
    %187 = vector.shape_cast %186 : vector<8xf32> to vector<8x1xf32>
    %cst_97 = arith.constant 3.200000e+01 : f32
    %188 = vector.broadcast %cst_97 : f32 to vector<8x1xf32>
    %189 = arith.divf %187, %188 : vector<8x1xf32>
    %190 = vector.broadcast %189 : vector<8x1xf32> to vector<8x32xf32>
    %191 = arith.subf %185, %190 : vector<8x32xf32>
    %192 = arith.mulf %191, %191 : vector<8x32xf32>
    %cst_98 = arith.constant dense<0.000000e+00> : vector<8xf32>
    %193 = vector.multi_reduction <add>, %192, %cst_98 [1] : vector<8x32xf32> to vector<8xf32>
    %194 = vector.shape_cast %193 : vector<8xf32> to vector<8x1xf32>
    %cst_99 = arith.constant 3.200000e+01 : f32
    %195 = vector.broadcast %cst_99 : f32 to vector<8x1xf32>
    %196 = arith.divf %194, %195 : vector<8x1xf32>
    %197 = vector.broadcast %189 : vector<8x1xf32> to vector<8x32xf32>
    %198 = arith.subf %185, %197 : vector<8x32xf32>
    %cst_100 = arith.constant 9.99999974E-6 : f32
    %199 = vector.broadcast %cst_100 : f32 to vector<8x1xf32>
    %200 = arith.addf %196, %199 : vector<8x1xf32>
    %201 = math.rsqrt %200 : vector<8x1xf32>
    %202 = vector.broadcast %201 : vector<8x1xf32> to vector<8x32xf32>
    %203 = arith.mulf %198, %202 : vector<8x32xf32>
    %204 = vector.broadcast %138 : vector<1x32xf32> to vector<8x32xf32>
    %205 = arith.mulf %203, %204 : vector<8x32xf32>
    %206 = vector.broadcast %140 : vector<1x32xf32> to vector<8x32xf32>
    %207 = arith.addf %205, %206 : vector<8x32xf32>
    %c1_101 = arith.constant 1 : index
    %c0_102 = arith.constant 0 : index
    %c0_103 = arith.constant 0 : index
    %208 = vector.load %arg13[%c1_101, %c0_102, %c0_103] : memref<2x32x64xf32, #tpu.memory_space<vmem>>, vector<1x32x64xf32>
    %209 = vector.shape_cast %208 : vector<1x32x64xf32> to vector<32x64xf32>
    %c1_104 = arith.constant 1 : index
    %c0_105 = arith.constant 0 : index
    %c0_106 = arith.constant 0 : index
    %210 = vector.load %arg14[%c1_104, %c0_105, %c0_106] : memref<2x1x64xf32, #tpu.memory_space<vmem>>, vector<1x1x64xf32>
    %211 = vector.shape_cast %210 : vector<1x1x64xf32> to vector<1x64xf32>
    %c1_107 = arith.constant 1 : index
    %c0_108 = arith.constant 0 : index
    %c0_109 = arith.constant 0 : index
    %212 = vector.load %arg15[%c1_107, %c0_108, %c0_109] : memref<2x64x32xf32, #tpu.memory_space<vmem>>, vector<1x64x32xf32>
    %213 = vector.shape_cast %212 : vector<1x64x32xf32> to vector<64x32xf32>
    %c1_110 = arith.constant 1 : index
    %c0_111 = arith.constant 0 : index
    %c0_112 = arith.constant 0 : index
    %214 = vector.load %arg16[%c1_110, %c0_111, %c0_112] : memref<2x1x32xf32, #tpu.memory_space<vmem>>, vector<1x1x32xf32>
    %215 = vector.shape_cast %214 : vector<1x1x32xf32> to vector<1x32xf32>
    %c1_113 = arith.constant 1 : index
    %c0_114 = arith.constant 0 : index
    %c0_115 = arith.constant 0 : index
    %216 = vector.load %arg17[%c1_113, %c0_114, %c0_115] : memref<2x1x32xf32, #tpu.memory_space<vmem>>, vector<1x1x32xf32>
    %217 = vector.shape_cast %216 : vector<1x1x32xf32> to vector<1x32xf32>
    %c1_116 = arith.constant 1 : index
    %c0_117 = arith.constant 0 : index
    %c0_118 = arith.constant 0 : index
    %218 = vector.load %arg18[%c1_116, %c0_117, %c0_118] : memref<2x1x32xf32, #tpu.memory_space<vmem>>, vector<1x1x32xf32>
    %219 = vector.shape_cast %218 : vector<1x1x32xf32> to vector<1x32xf32>
    %cst_119 = arith.constant dense<0.000000e+00> : vector<8x64xf32>
    %220 = tpu.matmul %207, %209, %cst_119 {dimension_numbers = #tpu.dot_dimension_numbers<[1], [0], [0], [1], [0, 0, 1, 1], [], []>} : vector<8x32xf32>, vector<32x64xf32>, vector<8x64xf32> -> vector<8x64xf32>
    %221 = vector.broadcast %211 : vector<1x64xf32> to vector<8x64xf32>
    %222 = arith.addf %220, %221 : vector<8x64xf32>
    %cst_120 = arith.constant 0.000000e+00 : f32
    %223 = vector.broadcast %cst_120 : f32 to vector<8x64xf32>
    %224 = arith.maximumf %222, %223 : vector<8x64xf32>
    %cst_121 = arith.constant dense<0.000000e+00> : vector<8x32xf32>
    %225 = tpu.matmul %224, %213, %cst_121 {dimension_numbers = #tpu.dot_dimension_numbers<[1], [0], [0], [1], [0, 0, 1, 1], [], []>} : vector<8x64xf32>, vector<64x32xf32>, vector<8x32xf32> -> vector<8x32xf32>
    %226 = vector.broadcast %215 : vector<1x32xf32> to vector<8x32xf32>
    %227 = arith.addf %225, %226 : vector<8x32xf32>
    %228 = arith.addf %227, %207 : vector<8x32xf32>
    %cst_122 = arith.constant dense<0.000000e+00> : vector<8xf32>
    %229 = vector.multi_reduction <add>, %228, %cst_122 [1] : vector<8x32xf32> to vector<8xf32>
    %230 = vector.shape_cast %229 : vector<8xf32> to vector<8x1xf32>
    %cst_123 = arith.constant 3.200000e+01 : f32
    %231 = vector.broadcast %cst_123 : f32 to vector<8x1xf32>
    %232 = arith.divf %230, %231 : vector<8x1xf32>
    %233 = vector.broadcast %232 : vector<8x1xf32> to vector<8x32xf32>
    %234 = arith.subf %228, %233 : vector<8x32xf32>
    %235 = arith.mulf %234, %234 : vector<8x32xf32>
    %cst_124 = arith.constant dense<0.000000e+00> : vector<8xf32>
    %236 = vector.multi_reduction <add>, %235, %cst_124 [1] : vector<8x32xf32> to vector<8xf32>
    %237 = vector.shape_cast %236 : vector<8xf32> to vector<8x1xf32>
    %cst_125 = arith.constant 3.200000e+01 : f32
    %238 = vector.broadcast %cst_125 : f32 to vector<8x1xf32>
    %239 = arith.divf %237, %238 : vector<8x1xf32>
    %240 = vector.broadcast %232 : vector<8x1xf32> to vector<8x32xf32>
    %241 = arith.subf %228, %240 : vector<8x32xf32>
    %cst_126 = arith.constant 9.99999974E-6 : f32
    %242 = vector.broadcast %cst_126 : f32 to vector<8x1xf32>
    %243 = arith.addf %239, %242 : vector<8x1xf32>
    %244 = math.rsqrt %243 : vector<8x1xf32>
    %245 = vector.broadcast %244 : vector<8x1xf32> to vector<8x32xf32>
    %246 = arith.mulf %241, %245 : vector<8x32xf32>
    %247 = vector.broadcast %217 : vector<1x32xf32> to vector<8x32xf32>
    %248 = arith.mulf %246, %247 : vector<8x32xf32>
    %249 = vector.broadcast %219 : vector<1x32xf32> to vector<8x32xf32>
    %250 = arith.addf %248, %249 : vector<8x32xf32>
    %c0_127 = arith.constant 0 : index
    %c0_128 = arith.constant 0 : index
    %c0_129 = arith.constant 0 : index
    %251 = vector.load %arg3[%c0_127, %c0_128, %c0_129] : memref<1x7x7xf32, #tpu.memory_space<vmem>>, vector<1x7x7xf32>
    %252 = vector.shape_cast %251 : vector<1x7x7xf32> to vector<7x7xf32>
    %c0_130 = arith.constant 0 : index
    %c0_131 = arith.constant 0 : index
    %c0_132 = arith.constant 0 : index
    %253 = vector.load %arg4[%c0_130, %c0_131, %c0_132] : memref<1x7x1xf32, #tpu.memory_space<vmem>>, vector<1x7x1xf32>
    %254 = vector.shape_cast %253 : vector<1x7x1xf32> to vector<7x1xf32>
    %c0_133 = arith.constant 0 : index
    %c0_134 = arith.constant 0 : index
    %c0_135 = arith.constant 0 : index
    %255 = vector.load %arg2[%c0_133, %c0_134, %c0_135] : memref<1x7x32xf32, #tpu.memory_space<vmem>>, vector<1x7x32xf32>
    %256 = vector.shape_cast %255 : vector<1x7x32xf32> to vector<7x32xf32>
    %c0_136 = arith.constant 0 : index
    %c0_137 = arith.constant 0 : index
    %c0_138 = arith.constant 0 : index
    %257 = vector.load %arg19[%c0_136, %c0_137, %c0_138] : memref<2x32x96xf32, #tpu.memory_space<vmem>>, vector<1x32x96xf32>
    %258 = vector.shape_cast %257 : vector<1x32x96xf32> to vector<32x96xf32>
    %c0_139 = arith.constant 0 : index
    %c0_140 = arith.constant 0 : index
    %c0_141 = arith.constant 0 : index
    %259 = vector.load %arg20[%c0_139, %c0_140, %c0_141] : memref<2x1x96xf32, #tpu.memory_space<vmem>>, vector<1x1x96xf32>
    %260 = vector.shape_cast %259 : vector<1x1x96xf32> to vector<1x96xf32>
    %c0_142 = arith.constant 0 : index
    %c0_143 = arith.constant 0 : index
    %c0_144 = arith.constant 0 : index
    %261 = vector.load %arg21[%c0_142, %c0_143, %c0_144] : memref<2x32x32xf32, #tpu.memory_space<vmem>>, vector<1x32x32xf32>
    %262 = vector.shape_cast %261 : vector<1x32x32xf32> to vector<32x32xf32>
    %c0_145 = arith.constant 0 : index
    %c0_146 = arith.constant 0 : index
    %c0_147 = arith.constant 0 : index
    %263 = vector.load %arg22[%c0_145, %c0_146, %c0_147] : memref<2x1x32xf32, #tpu.memory_space<vmem>>, vector<1x1x32xf32>
    %264 = vector.shape_cast %263 : vector<1x1x32xf32> to vector<1x32xf32>
    %c0_148 = arith.constant 0 : index
    %c0_149 = arith.constant 0 : index
    %c0_150 = arith.constant 0 : index
    %265 = vector.load %arg23[%c0_148, %c0_149, %c0_150] : memref<2x1x32xf32, #tpu.memory_space<vmem>>, vector<1x1x32xf32>
    %266 = vector.shape_cast %265 : vector<1x1x32xf32> to vector<1x32xf32>
    %c0_151 = arith.constant 0 : index
    %c0_152 = arith.constant 0 : index
    %c0_153 = arith.constant 0 : index
    %267 = vector.load %arg24[%c0_151, %c0_152, %c0_153] : memref<2x1x32xf32, #tpu.memory_space<vmem>>, vector<1x1x32xf32>
    %268 = vector.shape_cast %267 : vector<1x1x32xf32> to vector<1x32xf32>
    %cst_154 = arith.constant dense<0.000000e+00> : vector<7x96xf32>
    %269 = tpu.matmul %256, %258, %cst_154 {dimension_numbers = #tpu.dot_dimension_numbers<[1], [0], [0], [1], [0, 0, 1, 1], [], []>} : vector<7x32xf32>, vector<32x96xf32>, vector<7x96xf32> -> vector<7x96xf32>
    %270 = vector.broadcast %260 : vector<1x96xf32> to vector<7x96xf32>
    %271 = arith.addf %269, %270 : vector<7x96xf32>
    %272 = vector.extract_strided_slice %271 {offsets = [0, 0], sizes = [7, 32], strides = [1, 1]} : vector<7x96xf32> to vector<7x32xf32>
    %273 = vector.extract_strided_slice %271 {offsets = [0, 32], sizes = [7, 32], strides = [1, 1]} : vector<7x96xf32> to vector<7x32xf32>
    %274 = vector.extract_strided_slice %271 {offsets = [0, 64], sizes = [7, 32], strides = [1, 1]} : vector<7x96xf32> to vector<7x32xf32>
    %275 = vector.extract_strided_slice %272 {offsets = [0, 0], sizes = [7, 16], strides = [1, 1]} : vector<7x32xf32> to vector<7x16xf32>
    %276 = vector.extract_strided_slice %273 {offsets = [0, 0], sizes = [7, 16], strides = [1, 1]} : vector<7x32xf32> to vector<7x16xf32>
    %277 = vector.extract_strided_slice %274 {offsets = [0, 0], sizes = [7, 16], strides = [1, 1]} : vector<7x32xf32> to vector<7x16xf32>
    %cst_155 = arith.constant dense<0.000000e+00> : vector<7x7xf32>
    %278 = tpu.matmul %275, %276, %cst_155 {dimension_numbers = #tpu.dot_dimension_numbers<[1], [1], [0], [0], [0, 0, 1, 0], [], []>} : vector<7x16xf32>, vector<7x16xf32>, vector<7x7xf32> -> vector<7x7xf32>
    %cst_156 = arith.constant 2.500000e-01 : f32
    %279 = vector.broadcast %cst_156 : f32 to vector<7x7xf32>
    %280 = arith.mulf %278, %279 : vector<7x7xf32>
    %281 = arith.addf %280, %252 : vector<7x7xf32>
    %cst_157 = arith.constant dense<0xFF800000> : vector<7xf32>
    %282 = vector.multi_reduction <maximumf>, %281, %cst_157 [1] : vector<7x7xf32> to vector<7xf32>
    %283 = vector.shape_cast %282 : vector<7xf32> to vector<7x1xf32>
    %284 = vector.broadcast %283 : vector<7x1xf32> to vector<7x7xf32>
    %285 = arith.subf %281, %284 : vector<7x7xf32>
    %286 = math.exp %285 : vector<7x7xf32>
    %cst_158 = arith.constant dense<0.000000e+00> : vector<7xf32>
    %287 = vector.multi_reduction <add>, %286, %cst_158 [1] : vector<7x7xf32> to vector<7xf32>
    %288 = vector.shape_cast %287 : vector<7xf32> to vector<7x1xf32>
    %289 = tpu.reciprocal %288 {approx = true} : vector<7x1xf32> -> vector<7x1xf32>
    %290 = vector.broadcast %289 : vector<7x1xf32> to vector<7x7xf32>
    %291 = arith.mulf %286, %290 : vector<7x7xf32>
    %cst_159 = arith.constant dense<0.000000e+00> : vector<7x16xf32>
    %292 = tpu.matmul %291, %277, %cst_159 {dimension_numbers = #tpu.dot_dimension_numbers<[1], [0], [0], [1], [0, 0, 1, 1], [], []>} : vector<7x7xf32>, vector<7x16xf32>, vector<7x16xf32> -> vector<7x16xf32>
    %293 = vector.extract_strided_slice %272 {offsets = [0, 16], sizes = [7, 16], strides = [1, 1]} : vector<7x32xf32> to vector<7x16xf32>
    %294 = vector.extract_strided_slice %273 {offsets = [0, 16], sizes = [7, 16], strides = [1, 1]} : vector<7x32xf32> to vector<7x16xf32>
    %295 = vector.extract_strided_slice %274 {offsets = [0, 16], sizes = [7, 16], strides = [1, 1]} : vector<7x32xf32> to vector<7x16xf32>
    %cst_160 = arith.constant dense<0.000000e+00> : vector<7x7xf32>
    %296 = tpu.matmul %293, %294, %cst_160 {dimension_numbers = #tpu.dot_dimension_numbers<[1], [1], [0], [0], [0, 0, 1, 0], [], []>} : vector<7x16xf32>, vector<7x16xf32>, vector<7x7xf32> -> vector<7x7xf32>
    %cst_161 = arith.constant 2.500000e-01 : f32
    %297 = vector.broadcast %cst_161 : f32 to vector<7x7xf32>
    %298 = arith.mulf %296, %297 : vector<7x7xf32>
    %299 = arith.addf %298, %252 : vector<7x7xf32>
    %cst_162 = arith.constant dense<0xFF800000> : vector<7xf32>
    %300 = vector.multi_reduction <maximumf>, %299, %cst_162 [1] : vector<7x7xf32> to vector<7xf32>
    %301 = vector.shape_cast %300 : vector<7xf32> to vector<7x1xf32>
    %302 = vector.broadcast %301 : vector<7x1xf32> to vector<7x7xf32>
    %303 = arith.subf %299, %302 : vector<7x7xf32>
    %304 = math.exp %303 : vector<7x7xf32>
    %cst_163 = arith.constant dense<0.000000e+00> : vector<7xf32>
    %305 = vector.multi_reduction <add>, %304, %cst_163 [1] : vector<7x7xf32> to vector<7xf32>
    %306 = vector.shape_cast %305 : vector<7xf32> to vector<7x1xf32>
    %307 = tpu.reciprocal %306 {approx = true} : vector<7x1xf32> -> vector<7x1xf32>
    %308 = vector.broadcast %307 : vector<7x1xf32> to vector<7x7xf32>
    %309 = arith.mulf %304, %308 : vector<7x7xf32>
    %cst_164 = arith.constant dense<0.000000e+00> : vector<7x16xf32>
    %310 = tpu.matmul %309, %295, %cst_164 {dimension_numbers = #tpu.dot_dimension_numbers<[1], [0], [0], [1], [0, 0, 1, 1], [], []>} : vector<7x7xf32>, vector<7x16xf32>, vector<7x16xf32> -> vector<7x16xf32>
    %311 = tpu.concatenate %292, %310 in 1 : vector<7x16xf32>, vector<7x16xf32> -> vector<7x32xf32>
    %cst_165 = arith.constant dense<0.000000e+00> : vector<7x32xf32>
    %312 = tpu.matmul %311, %262, %cst_165 {dimension_numbers = #tpu.dot_dimension_numbers<[1], [0], [0], [1], [0, 0, 1, 1], [], []>} : vector<7x32xf32>, vector<32x32xf32>, vector<7x32xf32> -> vector<7x32xf32>
    %313 = vector.broadcast %264 : vector<1x32xf32> to vector<7x32xf32>
    %314 = arith.addf %312, %313 : vector<7x32xf32>
    %315 = arith.addf %314, %256 : vector<7x32xf32>
    %cst_166 = arith.constant dense<0.000000e+00> : vector<7xf32>
    %316 = vector.multi_reduction <add>, %315, %cst_166 [1] : vector<7x32xf32> to vector<7xf32>
    %317 = vector.shape_cast %316 : vector<7xf32> to vector<7x1xf32>
    %cst_167 = arith.constant 3.200000e+01 : f32
    %318 = vector.broadcast %cst_167 : f32 to vector<7x1xf32>
    %319 = arith.divf %317, %318 : vector<7x1xf32>
    %320 = vector.broadcast %319 : vector<7x1xf32> to vector<7x32xf32>
    %321 = arith.subf %315, %320 : vector<7x32xf32>
    %322 = arith.mulf %321, %321 : vector<7x32xf32>
    %cst_168 = arith.constant dense<0.000000e+00> : vector<7xf32>
    %323 = vector.multi_reduction <add>, %322, %cst_168 [1] : vector<7x32xf32> to vector<7xf32>
    %324 = vector.shape_cast %323 : vector<7xf32> to vector<7x1xf32>
    %cst_169 = arith.constant 3.200000e+01 : f32
    %325 = vector.broadcast %cst_169 : f32 to vector<7x1xf32>
    %326 = arith.divf %324, %325 : vector<7x1xf32>
    %327 = vector.broadcast %319 : vector<7x1xf32> to vector<7x32xf32>
    %328 = arith.subf %315, %327 : vector<7x32xf32>
    %cst_170 = arith.constant 9.99999974E-6 : f32
    %329 = vector.broadcast %cst_170 : f32 to vector<7x1xf32>
    %330 = arith.addf %326, %329 : vector<7x1xf32>
    %331 = math.rsqrt %330 : vector<7x1xf32>
    %332 = vector.broadcast %331 : vector<7x1xf32> to vector<7x32xf32>
    %333 = arith.mulf %328, %332 : vector<7x32xf32>
    %334 = vector.broadcast %266 : vector<1x32xf32> to vector<7x32xf32>
    %335 = arith.mulf %333, %334 : vector<7x32xf32>
    %336 = vector.broadcast %268 : vector<1x32xf32> to vector<7x32xf32>
    %337 = arith.addf %335, %336 : vector<7x32xf32>
    %338 = vector.broadcast %254 : vector<7x1xf32> to vector<7x32xf32>
    %339 = arith.mulf %337, %338 : vector<7x32xf32>
    %c0_171 = arith.constant 0 : index
    %c0_172 = arith.constant 0 : index
    %c0_173 = arith.constant 0 : index
    %340 = vector.load %arg25[%c0_171, %c0_172, %c0_173] : memref<2x32x32xf32, #tpu.memory_space<vmem>>, vector<1x32x32xf32>
    %341 = vector.shape_cast %340 : vector<1x32x32xf32> to vector<32x32xf32>
    %c0_174 = arith.constant 0 : index
    %c0_175 = arith.constant 0 : index
    %c0_176 = arith.constant 0 : index
    %342 = vector.load %arg26[%c0_174, %c0_175, %c0_176] : memref<2x1x32xf32, #tpu.memory_space<vmem>>, vector<1x1x32xf32>
    %343 = vector.shape_cast %342 : vector<1x1x32xf32> to vector<1x32xf32>
    %c0_177 = arith.constant 0 : index
    %c0_178 = arith.constant 0 : index
    %c0_179 = arith.constant 0 : index
    %344 = vector.load %arg27[%c0_177, %c0_178, %c0_179] : memref<2x32x64xf32, #tpu.memory_space<vmem>>, vector<1x32x64xf32>
    %345 = vector.shape_cast %344 : vector<1x32x64xf32> to vector<32x64xf32>
    %c0_180 = arith.constant 0 : index
    %c0_181 = arith.constant 0 : index
    %c0_182 = arith.constant 0 : index
    %346 = vector.load %arg28[%c0_180, %c0_181, %c0_182] : memref<2x1x64xf32, #tpu.memory_space<vmem>>, vector<1x1x64xf32>
    %347 = vector.shape_cast %346 : vector<1x1x64xf32> to vector<1x64xf32>
    %c0_183 = arith.constant 0 : index
    %c0_184 = arith.constant 0 : index
    %c0_185 = arith.constant 0 : index
    %348 = vector.load %arg29[%c0_183, %c0_184, %c0_185] : memref<2x32x32xf32, #tpu.memory_space<vmem>>, vector<1x32x32xf32>
    %349 = vector.shape_cast %348 : vector<1x32x32xf32> to vector<32x32xf32>
    %c0_186 = arith.constant 0 : index
    %c0_187 = arith.constant 0 : index
    %c0_188 = arith.constant 0 : index
    %350 = vector.load %arg30[%c0_186, %c0_187, %c0_188] : memref<2x1x32xf32, #tpu.memory_space<vmem>>, vector<1x1x32xf32>
    %351 = vector.shape_cast %350 : vector<1x1x32xf32> to vector<1x32xf32>
    %c0_189 = arith.constant 0 : index
    %c0_190 = arith.constant 0 : index
    %c0_191 = arith.constant 0 : index
    %352 = vector.load %arg31[%c0_189, %c0_190, %c0_191] : memref<2x1x32xf32, #tpu.memory_space<vmem>>, vector<1x1x32xf32>
    %353 = vector.shape_cast %352 : vector<1x1x32xf32> to vector<1x32xf32>
    %c0_192 = arith.constant 0 : index
    %c0_193 = arith.constant 0 : index
    %c0_194 = arith.constant 0 : index
    %354 = vector.load %arg32[%c0_192, %c0_193, %c0_194] : memref<2x1x32xf32, #tpu.memory_space<vmem>>, vector<1x1x32xf32>
    %355 = vector.shape_cast %354 : vector<1x1x32xf32> to vector<1x32xf32>
    %cst_195 = arith.constant dense<0.000000e+00> : vector<7x32xf32>
    %356 = tpu.matmul %339, %341, %cst_195 {dimension_numbers = #tpu.dot_dimension_numbers<[1], [0], [0], [1], [0, 0, 1, 1], [], []>} : vector<7x32xf32>, vector<32x32xf32>, vector<7x32xf32> -> vector<7x32xf32>
    %357 = vector.broadcast %343 : vector<1x32xf32> to vector<7x32xf32>
    %358 = arith.addf %356, %357 : vector<7x32xf32>
    %cst_196 = arith.constant dense<0.000000e+00> : vector<8x64xf32>
    %359 = tpu.matmul %250, %345, %cst_196 {dimension_numbers = #tpu.dot_dimension_numbers<[1], [0], [0], [1], [0, 0, 1, 1], [], []>} : vector<8x32xf32>, vector<32x64xf32>, vector<8x64xf32> -> vector<8x64xf32>
    %360 = vector.broadcast %347 : vector<1x64xf32> to vector<8x64xf32>
    %361 = arith.addf %359, %360 : vector<8x64xf32>
    %362 = vector.extract_strided_slice %361 {offsets = [0, 0], sizes = [8, 32], strides = [1, 1]} : vector<8x64xf32> to vector<8x32xf32>
    %363 = vector.extract_strided_slice %361 {offsets = [0, 32], sizes = [8, 32], strides = [1, 1]} : vector<8x64xf32> to vector<8x32xf32>
    %364 = vector.extract_strided_slice %358 {offsets = [0, 0], sizes = [7, 16], strides = [1, 1]} : vector<7x32xf32> to vector<7x16xf32>
    %365 = vector.extract_strided_slice %362 {offsets = [0, 0], sizes = [8, 16], strides = [1, 1]} : vector<8x32xf32> to vector<8x16xf32>
    %366 = vector.extract_strided_slice %363 {offsets = [0, 0], sizes = [8, 16], strides = [1, 1]} : vector<8x32xf32> to vector<8x16xf32>
    %cst_197 = arith.constant dense<0.000000e+00> : vector<7x8xf32>
    %367 = tpu.matmul %364, %365, %cst_197 {dimension_numbers = #tpu.dot_dimension_numbers<[1], [1], [0], [0], [0, 0, 1, 0], [], []>} : vector<7x16xf32>, vector<8x16xf32>, vector<7x8xf32> -> vector<7x8xf32>
    %cst_198 = arith.constant 2.500000e-01 : f32
    %368 = vector.broadcast %cst_198 : f32 to vector<7x8xf32>
    %369 = arith.mulf %367, %368 : vector<7x8xf32>
    %cst_199 = arith.constant dense<0xFF800000> : vector<7xf32>
    %370 = vector.multi_reduction <maximumf>, %369, %cst_199 [1] : vector<7x8xf32> to vector<7xf32>
    %371 = vector.shape_cast %370 : vector<7xf32> to vector<7x1xf32>
    %372 = vector.broadcast %371 : vector<7x1xf32> to vector<7x8xf32>
    %373 = arith.subf %369, %372 : vector<7x8xf32>
    %374 = math.exp %373 : vector<7x8xf32>
    %cst_200 = arith.constant dense<0.000000e+00> : vector<7xf32>
    %375 = vector.multi_reduction <add>, %374, %cst_200 [1] : vector<7x8xf32> to vector<7xf32>
    %376 = vector.shape_cast %375 : vector<7xf32> to vector<7x1xf32>
    %377 = tpu.reciprocal %376 {approx = true} : vector<7x1xf32> -> vector<7x1xf32>
    %378 = vector.broadcast %377 : vector<7x1xf32> to vector<7x8xf32>
    %379 = arith.mulf %374, %378 : vector<7x8xf32>
    %cst_201 = arith.constant dense<0.000000e+00> : vector<7x16xf32>
    %380 = tpu.matmul %379, %366, %cst_201 {dimension_numbers = #tpu.dot_dimension_numbers<[1], [0], [0], [1], [0, 0, 1, 1], [], []>} : vector<7x8xf32>, vector<8x16xf32>, vector<7x16xf32> -> vector<7x16xf32>
    %381 = vector.extract_strided_slice %358 {offsets = [0, 16], sizes = [7, 16], strides = [1, 1]} : vector<7x32xf32> to vector<7x16xf32>
    %382 = vector.extract_strided_slice %362 {offsets = [0, 16], sizes = [8, 16], strides = [1, 1]} : vector<8x32xf32> to vector<8x16xf32>
    %383 = vector.extract_strided_slice %363 {offsets = [0, 16], sizes = [8, 16], strides = [1, 1]} : vector<8x32xf32> to vector<8x16xf32>
    %cst_202 = arith.constant dense<0.000000e+00> : vector<7x8xf32>
    %384 = tpu.matmul %381, %382, %cst_202 {dimension_numbers = #tpu.dot_dimension_numbers<[1], [1], [0], [0], [0, 0, 1, 0], [], []>} : vector<7x16xf32>, vector<8x16xf32>, vector<7x8xf32> -> vector<7x8xf32>
    %cst_203 = arith.constant 2.500000e-01 : f32
    %385 = vector.broadcast %cst_203 : f32 to vector<7x8xf32>
    %386 = arith.mulf %384, %385 : vector<7x8xf32>
    %cst_204 = arith.constant dense<0xFF800000> : vector<7xf32>
    %387 = vector.multi_reduction <maximumf>, %386, %cst_204 [1] : vector<7x8xf32> to vector<7xf32>
    %388 = vector.shape_cast %387 : vector<7xf32> to vector<7x1xf32>
    %389 = vector.broadcast %388 : vector<7x1xf32> to vector<7x8xf32>
    %390 = arith.subf %386, %389 : vector<7x8xf32>
    %391 = math.exp %390 : vector<7x8xf32>
    %cst_205 = arith.constant dense<0.000000e+00> : vector<7xf32>
    %392 = vector.multi_reduction <add>, %391, %cst_205 [1] : vector<7x8xf32> to vector<7xf32>
    %393 = vector.shape_cast %392 : vector<7xf32> to vector<7x1xf32>
    %394 = tpu.reciprocal %393 {approx = true} : vector<7x1xf32> -> vector<7x1xf32>
    %395 = vector.broadcast %394 : vector<7x1xf32> to vector<7x8xf32>
    %396 = arith.mulf %391, %395 : vector<7x8xf32>
    %cst_206 = arith.constant dense<0.000000e+00> : vector<7x16xf32>
    %397 = tpu.matmul %396, %383, %cst_206 {dimension_numbers = #tpu.dot_dimension_numbers<[1], [0], [0], [1], [0, 0, 1, 1], [], []>} : vector<7x8xf32>, vector<8x16xf32>, vector<7x16xf32> -> vector<7x16xf32>
    %398 = tpu.concatenate %380, %397 in 1 : vector<7x16xf32>, vector<7x16xf32> -> vector<7x32xf32>
    %cst_207 = arith.constant dense<0.000000e+00> : vector<7x32xf32>
    %399 = tpu.matmul %398, %349, %cst_207 {dimension_numbers = #tpu.dot_dimension_numbers<[1], [0], [0], [1], [0, 0, 1, 1], [], []>} : vector<7x32xf32>, vector<32x32xf32>, vector<7x32xf32> -> vector<7x32xf32>
    %400 = vector.broadcast %351 : vector<1x32xf32> to vector<7x32xf32>
    %401 = arith.addf %399, %400 : vector<7x32xf32>
    %402 = arith.addf %401, %339 : vector<7x32xf32>
    %cst_208 = arith.constant dense<0.000000e+00> : vector<7xf32>
    %403 = vector.multi_reduction <add>, %402, %cst_208 [1] : vector<7x32xf32> to vector<7xf32>
    %404 = vector.shape_cast %403 : vector<7xf32> to vector<7x1xf32>
    %cst_209 = arith.constant 3.200000e+01 : f32
    %405 = vector.broadcast %cst_209 : f32 to vector<7x1xf32>
    %406 = arith.divf %404, %405 : vector<7x1xf32>
    %407 = vector.broadcast %406 : vector<7x1xf32> to vector<7x32xf32>
    %408 = arith.subf %402, %407 : vector<7x32xf32>
    %409 = arith.mulf %408, %408 : vector<7x32xf32>
    %cst_210 = arith.constant dense<0.000000e+00> : vector<7xf32>
    %410 = vector.multi_reduction <add>, %409, %cst_210 [1] : vector<7x32xf32> to vector<7xf32>
    %411 = vector.shape_cast %410 : vector<7xf32> to vector<7x1xf32>
    %cst_211 = arith.constant 3.200000e+01 : f32
    %412 = vector.broadcast %cst_211 : f32 to vector<7x1xf32>
    %413 = arith.divf %411, %412 : vector<7x1xf32>
    %414 = vector.broadcast %406 : vector<7x1xf32> to vector<7x32xf32>
    %415 = arith.subf %402, %414 : vector<7x32xf32>
    %cst_212 = arith.constant 9.99999974E-6 : f32
    %416 = vector.broadcast %cst_212 : f32 to vector<7x1xf32>
    %417 = arith.addf %413, %416 : vector<7x1xf32>
    %418 = math.rsqrt %417 : vector<7x1xf32>
    %419 = vector.broadcast %418 : vector<7x1xf32> to vector<7x32xf32>
    %420 = arith.mulf %415, %419 : vector<7x32xf32>
    %421 = vector.broadcast %353 : vector<1x32xf32> to vector<7x32xf32>
    %422 = arith.mulf %420, %421 : vector<7x32xf32>
    %423 = vector.broadcast %355 : vector<1x32xf32> to vector<7x32xf32>
    %424 = arith.addf %422, %423 : vector<7x32xf32>
    %425 = vector.broadcast %254 : vector<7x1xf32> to vector<7x32xf32>
    %426 = arith.mulf %424, %425 : vector<7x32xf32>
    %c0_213 = arith.constant 0 : index
    %c0_214 = arith.constant 0 : index
    %c0_215 = arith.constant 0 : index
    %427 = vector.load %arg33[%c0_213, %c0_214, %c0_215] : memref<2x32x64xf32, #tpu.memory_space<vmem>>, vector<1x32x64xf32>
    %428 = vector.shape_cast %427 : vector<1x32x64xf32> to vector<32x64xf32>
    %c0_216 = arith.constant 0 : index
    %c0_217 = arith.constant 0 : index
    %c0_218 = arith.constant 0 : index
    %429 = vector.load %arg34[%c0_216, %c0_217, %c0_218] : memref<2x1x64xf32, #tpu.memory_space<vmem>>, vector<1x1x64xf32>
    %430 = vector.shape_cast %429 : vector<1x1x64xf32> to vector<1x64xf32>
    %c0_219 = arith.constant 0 : index
    %c0_220 = arith.constant 0 : index
    %c0_221 = arith.constant 0 : index
    %431 = vector.load %arg35[%c0_219, %c0_220, %c0_221] : memref<2x64x32xf32, #tpu.memory_space<vmem>>, vector<1x64x32xf32>
    %432 = vector.shape_cast %431 : vector<1x64x32xf32> to vector<64x32xf32>
    %c0_222 = arith.constant 0 : index
    %c0_223 = arith.constant 0 : index
    %c0_224 = arith.constant 0 : index
    %433 = vector.load %arg36[%c0_222, %c0_223, %c0_224] : memref<2x1x32xf32, #tpu.memory_space<vmem>>, vector<1x1x32xf32>
    %434 = vector.shape_cast %433 : vector<1x1x32xf32> to vector<1x32xf32>
    %c0_225 = arith.constant 0 : index
    %c0_226 = arith.constant 0 : index
    %c0_227 = arith.constant 0 : index
    %435 = vector.load %arg37[%c0_225, %c0_226, %c0_227] : memref<2x1x32xf32, #tpu.memory_space<vmem>>, vector<1x1x32xf32>
    %436 = vector.shape_cast %435 : vector<1x1x32xf32> to vector<1x32xf32>
    %c0_228 = arith.constant 0 : index
    %c0_229 = arith.constant 0 : index
    %c0_230 = arith.constant 0 : index
    %437 = vector.load %arg38[%c0_228, %c0_229, %c0_230] : memref<2x1x32xf32, #tpu.memory_space<vmem>>, vector<1x1x32xf32>
    %438 = vector.shape_cast %437 : vector<1x1x32xf32> to vector<1x32xf32>
    %cst_231 = arith.constant dense<0.000000e+00> : vector<7x64xf32>
    %439 = tpu.matmul %426, %428, %cst_231 {dimension_numbers = #tpu.dot_dimension_numbers<[1], [0], [0], [1], [0, 0, 1, 1], [], []>} : vector<7x32xf32>, vector<32x64xf32>, vector<7x64xf32> -> vector<7x64xf32>
    %440 = vector.broadcast %430 : vector<1x64xf32> to vector<7x64xf32>
    %441 = arith.addf %439, %440 : vector<7x64xf32>
    %cst_232 = arith.constant 0.000000e+00 : f32
    %442 = vector.broadcast %cst_232 : f32 to vector<7x64xf32>
    %443 = arith.maximumf %441, %442 : vector<7x64xf32>
    %cst_233 = arith.constant dense<0.000000e+00> : vector<7x32xf32>
    %444 = tpu.matmul %443, %432, %cst_233 {dimension_numbers = #tpu.dot_dimension_numbers<[1], [0], [0], [1], [0, 0, 1, 1], [], []>} : vector<7x64xf32>, vector<64x32xf32>, vector<7x32xf32> -> vector<7x32xf32>
    %445 = vector.broadcast %434 : vector<1x32xf32> to vector<7x32xf32>
    %446 = arith.addf %444, %445 : vector<7x32xf32>
    %447 = arith.addf %446, %426 : vector<7x32xf32>
    %cst_234 = arith.constant dense<0.000000e+00> : vector<7xf32>
    %448 = vector.multi_reduction <add>, %447, %cst_234 [1] : vector<7x32xf32> to vector<7xf32>
    %449 = vector.shape_cast %448 : vector<7xf32> to vector<7x1xf32>
    %cst_235 = arith.constant 3.200000e+01 : f32
    %450 = vector.broadcast %cst_235 : f32 to vector<7x1xf32>
    %451 = arith.divf %449, %450 : vector<7x1xf32>
    %452 = vector.broadcast %451 : vector<7x1xf32> to vector<7x32xf32>
    %453 = arith.subf %447, %452 : vector<7x32xf32>
    %454 = arith.mulf %453, %453 : vector<7x32xf32>
    %cst_236 = arith.constant dense<0.000000e+00> : vector<7xf32>
    %455 = vector.multi_reduction <add>, %454, %cst_236 [1] : vector<7x32xf32> to vector<7xf32>
    %456 = vector.shape_cast %455 : vector<7xf32> to vector<7x1xf32>
    %cst_237 = arith.constant 3.200000e+01 : f32
    %457 = vector.broadcast %cst_237 : f32 to vector<7x1xf32>
    %458 = arith.divf %456, %457 : vector<7x1xf32>
    %459 = vector.broadcast %451 : vector<7x1xf32> to vector<7x32xf32>
    %460 = arith.subf %447, %459 : vector<7x32xf32>
    %cst_238 = arith.constant 9.99999974E-6 : f32
    %461 = vector.broadcast %cst_238 : f32 to vector<7x1xf32>
    %462 = arith.addf %458, %461 : vector<7x1xf32>
    %463 = math.rsqrt %462 : vector<7x1xf32>
    %464 = vector.broadcast %463 : vector<7x1xf32> to vector<7x32xf32>
    %465 = arith.mulf %460, %464 : vector<7x32xf32>
    %466 = vector.broadcast %436 : vector<1x32xf32> to vector<7x32xf32>
    %467 = arith.mulf %465, %466 : vector<7x32xf32>
    %468 = vector.broadcast %438 : vector<1x32xf32> to vector<7x32xf32>
    %469 = arith.addf %467, %468 : vector<7x32xf32>
    %470 = vector.broadcast %254 : vector<7x1xf32> to vector<7x32xf32>
    %471 = arith.mulf %469, %470 : vector<7x32xf32>
    %c1_239 = arith.constant 1 : index
    %c0_240 = arith.constant 0 : index
    %c0_241 = arith.constant 0 : index
    %472 = vector.load %arg19[%c1_239, %c0_240, %c0_241] : memref<2x32x96xf32, #tpu.memory_space<vmem>>, vector<1x32x96xf32>
    %473 = vector.shape_cast %472 : vector<1x32x96xf32> to vector<32x96xf32>
    %c1_242 = arith.constant 1 : index
    %c0_243 = arith.constant 0 : index
    %c0_244 = arith.constant 0 : index
    %474 = vector.load %arg20[%c1_242, %c0_243, %c0_244] : memref<2x1x96xf32, #tpu.memory_space<vmem>>, vector<1x1x96xf32>
    %475 = vector.shape_cast %474 : vector<1x1x96xf32> to vector<1x96xf32>
    %c1_245 = arith.constant 1 : index
    %c0_246 = arith.constant 0 : index
    %c0_247 = arith.constant 0 : index
    %476 = vector.load %arg21[%c1_245, %c0_246, %c0_247] : memref<2x32x32xf32, #tpu.memory_space<vmem>>, vector<1x32x32xf32>
    %477 = vector.shape_cast %476 : vector<1x32x32xf32> to vector<32x32xf32>
    %c1_248 = arith.constant 1 : index
    %c0_249 = arith.constant 0 : index
    %c0_250 = arith.constant 0 : index
    %478 = vector.load %arg22[%c1_248, %c0_249, %c0_250] : memref<2x1x32xf32, #tpu.memory_space<vmem>>, vector<1x1x32xf32>
    %479 = vector.shape_cast %478 : vector<1x1x32xf32> to vector<1x32xf32>
    %c1_251 = arith.constant 1 : index
    %c0_252 = arith.constant 0 : index
    %c0_253 = arith.constant 0 : index
    %480 = vector.load %arg23[%c1_251, %c0_252, %c0_253] : memref<2x1x32xf32, #tpu.memory_space<vmem>>, vector<1x1x32xf32>
    %481 = vector.shape_cast %480 : vector<1x1x32xf32> to vector<1x32xf32>
    %c1_254 = arith.constant 1 : index
    %c0_255 = arith.constant 0 : index
    %c0_256 = arith.constant 0 : index
    %482 = vector.load %arg24[%c1_254, %c0_255, %c0_256] : memref<2x1x32xf32, #tpu.memory_space<vmem>>, vector<1x1x32xf32>
    %483 = vector.shape_cast %482 : vector<1x1x32xf32> to vector<1x32xf32>
    %cst_257 = arith.constant dense<0.000000e+00> : vector<7x96xf32>
    %484 = tpu.matmul %471, %473, %cst_257 {dimension_numbers = #tpu.dot_dimension_numbers<[1], [0], [0], [1], [0, 0, 1, 1], [], []>} : vector<7x32xf32>, vector<32x96xf32>, vector<7x96xf32> -> vector<7x96xf32>
    %485 = vector.broadcast %475 : vector<1x96xf32> to vector<7x96xf32>
    %486 = arith.addf %484, %485 : vector<7x96xf32>
    %487 = vector.extract_strided_slice %486 {offsets = [0, 0], sizes = [7, 32], strides = [1, 1]} : vector<7x96xf32> to vector<7x32xf32>
    %488 = vector.extract_strided_slice %486 {offsets = [0, 32], sizes = [7, 32], strides = [1, 1]} : vector<7x96xf32> to vector<7x32xf32>
    %489 = vector.extract_strided_slice %486 {offsets = [0, 64], sizes = [7, 32], strides = [1, 1]} : vector<7x96xf32> to vector<7x32xf32>
    %490 = vector.extract_strided_slice %487 {offsets = [0, 0], sizes = [7, 16], strides = [1, 1]} : vector<7x32xf32> to vector<7x16xf32>
    %491 = vector.extract_strided_slice %488 {offsets = [0, 0], sizes = [7, 16], strides = [1, 1]} : vector<7x32xf32> to vector<7x16xf32>
    %492 = vector.extract_strided_slice %489 {offsets = [0, 0], sizes = [7, 16], strides = [1, 1]} : vector<7x32xf32> to vector<7x16xf32>
    %cst_258 = arith.constant dense<0.000000e+00> : vector<7x7xf32>
    %493 = tpu.matmul %490, %491, %cst_258 {dimension_numbers = #tpu.dot_dimension_numbers<[1], [1], [0], [0], [0, 0, 1, 0], [], []>} : vector<7x16xf32>, vector<7x16xf32>, vector<7x7xf32> -> vector<7x7xf32>
    %cst_259 = arith.constant 2.500000e-01 : f32
    %494 = vector.broadcast %cst_259 : f32 to vector<7x7xf32>
    %495 = arith.mulf %493, %494 : vector<7x7xf32>
    %496 = arith.addf %495, %252 : vector<7x7xf32>
    %cst_260 = arith.constant dense<0xFF800000> : vector<7xf32>
    %497 = vector.multi_reduction <maximumf>, %496, %cst_260 [1] : vector<7x7xf32> to vector<7xf32>
    %498 = vector.shape_cast %497 : vector<7xf32> to vector<7x1xf32>
    %499 = vector.broadcast %498 : vector<7x1xf32> to vector<7x7xf32>
    %500 = arith.subf %496, %499 : vector<7x7xf32>
    %501 = math.exp %500 : vector<7x7xf32>
    %cst_261 = arith.constant dense<0.000000e+00> : vector<7xf32>
    %502 = vector.multi_reduction <add>, %501, %cst_261 [1] : vector<7x7xf32> to vector<7xf32>
    %503 = vector.shape_cast %502 : vector<7xf32> to vector<7x1xf32>
    %504 = tpu.reciprocal %503 {approx = true} : vector<7x1xf32> -> vector<7x1xf32>
    %505 = vector.broadcast %504 : vector<7x1xf32> to vector<7x7xf32>
    %506 = arith.mulf %501, %505 : vector<7x7xf32>
    %cst_262 = arith.constant dense<0.000000e+00> : vector<7x16xf32>
    %507 = tpu.matmul %506, %492, %cst_262 {dimension_numbers = #tpu.dot_dimension_numbers<[1], [0], [0], [1], [0, 0, 1, 1], [], []>} : vector<7x7xf32>, vector<7x16xf32>, vector<7x16xf32> -> vector<7x16xf32>
    %508 = vector.extract_strided_slice %487 {offsets = [0, 16], sizes = [7, 16], strides = [1, 1]} : vector<7x32xf32> to vector<7x16xf32>
    %509 = vector.extract_strided_slice %488 {offsets = [0, 16], sizes = [7, 16], strides = [1, 1]} : vector<7x32xf32> to vector<7x16xf32>
    %510 = vector.extract_strided_slice %489 {offsets = [0, 16], sizes = [7, 16], strides = [1, 1]} : vector<7x32xf32> to vector<7x16xf32>
    %cst_263 = arith.constant dense<0.000000e+00> : vector<7x7xf32>
    %511 = tpu.matmul %508, %509, %cst_263 {dimension_numbers = #tpu.dot_dimension_numbers<[1], [1], [0], [0], [0, 0, 1, 0], [], []>} : vector<7x16xf32>, vector<7x16xf32>, vector<7x7xf32> -> vector<7x7xf32>
    %cst_264 = arith.constant 2.500000e-01 : f32
    %512 = vector.broadcast %cst_264 : f32 to vector<7x7xf32>
    %513 = arith.mulf %511, %512 : vector<7x7xf32>
    %514 = arith.addf %513, %252 : vector<7x7xf32>
    %cst_265 = arith.constant dense<0xFF800000> : vector<7xf32>
    %515 = vector.multi_reduction <maximumf>, %514, %cst_265 [1] : vector<7x7xf32> to vector<7xf32>
    %516 = vector.shape_cast %515 : vector<7xf32> to vector<7x1xf32>
    %517 = vector.broadcast %516 : vector<7x1xf32> to vector<7x7xf32>
    %518 = arith.subf %514, %517 : vector<7x7xf32>
    %519 = math.exp %518 : vector<7x7xf32>
    %cst_266 = arith.constant dense<0.000000e+00> : vector<7xf32>
    %520 = vector.multi_reduction <add>, %519, %cst_266 [1] : vector<7x7xf32> to vector<7xf32>
    %521 = vector.shape_cast %520 : vector<7xf32> to vector<7x1xf32>
    %522 = tpu.reciprocal %521 {approx = true} : vector<7x1xf32> -> vector<7x1xf32>
    %523 = vector.broadcast %522 : vector<7x1xf32> to vector<7x7xf32>
    %524 = arith.mulf %519, %523 : vector<7x7xf32>
    %cst_267 = arith.constant dense<0.000000e+00> : vector<7x16xf32>
    %525 = tpu.matmul %524, %510, %cst_267 {dimension_numbers = #tpu.dot_dimension_numbers<[1], [0], [0], [1], [0, 0, 1, 1], [], []>} : vector<7x7xf32>, vector<7x16xf32>, vector<7x16xf32> -> vector<7x16xf32>
    %526 = tpu.concatenate %507, %525 in 1 : vector<7x16xf32>, vector<7x16xf32> -> vector<7x32xf32>
    %cst_268 = arith.constant dense<0.000000e+00> : vector<7x32xf32>
    %527 = tpu.matmul %526, %477, %cst_268 {dimension_numbers = #tpu.dot_dimension_numbers<[1], [0], [0], [1], [0, 0, 1, 1], [], []>} : vector<7x32xf32>, vector<32x32xf32>, vector<7x32xf32> -> vector<7x32xf32>
    %528 = vector.broadcast %479 : vector<1x32xf32> to vector<7x32xf32>
    %529 = arith.addf %527, %528 : vector<7x32xf32>
    %530 = arith.addf %529, %471 : vector<7x32xf32>
    %cst_269 = arith.constant dense<0.000000e+00> : vector<7xf32>
    %531 = vector.multi_reduction <add>, %530, %cst_269 [1] : vector<7x32xf32> to vector<7xf32>
    %532 = vector.shape_cast %531 : vector<7xf32> to vector<7x1xf32>
    %cst_270 = arith.constant 3.200000e+01 : f32
    %533 = vector.broadcast %cst_270 : f32 to vector<7x1xf32>
    %534 = arith.divf %532, %533 : vector<7x1xf32>
    %535 = vector.broadcast %534 : vector<7x1xf32> to vector<7x32xf32>
    %536 = arith.subf %530, %535 : vector<7x32xf32>
    %537 = arith.mulf %536, %536 : vector<7x32xf32>
    %cst_271 = arith.constant dense<0.000000e+00> : vector<7xf32>
    %538 = vector.multi_reduction <add>, %537, %cst_271 [1] : vector<7x32xf32> to vector<7xf32>
    %539 = vector.shape_cast %538 : vector<7xf32> to vector<7x1xf32>
    %cst_272 = arith.constant 3.200000e+01 : f32
    %540 = vector.broadcast %cst_272 : f32 to vector<7x1xf32>
    %541 = arith.divf %539, %540 : vector<7x1xf32>
    %542 = vector.broadcast %534 : vector<7x1xf32> to vector<7x32xf32>
    %543 = arith.subf %530, %542 : vector<7x32xf32>
    %cst_273 = arith.constant 9.99999974E-6 : f32
    %544 = vector.broadcast %cst_273 : f32 to vector<7x1xf32>
    %545 = arith.addf %541, %544 : vector<7x1xf32>
    %546 = math.rsqrt %545 : vector<7x1xf32>
    %547 = vector.broadcast %546 : vector<7x1xf32> to vector<7x32xf32>
    %548 = arith.mulf %543, %547 : vector<7x32xf32>
    %549 = vector.broadcast %481 : vector<1x32xf32> to vector<7x32xf32>
    %550 = arith.mulf %548, %549 : vector<7x32xf32>
    %551 = vector.broadcast %483 : vector<1x32xf32> to vector<7x32xf32>
    %552 = arith.addf %550, %551 : vector<7x32xf32>
    %553 = vector.broadcast %254 : vector<7x1xf32> to vector<7x32xf32>
    %554 = arith.mulf %552, %553 : vector<7x32xf32>
    %c1_274 = arith.constant 1 : index
    %c0_275 = arith.constant 0 : index
    %c0_276 = arith.constant 0 : index
    %555 = vector.load %arg25[%c1_274, %c0_275, %c0_276] : memref<2x32x32xf32, #tpu.memory_space<vmem>>, vector<1x32x32xf32>
    %556 = vector.shape_cast %555 : vector<1x32x32xf32> to vector<32x32xf32>
    %c1_277 = arith.constant 1 : index
    %c0_278 = arith.constant 0 : index
    %c0_279 = arith.constant 0 : index
    %557 = vector.load %arg26[%c1_277, %c0_278, %c0_279] : memref<2x1x32xf32, #tpu.memory_space<vmem>>, vector<1x1x32xf32>
    %558 = vector.shape_cast %557 : vector<1x1x32xf32> to vector<1x32xf32>
    %c1_280 = arith.constant 1 : index
    %c0_281 = arith.constant 0 : index
    %c0_282 = arith.constant 0 : index
    %559 = vector.load %arg27[%c1_280, %c0_281, %c0_282] : memref<2x32x64xf32, #tpu.memory_space<vmem>>, vector<1x32x64xf32>
    %560 = vector.shape_cast %559 : vector<1x32x64xf32> to vector<32x64xf32>
    %c1_283 = arith.constant 1 : index
    %c0_284 = arith.constant 0 : index
    %c0_285 = arith.constant 0 : index
    %561 = vector.load %arg28[%c1_283, %c0_284, %c0_285] : memref<2x1x64xf32, #tpu.memory_space<vmem>>, vector<1x1x64xf32>
    %562 = vector.shape_cast %561 : vector<1x1x64xf32> to vector<1x64xf32>
    %c1_286 = arith.constant 1 : index
    %c0_287 = arith.constant 0 : index
    %c0_288 = arith.constant 0 : index
    %563 = vector.load %arg29[%c1_286, %c0_287, %c0_288] : memref<2x32x32xf32, #tpu.memory_space<vmem>>, vector<1x32x32xf32>
    %564 = vector.shape_cast %563 : vector<1x32x32xf32> to vector<32x32xf32>
    %c1_289 = arith.constant 1 : index
    %c0_290 = arith.constant 0 : index
    %c0_291 = arith.constant 0 : index
    %565 = vector.load %arg30[%c1_289, %c0_290, %c0_291] : memref<2x1x32xf32, #tpu.memory_space<vmem>>, vector<1x1x32xf32>
    %566 = vector.shape_cast %565 : vector<1x1x32xf32> to vector<1x32xf32>
    %c1_292 = arith.constant 1 : index
    %c0_293 = arith.constant 0 : index
    %c0_294 = arith.constant 0 : index
    %567 = vector.load %arg31[%c1_292, %c0_293, %c0_294] : memref<2x1x32xf32, #tpu.memory_space<vmem>>, vector<1x1x32xf32>
    %568 = vector.shape_cast %567 : vector<1x1x32xf32> to vector<1x32xf32>
    %c1_295 = arith.constant 1 : index
    %c0_296 = arith.constant 0 : index
    %c0_297 = arith.constant 0 : index
    %569 = vector.load %arg32[%c1_295, %c0_296, %c0_297] : memref<2x1x32xf32, #tpu.memory_space<vmem>>, vector<1x1x32xf32>
    %570 = vector.shape_cast %569 : vector<1x1x32xf32> to vector<1x32xf32>
    %cst_298 = arith.constant dense<0.000000e+00> : vector<7x32xf32>
    %571 = tpu.matmul %554, %556, %cst_298 {dimension_numbers = #tpu.dot_dimension_numbers<[1], [0], [0], [1], [0, 0, 1, 1], [], []>} : vector<7x32xf32>, vector<32x32xf32>, vector<7x32xf32> -> vector<7x32xf32>
    %572 = vector.broadcast %558 : vector<1x32xf32> to vector<7x32xf32>
    %573 = arith.addf %571, %572 : vector<7x32xf32>
    %cst_299 = arith.constant dense<0.000000e+00> : vector<8x64xf32>
    %574 = tpu.matmul %250, %560, %cst_299 {dimension_numbers = #tpu.dot_dimension_numbers<[1], [0], [0], [1], [0, 0, 1, 1], [], []>} : vector<8x32xf32>, vector<32x64xf32>, vector<8x64xf32> -> vector<8x64xf32>
    %575 = vector.broadcast %562 : vector<1x64xf32> to vector<8x64xf32>
    %576 = arith.addf %574, %575 : vector<8x64xf32>
    %577 = vector.extract_strided_slice %576 {offsets = [0, 0], sizes = [8, 32], strides = [1, 1]} : vector<8x64xf32> to vector<8x32xf32>
    %578 = vector.extract_strided_slice %576 {offsets = [0, 32], sizes = [8, 32], strides = [1, 1]} : vector<8x64xf32> to vector<8x32xf32>
    %579 = vector.extract_strided_slice %573 {offsets = [0, 0], sizes = [7, 16], strides = [1, 1]} : vector<7x32xf32> to vector<7x16xf32>
    %580 = vector.extract_strided_slice %577 {offsets = [0, 0], sizes = [8, 16], strides = [1, 1]} : vector<8x32xf32> to vector<8x16xf32>
    %581 = vector.extract_strided_slice %578 {offsets = [0, 0], sizes = [8, 16], strides = [1, 1]} : vector<8x32xf32> to vector<8x16xf32>
    %cst_300 = arith.constant dense<0.000000e+00> : vector<7x8xf32>
    %582 = tpu.matmul %579, %580, %cst_300 {dimension_numbers = #tpu.dot_dimension_numbers<[1], [1], [0], [0], [0, 0, 1, 0], [], []>} : vector<7x16xf32>, vector<8x16xf32>, vector<7x8xf32> -> vector<7x8xf32>
    %cst_301 = arith.constant 2.500000e-01 : f32
    %583 = vector.broadcast %cst_301 : f32 to vector<7x8xf32>
    %584 = arith.mulf %582, %583 : vector<7x8xf32>
    %cst_302 = arith.constant dense<0xFF800000> : vector<7xf32>
    %585 = vector.multi_reduction <maximumf>, %584, %cst_302 [1] : vector<7x8xf32> to vector<7xf32>
    %586 = vector.shape_cast %585 : vector<7xf32> to vector<7x1xf32>
    %587 = vector.broadcast %586 : vector<7x1xf32> to vector<7x8xf32>
    %588 = arith.subf %584, %587 : vector<7x8xf32>
    %589 = math.exp %588 : vector<7x8xf32>
    %cst_303 = arith.constant dense<0.000000e+00> : vector<7xf32>
    %590 = vector.multi_reduction <add>, %589, %cst_303 [1] : vector<7x8xf32> to vector<7xf32>
    %591 = vector.shape_cast %590 : vector<7xf32> to vector<7x1xf32>
    %592 = tpu.reciprocal %591 {approx = true} : vector<7x1xf32> -> vector<7x1xf32>
    %593 = vector.broadcast %592 : vector<7x1xf32> to vector<7x8xf32>
    %594 = arith.mulf %589, %593 : vector<7x8xf32>
    %cst_304 = arith.constant dense<0.000000e+00> : vector<7x16xf32>
    %595 = tpu.matmul %594, %581, %cst_304 {dimension_numbers = #tpu.dot_dimension_numbers<[1], [0], [0], [1], [0, 0, 1, 1], [], []>} : vector<7x8xf32>, vector<8x16xf32>, vector<7x16xf32> -> vector<7x16xf32>
    %596 = vector.extract_strided_slice %573 {offsets = [0, 16], sizes = [7, 16], strides = [1, 1]} : vector<7x32xf32> to vector<7x16xf32>
    %597 = vector.extract_strided_slice %577 {offsets = [0, 16], sizes = [8, 16], strides = [1, 1]} : vector<8x32xf32> to vector<8x16xf32>
    %598 = vector.extract_strided_slice %578 {offsets = [0, 16], sizes = [8, 16], strides = [1, 1]} : vector<8x32xf32> to vector<8x16xf32>
    %cst_305 = arith.constant dense<0.000000e+00> : vector<7x8xf32>
    %599 = tpu.matmul %596, %597, %cst_305 {dimension_numbers = #tpu.dot_dimension_numbers<[1], [1], [0], [0], [0, 0, 1, 0], [], []>} : vector<7x16xf32>, vector<8x16xf32>, vector<7x8xf32> -> vector<7x8xf32>
    %cst_306 = arith.constant 2.500000e-01 : f32
    %600 = vector.broadcast %cst_306 : f32 to vector<7x8xf32>
    %601 = arith.mulf %599, %600 : vector<7x8xf32>
    %cst_307 = arith.constant dense<0xFF800000> : vector<7xf32>
    %602 = vector.multi_reduction <maximumf>, %601, %cst_307 [1] : vector<7x8xf32> to vector<7xf32>
    %603 = vector.shape_cast %602 : vector<7xf32> to vector<7x1xf32>
    %604 = vector.broadcast %603 : vector<7x1xf32> to vector<7x8xf32>
    %605 = arith.subf %601, %604 : vector<7x8xf32>
    %606 = math.exp %605 : vector<7x8xf32>
    %cst_308 = arith.constant dense<0.000000e+00> : vector<7xf32>
    %607 = vector.multi_reduction <add>, %606, %cst_308 [1] : vector<7x8xf32> to vector<7xf32>
    %608 = vector.shape_cast %607 : vector<7xf32> to vector<7x1xf32>
    %609 = tpu.reciprocal %608 {approx = true} : vector<7x1xf32> -> vector<7x1xf32>
    %610 = vector.broadcast %609 : vector<7x1xf32> to vector<7x8xf32>
    %611 = arith.mulf %606, %610 : vector<7x8xf32>
    %cst_309 = arith.constant dense<0.000000e+00> : vector<7x16xf32>
    %612 = tpu.matmul %611, %598, %cst_309 {dimension_numbers = #tpu.dot_dimension_numbers<[1], [0], [0], [1], [0, 0, 1, 1], [], []>} : vector<7x8xf32>, vector<8x16xf32>, vector<7x16xf32> -> vector<7x16xf32>
    %613 = tpu.concatenate %595, %612 in 1 : vector<7x16xf32>, vector<7x16xf32> -> vector<7x32xf32>
    %cst_310 = arith.constant dense<0.000000e+00> : vector<7x32xf32>
    %614 = tpu.matmul %613, %564, %cst_310 {dimension_numbers = #tpu.dot_dimension_numbers<[1], [0], [0], [1], [0, 0, 1, 1], [], []>} : vector<7x32xf32>, vector<32x32xf32>, vector<7x32xf32> -> vector<7x32xf32>
    %615 = vector.broadcast %566 : vector<1x32xf32> to vector<7x32xf32>
    %616 = arith.addf %614, %615 : vector<7x32xf32>
    %617 = arith.addf %616, %554 : vector<7x32xf32>
    %cst_311 = arith.constant dense<0.000000e+00> : vector<7xf32>
    %618 = vector.multi_reduction <add>, %617, %cst_311 [1] : vector<7x32xf32> to vector<7xf32>
    %619 = vector.shape_cast %618 : vector<7xf32> to vector<7x1xf32>
    %cst_312 = arith.constant 3.200000e+01 : f32
    %620 = vector.broadcast %cst_312 : f32 to vector<7x1xf32>
    %621 = arith.divf %619, %620 : vector<7x1xf32>
    %622 = vector.broadcast %621 : vector<7x1xf32> to vector<7x32xf32>
    %623 = arith.subf %617, %622 : vector<7x32xf32>
    %624 = arith.mulf %623, %623 : vector<7x32xf32>
    %cst_313 = arith.constant dense<0.000000e+00> : vector<7xf32>
    %625 = vector.multi_reduction <add>, %624, %cst_313 [1] : vector<7x32xf32> to vector<7xf32>
    %626 = vector.shape_cast %625 : vector<7xf32> to vector<7x1xf32>
    %cst_314 = arith.constant 3.200000e+01 : f32
    %627 = vector.broadcast %cst_314 : f32 to vector<7x1xf32>
    %628 = arith.divf %626, %627 : vector<7x1xf32>
    %629 = vector.broadcast %621 : vector<7x1xf32> to vector<7x32xf32>
    %630 = arith.subf %617, %629 : vector<7x32xf32>
    %cst_315 = arith.constant 9.99999974E-6 : f32
    %631 = vector.broadcast %cst_315 : f32 to vector<7x1xf32>
    %632 = arith.addf %628, %631 : vector<7x1xf32>
    %633 = math.rsqrt %632 : vector<7x1xf32>
    %634 = vector.broadcast %633 : vector<7x1xf32> to vector<7x32xf32>
    %635 = arith.mulf %630, %634 : vector<7x32xf32>
    %636 = vector.broadcast %568 : vector<1x32xf32> to vector<7x32xf32>
    %637 = arith.mulf %635, %636 : vector<7x32xf32>
    %638 = vector.broadcast %570 : vector<1x32xf32> to vector<7x32xf32>
    %639 = arith.addf %637, %638 : vector<7x32xf32>
    %640 = vector.broadcast %254 : vector<7x1xf32> to vector<7x32xf32>
    %641 = arith.mulf %639, %640 : vector<7x32xf32>
    %c1_316 = arith.constant 1 : index
    %c0_317 = arith.constant 0 : index
    %c0_318 = arith.constant 0 : index
    %642 = vector.load %arg33[%c1_316, %c0_317, %c0_318] : memref<2x32x64xf32, #tpu.memory_space<vmem>>, vector<1x32x64xf32>
    %643 = vector.shape_cast %642 : vector<1x32x64xf32> to vector<32x64xf32>
    %c1_319 = arith.constant 1 : index
    %c0_320 = arith.constant 0 : index
    %c0_321 = arith.constant 0 : index
    %644 = vector.load %arg34[%c1_319, %c0_320, %c0_321] : memref<2x1x64xf32, #tpu.memory_space<vmem>>, vector<1x1x64xf32>
    %645 = vector.shape_cast %644 : vector<1x1x64xf32> to vector<1x64xf32>
    %c1_322 = arith.constant 1 : index
    %c0_323 = arith.constant 0 : index
    %c0_324 = arith.constant 0 : index
    %646 = vector.load %arg35[%c1_322, %c0_323, %c0_324] : memref<2x64x32xf32, #tpu.memory_space<vmem>>, vector<1x64x32xf32>
    %647 = vector.shape_cast %646 : vector<1x64x32xf32> to vector<64x32xf32>
    %c1_325 = arith.constant 1 : index
    %c0_326 = arith.constant 0 : index
    %c0_327 = arith.constant 0 : index
    %648 = vector.load %arg36[%c1_325, %c0_326, %c0_327] : memref<2x1x32xf32, #tpu.memory_space<vmem>>, vector<1x1x32xf32>
    %649 = vector.shape_cast %648 : vector<1x1x32xf32> to vector<1x32xf32>
    %c1_328 = arith.constant 1 : index
    %c0_329 = arith.constant 0 : index
    %c0_330 = arith.constant 0 : index
    %650 = vector.load %arg37[%c1_328, %c0_329, %c0_330] : memref<2x1x32xf32, #tpu.memory_space<vmem>>, vector<1x1x32xf32>
    %651 = vector.shape_cast %650 : vector<1x1x32xf32> to vector<1x32xf32>
    %c1_331 = arith.constant 1 : index
    %c0_332 = arith.constant 0 : index
    %c0_333 = arith.constant 0 : index
    %652 = vector.load %arg38[%c1_331, %c0_332, %c0_333] : memref<2x1x32xf32, #tpu.memory_space<vmem>>, vector<1x1x32xf32>
    %653 = vector.shape_cast %652 : vector<1x1x32xf32> to vector<1x32xf32>
    %cst_334 = arith.constant dense<0.000000e+00> : vector<7x64xf32>
    %654 = tpu.matmul %641, %643, %cst_334 {dimension_numbers = #tpu.dot_dimension_numbers<[1], [0], [0], [1], [0, 0, 1, 1], [], []>} : vector<7x32xf32>, vector<32x64xf32>, vector<7x64xf32> -> vector<7x64xf32>
    %655 = vector.broadcast %645 : vector<1x64xf32> to vector<7x64xf32>
    %656 = arith.addf %654, %655 : vector<7x64xf32>
    %cst_335 = arith.constant 0.000000e+00 : f32
    %657 = vector.broadcast %cst_335 : f32 to vector<7x64xf32>
    %658 = arith.maximumf %656, %657 : vector<7x64xf32>
    %cst_336 = arith.constant dense<0.000000e+00> : vector<7x32xf32>
    %659 = tpu.matmul %658, %647, %cst_336 {dimension_numbers = #tpu.dot_dimension_numbers<[1], [0], [0], [1], [0, 0, 1, 1], [], []>} : vector<7x64xf32>, vector<64x32xf32>, vector<7x32xf32> -> vector<7x32xf32>
    %660 = vector.broadcast %649 : vector<1x32xf32> to vector<7x32xf32>
    %661 = arith.addf %659, %660 : vector<7x32xf32>
    %662 = arith.addf %661, %641 : vector<7x32xf32>
    %cst_337 = arith.constant dense<0.000000e+00> : vector<7xf32>
    %663 = vector.multi_reduction <add>, %662, %cst_337 [1] : vector<7x32xf32> to vector<7xf32>
    %664 = vector.shape_cast %663 : vector<7xf32> to vector<7x1xf32>
    %cst_338 = arith.constant 3.200000e+01 : f32
    %665 = vector.broadcast %cst_338 : f32 to vector<7x1xf32>
    %666 = arith.divf %664, %665 : vector<7x1xf32>
    %667 = vector.broadcast %666 : vector<7x1xf32> to vector<7x32xf32>
    %668 = arith.subf %662, %667 : vector<7x32xf32>
    %669 = arith.mulf %668, %668 : vector<7x32xf32>
    %cst_339 = arith.constant dense<0.000000e+00> : vector<7xf32>
    %670 = vector.multi_reduction <add>, %669, %cst_339 [1] : vector<7x32xf32> to vector<7xf32>
    %671 = vector.shape_cast %670 : vector<7xf32> to vector<7x1xf32>
    %cst_340 = arith.constant 3.200000e+01 : f32
    %672 = vector.broadcast %cst_340 : f32 to vector<7x1xf32>
    %673 = arith.divf %671, %672 : vector<7x1xf32>
    %674 = vector.broadcast %666 : vector<7x1xf32> to vector<7x32xf32>
    %675 = arith.subf %662, %674 : vector<7x32xf32>
    %cst_341 = arith.constant 9.99999974E-6 : f32
    %676 = vector.broadcast %cst_341 : f32 to vector<7x1xf32>
    %677 = arith.addf %673, %676 : vector<7x1xf32>
    %678 = math.rsqrt %677 : vector<7x1xf32>
    %679 = vector.broadcast %678 : vector<7x1xf32> to vector<7x32xf32>
    %680 = arith.mulf %675, %679 : vector<7x32xf32>
    %681 = vector.broadcast %651 : vector<1x32xf32> to vector<7x32xf32>
    %682 = arith.mulf %680, %681 : vector<7x32xf32>
    %683 = vector.broadcast %653 : vector<1x32xf32> to vector<7x32xf32>
    %684 = arith.addf %682, %683 : vector<7x32xf32>
    %685 = vector.broadcast %254 : vector<7x1xf32> to vector<7x32xf32>
    %686 = arith.mulf %684, %685 : vector<7x32xf32>
    %c0_342 = arith.constant 0 : index
    %c0_343 = arith.constant 0 : index
    %687 = vector.load %arg39[%c0_342, %c0_343] : memref<32x128xf32, #tpu.memory_space<vmem>>, vector<32x128xf32>
    %cst_344 = arith.constant dense<0.000000e+00> : vector<7x128xf32>
    %688 = tpu.matmul %686, %687, %cst_344 {dimension_numbers = #tpu.dot_dimension_numbers<[1], [0], [0], [1], [0, 0, 1, 1], [], []>} : vector<7x32xf32>, vector<32x128xf32>, vector<7x128xf32> -> vector<7x128xf32>
    %cst_345 = arith.constant 0.176776692 : f32
    %689 = vector.broadcast %cst_345 : f32 to vector<7x128xf32>
    %690 = arith.mulf %688, %689 : vector<7x128xf32>
    %c0_346 = arith.constant 0 : index
    %c0_347 = arith.constant 0 : index
    %c0_348 = arith.constant 0 : index
    %691 = vector.load %arg40[%c0_346, %c0_347, %c0_348] : memref<1x7x128xf32, #tpu.memory_space<vmem>>, vector<1x7x128xf32>
    %692 = vector.shape_cast %691 : vector<1x7x128xf32> to vector<7x128xf32>
    %693 = vector.shape_cast %690 : vector<7x128xf32> to vector<1x7x128xf32>
    tpu.vector_store %arg40[%c0_346, %c0_347, %c0_348], %693 {strides = array<i32>} : memref<1x7x128xf32, #tpu.memory_space<vmem>>, vector<1x7x128xf32>,
    return
  }
  func.func @transform_0(%arg0: i32) -> (i32, i32, i32) {
    %c0_i32 = arith.constant 0 : i32
    %c0_i32_0 = arith.constant 0 : i32
    %c0_i32_1 = arith.constant 0 : i32
    return %arg0, %c0_i32, %c0_i32_0 : i32, i32, i32
  }
  func.func @transform_1(%arg0: i32) -> (i32, i32, i32) {
    %c0_i32 = arith.constant 0 : i32
    %c0_i32_0 = arith.constant 0 : i32
    %c0_i32_1 = arith.constant 0 : i32
    return %arg0, %c0_i32, %c0_i32_0 : i32, i32, i32
  }
  func.func @transform_2(%arg0: i32) -> (i32, i32, i32) {
    %c0_i32 = arith.constant 0 : i32
    %c0_i32_0 = arith.constant 0 : i32
    %c0_i32_1 = arith.constant 0 : i32
    return %arg0, %c0_i32, %c0_i32_0 : i32, i32, i32
  }
  func.func @transform_3(%arg0: i32) -> (i32, i32, i32) {
    %c0_i32 = arith.constant 0 : i32
    %c0_i32_0 = arith.constant 0 : i32
    %c0_i32_1 = arith.constant 0 : i32
    return %arg0, %c0_i32, %c0_i32_0 : i32, i32, i32
  }
  func.func @transform_4(%arg0: i32) -> (i32, i32) {
    %c0_i32 = arith.constant 0 : i32
    %c0_i32_0 = arith.constant 0 : i32
    %c0_i32_1 = arith.constant 0 : i32
    return %c0_i32, %c0_i32_0 : i32, i32
  }
  func.func @transform_5(%arg0: i32) -> (i32, i32) {
    %c0_i32 = arith.constant 0 : i32
    %c0_i32_0 = arith.constant 0 : i32
    %c0_i32_1 = arith.constant 0 : i32
    return %c0_i32, %c0_i32_0 : i32, i32
  }
  func.func @transform_6(%arg0: i32) -> (i32, i32, i32) {
    %c0_i32 = arith.constant 0 : i32
    %c0_i32_0 = arith.constant 0 : i32
    %c0_i32_1 = arith.constant 0 : i32
    %c0_i32_2 = arith.constant 0 : i32
    return %c0_i32, %c0_i32_0, %c0_i32_1 : i32, i32, i32
  }
  func.func @transform_7(%arg0: i32) -> (i32, i32, i32) {
    %c0_i32 = arith.constant 0 : i32
    %c0_i32_0 = arith.constant 0 : i32
    %c0_i32_1 = arith.constant 0 : i32
    %c0_i32_2 = arith.constant 0 : i32
    return %c0_i32, %c0_i32_0, %c0_i32_1 : i32, i32, i32
  }
  func.func @transform_8(%arg0: i32) -> (i32, i32, i32) {
    %c0_i32 = arith.constant 0 : i32
    %c0_i32_0 = arith.constant 0 : i32
    %c0_i32_1 = arith.constant 0 : i32
    %c0_i32_2 = arith.constant 0 : i32
    return %c0_i32, %c0_i32_0, %c0_i32_1 : i32, i32, i32
  }
  func.func @transform_9(%arg0: i32) -> (i32, i32, i32) {
    %c0_i32 = arith.constant 0 : i32
    %c0_i32_0 = arith.constant 0 : i32
    %c0_i32_1 = arith.constant 0 : i32
    %c0_i32_2 = arith.constant 0 : i32
    return %c0_i32, %c0_i32_0, %c0_i32_1 : i32, i32, i32
  }
  func.func @transform_10(%arg0: i32) -> (i32, i32, i32) {
    %c0_i32 = arith.constant 0 : i32
    %c0_i32_0 = arith.constant 0 : i32
    %c0_i32_1 = arith.constant 0 : i32
    %c0_i32_2 = arith.constant 0 : i32
    return %c0_i32, %c0_i32_0, %c0_i32_1 : i32, i32, i32
  }
  func.func @transform_11(%arg0: i32) -> (i32, i32, i32) {
    %c0_i32 = arith.constant 0 : i32
    %c0_i32_0 = arith.constant 0 : i32
    %c0_i32_1 = arith.constant 0 : i32
    %c0_i32_2 = arith.constant 0 : i32
    return %c0_i32, %c0_i32_0, %c0_i32_1 : i32, i32, i32
  }
  func.func @transform_12(%arg0: i32) -> (i32, i32, i32) {
    %c0_i32 = arith.constant 0 : i32
    %c0_i32_0 = arith.constant 0 : i32
    %c0_i32_1 = arith.constant 0 : i32
    %c0_i32_2 = arith.constant 0 : i32
    return %c0_i32, %c0_i32_0, %c0_i32_1 : i32, i32, i32
  }
  func.func @transform_13(%arg0: i32) -> (i32, i32, i32) {
    %c0_i32 = arith.constant 0 : i32
    %c0_i32_0 = arith.constant 0 : i32
    %c0_i32_1 = arith.constant 0 : i32
    %c0_i32_2 = arith.constant 0 : i32
    return %c0_i32, %c0_i32_0, %c0_i32_1 : i32, i32, i32
  }
  func.func @transform_14(%arg0: i32) -> (i32, i32, i32) {
    %c0_i32 = arith.constant 0 : i32
    %c0_i32_0 = arith.constant 0 : i32
    %c0_i32_1 = arith.constant 0 : i32
    %c0_i32_2 = arith.constant 0 : i32
    return %c0_i32, %c0_i32_0, %c0_i32_1 : i32, i32, i32
  }
  func.func @transform_15(%arg0: i32) -> (i32, i32, i32) {
    %c0_i32 = arith.constant 0 : i32
    %c0_i32_0 = arith.constant 0 : i32
    %c0_i32_1 = arith.constant 0 : i32
    %c0_i32_2 = arith.constant 0 : i32
    return %c0_i32, %c0_i32_0, %c0_i32_1 : i32, i32, i32
  }
  func.func @transform_16(%arg0: i32) -> (i32, i32, i32) {
    %c0_i32 = arith.constant 0 : i32
    %c0_i32_0 = arith.constant 0 : i32
    %c0_i32_1 = arith.constant 0 : i32
    %c0_i32_2 = arith.constant 0 : i32
    return %c0_i32, %c0_i32_0, %c0_i32_1 : i32, i32, i32
  }
  func.func @transform_17(%arg0: i32) -> (i32, i32, i32) {
    %c0_i32 = arith.constant 0 : i32
    %c0_i32_0 = arith.constant 0 : i32
    %c0_i32_1 = arith.constant 0 : i32
    %c0_i32_2 = arith.constant 0 : i32
    return %c0_i32, %c0_i32_0, %c0_i32_1 : i32, i32, i32
  }
  func.func @transform_18(%arg0: i32) -> (i32, i32, i32) {
    %c0_i32 = arith.constant 0 : i32
    %c0_i32_0 = arith.constant 0 : i32
    %c0_i32_1 = arith.constant 0 : i32
    %c0_i32_2 = arith.constant 0 : i32
    return %c0_i32, %c0_i32_0, %c0_i32_1 : i32, i32, i32
  }
  func.func @transform_19(%arg0: i32) -> (i32, i32, i32) {
    %c0_i32 = arith.constant 0 : i32
    %c0_i32_0 = arith.constant 0 : i32
    %c0_i32_1 = arith.constant 0 : i32
    %c0_i32_2 = arith.constant 0 : i32
    return %c0_i32, %c0_i32_0, %c0_i32_1 : i32, i32, i32
  }
  func.func @transform_20(%arg0: i32) -> (i32, i32, i32) {
    %c0_i32 = arith.constant 0 : i32
    %c0_i32_0 = arith.constant 0 : i32
    %c0_i32_1 = arith.constant 0 : i32
    %c0_i32_2 = arith.constant 0 : i32
    return %c0_i32, %c0_i32_0, %c0_i32_1 : i32, i32, i32
  }
  func.func @transform_21(%arg0: i32) -> (i32, i32, i32) {
    %c0_i32 = arith.constant 0 : i32
    %c0_i32_0 = arith.constant 0 : i32
    %c0_i32_1 = arith.constant 0 : i32
    %c0_i32_2 = arith.constant 0 : i32
    return %c0_i32, %c0_i32_0, %c0_i32_1 : i32, i32, i32
  }
  func.func @transform_22(%arg0: i32) -> (i32, i32, i32) {
    %c0_i32 = arith.constant 0 : i32
    %c0_i32_0 = arith.constant 0 : i32
    %c0_i32_1 = arith.constant 0 : i32
    %c0_i32_2 = arith.constant 0 : i32
    return %c0_i32, %c0_i32_0, %c0_i32_1 : i32, i32, i32
  }
  func.func @transform_23(%arg0: i32) -> (i32, i32, i32) {
    %c0_i32 = arith.constant 0 : i32
    %c0_i32_0 = arith.constant 0 : i32
    %c0_i32_1 = arith.constant 0 : i32
    %c0_i32_2 = arith.constant 0 : i32
    return %c0_i32, %c0_i32_0, %c0_i32_1 : i32, i32, i32
  }
  func.func @transform_24(%arg0: i32) -> (i32, i32, i32) {
    %c0_i32 = arith.constant 0 : i32
    %c0_i32_0 = arith.constant 0 : i32
    %c0_i32_1 = arith.constant 0 : i32
    %c0_i32_2 = arith.constant 0 : i32
    return %c0_i32, %c0_i32_0, %c0_i32_1 : i32, i32, i32
  }
  func.func @transform_25(%arg0: i32) -> (i32, i32, i32) {
    %c0_i32 = arith.constant 0 : i32
    %c0_i32_0 = arith.constant 0 : i32
    %c0_i32_1 = arith.constant 0 : i32
    %c0_i32_2 = arith.constant 0 : i32
    return %c0_i32, %c0_i32_0, %c0_i32_1 : i32, i32, i32
  }
  func.func @transform_26(%arg0: i32) -> (i32, i32, i32) {
    %c0_i32 = arith.constant 0 : i32
    %c0_i32_0 = arith.constant 0 : i32
    %c0_i32_1 = arith.constant 0 : i32
    %c0_i32_2 = arith.constant 0 : i32
    return %c0_i32, %c0_i32_0, %c0_i32_1 : i32, i32, i32
  }
  func.func @transform_27(%arg0: i32) -> (i32, i32, i32) {
    %c0_i32 = arith.constant 0 : i32
    %c0_i32_0 = arith.constant 0 : i32
    %c0_i32_1 = arith.constant 0 : i32
    %c0_i32_2 = arith.constant 0 : i32
    return %c0_i32, %c0_i32_0, %c0_i32_1 : i32, i32, i32
  }
  func.func @transform_28(%arg0: i32) -> (i32, i32, i32) {
    %c0_i32 = arith.constant 0 : i32
    %c0_i32_0 = arith.constant 0 : i32
    %c0_i32_1 = arith.constant 0 : i32
    %c0_i32_2 = arith.constant 0 : i32
    return %c0_i32, %c0_i32_0, %c0_i32_1 : i32, i32, i32
  }
  func.func @transform_29(%arg0: i32) -> (i32, i32, i32) {
    %c0_i32 = arith.constant 0 : i32
    %c0_i32_0 = arith.constant 0 : i32
    %c0_i32_1 = arith.constant 0 : i32
    %c0_i32_2 = arith.constant 0 : i32
    return %c0_i32, %c0_i32_0, %c0_i32_1 : i32, i32, i32
  }
  func.func @transform_30(%arg0: i32) -> (i32, i32, i32) {
    %c0_i32 = arith.constant 0 : i32
    %c0_i32_0 = arith.constant 0 : i32
    %c0_i32_1 = arith.constant 0 : i32
    %c0_i32_2 = arith.constant 0 : i32
    return %c0_i32, %c0_i32_0, %c0_i32_1 : i32, i32, i32
  }
  func.func @transform_31(%arg0: i32) -> (i32, i32, i32) {
    %c0_i32 = arith.constant 0 : i32
    %c0_i32_0 = arith.constant 0 : i32
    %c0_i32_1 = arith.constant 0 : i32
    %c0_i32_2 = arith.constant 0 : i32
    return %c0_i32, %c0_i32_0, %c0_i32_1 : i32, i32, i32
  }
  func.func @transform_32(%arg0: i32) -> (i32, i32, i32) {
    %c0_i32 = arith.constant 0 : i32
    %c0_i32_0 = arith.constant 0 : i32
    %c0_i32_1 = arith.constant 0 : i32
    %c0_i32_2 = arith.constant 0 : i32
    return %c0_i32, %c0_i32_0, %c0_i32_1 : i32, i32, i32
  }
  func.func @transform_33(%arg0: i32) -> (i32, i32, i32) {
    %c0_i32 = arith.constant 0 : i32
    %c0_i32_0 = arith.constant 0 : i32
    %c0_i32_1 = arith.constant 0 : i32
    %c0_i32_2 = arith.constant 0 : i32
    return %c0_i32, %c0_i32_0, %c0_i32_1 : i32, i32, i32
  }
  func.func @transform_34(%arg0: i32) -> (i32, i32, i32) {
    %c0_i32 = arith.constant 0 : i32
    %c0_i32_0 = arith.constant 0 : i32
    %c0_i32_1 = arith.constant 0 : i32
    %c0_i32_2 = arith.constant 0 : i32
    return %c0_i32, %c0_i32_0, %c0_i32_1 : i32, i32, i32
  }
  func.func @transform_35(%arg0: i32) -> (i32, i32, i32) {
    %c0_i32 = arith.constant 0 : i32
    %c0_i32_0 = arith.constant 0 : i32
    %c0_i32_1 = arith.constant 0 : i32
    %c0_i32_2 = arith.constant 0 : i32
    return %c0_i32, %c0_i32_0, %c0_i32_1 : i32, i32, i32
  }
  func.func @transform_36(%arg0: i32) -> (i32, i32, i32) {
    %c0_i32 = arith.constant 0 : i32
    %c0_i32_0 = arith.constant 0 : i32
    %c0_i32_1 = arith.constant 0 : i32
    %c0_i32_2 = arith.constant 0 : i32
    return %c0_i32, %c0_i32_0, %c0_i32_1 : i32, i32, i32
  }
  func.func @transform_37(%arg0: i32) -> (i32, i32, i32) {
    %c0_i32 = arith.constant 0 : i32
    %c0_i32_0 = arith.constant 0 : i32
    %c0_i32_1 = arith.constant 0 : i32
    %c0_i32_2 = arith.constant 0 : i32
    return %c0_i32, %c0_i32_0, %c0_i32_1 : i32, i32, i32
  }
  func.func @transform_38(%arg0: i32) -> (i32, i32) {
    %c0_i32 = arith.constant 0 : i32
    %c0_i32_0 = arith.constant 0 : i32
    %c0_i32_1 = arith.constant 0 : i32
    return %c0_i32, %c0_i32_0 : i32, i32
  }
  func.func @transform_39(%arg0: i32) -> (i32, i32, i32) {
    %c0_i32 = arith.constant 0 : i32
    %c0_i32_0 = arith.constant 0 : i32
    %c0_i32_1 = arith.constant 0 : i32
    return %arg0, %c0_i32, %c0_i32_0 : i32, i32, i32
  }
}

</mosaic_0001>

<llo_original>
// kernel: fwd.1
$region0: #{fwd.1}
  #allocation0 [shape = 'u32[]', space=smem, size = 0x4, offset = 0x4, fixed_abs, tag = 'smem constant byte address 0x4 - core index']
  #allocation1 [shape = 'u32[72,128]{1,0:T(1,128)}', space=vmem, size = 0x9000, scoped, tag = 'internal scratch']
  %s0 = inlined_call_operand.smem [shape: u32[40], index: -1, kind: input, shape index: {}]
  %s1 = sld [smem:[%s0]]
  %s2 = scalar_lea.smem %s0, 1
  %s3 = sld [smem:[%s2]]
  %s4 = scalar_lea.smem %s0, 2
  %s5 = sld [smem:[%s4]]
  %s6 = scalar_lea.smem %s0, 3
  %s7 = sld [smem:[%s6]]
  %s8 = scalar_lea.smem %s0, 4
  %s9 = sld [smem:[%s8]]
  %s10 = scalar_lea.smem %s0, 5
  %s11 = sld [smem:[%s10]]
  %s12 = scalar_lea.smem %s0, 6
  %s13 = sld [smem:[%s12]]
  %s14 = scalar_lea.smem %s0, 7
  %s15 = sld [smem:[%s14]]
  %s16 = scalar_lea.smem %s0, 8
  %s17 = sld [smem:[%s16]]
  %s18 = scalar_lea.smem %s0, 9
  %s19 = sld [smem:[%s18]]
  %s20 = scalar_lea.smem %s0, 10
  %s21 = sld [smem:[%s20]]
  %s22 = scalar_lea.smem %s0, 11
  %s23 = sld [smem:[%s22]]
  %s24 = scalar_lea.smem %s0, 12
  %s25 = sld [smem:[%s24]]
  %s26 = scalar_lea.smem %s0, 13
  %s27 = sld [smem:[%s26]]
  %s28 = scalar_lea.smem %s0, 14
  %s29 = sld [smem:[%s28]]
  %s30 = scalar_lea.smem %s0, 15
  %s31 = sld [smem:[%s30]]
  %s32 = scalar_lea.smem %s0, 16
  %s33 = sld [smem:[%s32]]
  %s34 = scalar_lea.smem %s0, 17
  %s35 = sld [smem:[%s34]]
  %s36 = scalar_lea.smem %s0, 18
  %s37 = sld [smem:[%s36]]
  %s38 = scalar_lea.smem %s0, 19
  %s39 = sld [smem:[%s38]]
  %s40 = scalar_lea.smem %s0, 20
  %s41 = sld [smem:[%s40]]
  %s42 = scalar_lea.smem %s0, 21
  %s43 = sld [smem:[%s42]]
  %s44 = scalar_lea.smem %s0, 22
  %s45 = sld [smem:[%s44]]
  %s46 = scalar_lea.smem %s0, 23
  %s47 = sld [smem:[%s46]]
  %s48 = scalar_lea.smem %s0, 24
  %s49 = sld [smem:[%s48]]
  %s50 = scalar_lea.smem %s0, 25
  %s51 = sld [smem:[%s50]]
  %s52 = scalar_lea.smem %s0, 26
  %s53 = sld [smem:[%s52]]
  %s54 = scalar_lea.smem %s0, 27
  %s55 = sld [smem:[%s54]]
  %s56 = scalar_lea.smem %s0, 28
  %s57 = sld [smem:[%s56]]
  %s58 = scalar_lea.smem %s0, 29
  %s59 = sld [smem:[%s58]]
  %s60 = scalar_lea.smem %s0, 30
  %s61 = sld [smem:[%s60]]
  %s62 = scalar_lea.smem %s0, 31
  %s63 = sld [smem:[%s62]]
  %s64 = scalar_lea.smem %s0, 32
  %s65 = sld [smem:[%s64]]
  %s66 = scalar_lea.smem %s0, 33
  %s67 = sld [smem:[%s66]]
  %s68 = scalar_lea.smem %s0, 34
  %s69 = sld [smem:[%s68]]
  %s70 = scalar_lea.smem %s0, 35
  %s71 = sld [smem:[%s70]]
  %s72 = scalar_lea.smem %s0, 36
  %s73 = sld [smem:[%s72]]
  %s74 = scalar_lea.smem %s0, 37
  %s75 = sld [smem:[%s74]]
  %s76 = scalar_lea.smem %s0, 38
  %s77 = sld [smem:[%s76]]
  %s78 = scalar_lea.smem %s0, 39
  %s79 = sld [smem:[%s78]]
  %s80 = sld [smem:[#allocation0]]
  $region189: #{fwd.1} parent=0
    _
  %s82 = ssub.s32 1, %s80
  %s83 = scalar_select 0, %s82, %s80
  loop: start=0, step=1, limit=4
  $region2: #{fwd.1} parent=0 // loop_pre_header
    _
  $region3: #{fwd.1} parent=0 // loop_header
    %s85 = sphi 0, %s89
    %p86 = scmp.ge.s32.totalorder %s85, 4
    %s95 = sphi 0, %s97
    %s98 = sphi 0, %s95
    %s99 = sphi 0, %s98
    %s115 = sphi 0, %s99
    %s121 = sphi 0, %s123
    %s124 = sphi 0, %s121
    %s125 = sphi 0, %s124
    %s141 = sphi 0, %s125
    %s147 = sphi 0, %s149
    %s150 = sphi 0, %s147
    %s151 = sphi 0, %s150
    %s167 = sphi 0, %s151
    %s173 = sphi 0, %s175
    %s176 = sphi 0, %s173
    %s177 = sphi 0, %s176
    %s193 = sphi 0, %s177
    %s197 = sphi 0, %s197
    %s199 = sphi 0, %s197
    %s200 = sphi 0, %s199
    %s214 = sphi 0, %s200
    %s218 = sphi 0, %s218
    %s220 = sphi 0, %s218
    %s221 = sphi 0, %s220
    %s235 = sphi 0, %s221
    %s239 = sphi 0, %s239
    %s241 = sphi 0, %s239
    %s242 = sphi 0, %s241
    %s256 = sphi 0, %s242
    %s260 = sphi 0, %s260
    %s262 = sphi 0, %s260
    %s263 = sphi 0, %s262
    %s277 = sphi 0, %s263
    %s281 = sphi 0, %s281
    %s283 = sphi 0, %s281
    %s284 = sphi 0, %s283
    %s298 = sphi 0, %s284
    %s302 = sphi 0, %s302
    %s304 = sphi 0, %s302
    %s305 = sphi 0, %s304
    %s319 = sphi 0, %s305
    %s323 = sphi 0, %s323
    %s325 = sphi 0, %s323
    %s326 = sphi 0, %s325
    %s340 = sphi 0, %s326
    %s344 = sphi 0, %s344
    %s346 = sphi 0, %s344
    %s347 = sphi 0, %s346
    %s361 = sphi 0, %s347
    %s365 = sphi 0, %s365
    %s367 = sphi 0, %s365
    %s368 = sphi 0, %s367
    %s382 = sphi 0, %s368
    %s386 = sphi 0, %s386
    %s388 = sphi 0, %s386
    %s389 = sphi 0, %s388
    %s403 = sphi 0, %s389
    %s407 = sphi 0, %s407
    %s409 = sphi 0, %s407
    %s410 = sphi 0, %s409
    %s424 = sphi 0, %s410
    %s428 = sphi 0, %s428
    %s430 = sphi 0, %s428
    %s431 = sphi 0, %s430
    %s445 = sphi 0, %s431
    %s449 = sphi 0, %s449
    %s451 = sphi 0, %s449
    %s452 = sphi 0, %s451
    %s466 = sphi 0, %s452
    %s470 = sphi 0, %s470
    %s472 = sphi 0, %s470
    %s473 = sphi 0, %s472
    %s487 = sphi 0, %s473
    %s491 = sphi 0, %s491
    %s493 = sphi 0, %s491
    %s494 = sphi 0, %s493
    %s508 = sphi 0, %s494
    %s512 = sphi 0, %s512
    %s514 = sphi 0, %s512
    %s515 = sphi 0, %s514
    %s529 = sphi 0, %s515
    %s533 = sphi 0, %s533
    %s535 = sphi 0, %s533
    %s536 = sphi 0, %s535
    %s550 = sphi 0, %s536
    %s554 = sphi 0, %s554
    %s556 = sphi 0, %s554
    %s557 = sphi 0, %s556
    %s571 = sphi 0, %s557
    %s575 = sphi 0, %s575
    %s577 = sphi 0, %s575
    %s578 = sphi 0, %s577
    %s592 = sphi 0, %s578
    %s596 = sphi 0, %s596
    %s598 = sphi 0, %s596
    %s599 = sphi 0, %s598
    %s613 = sphi 0, %s599
    %s617 = sphi 0, %s617
    %s619 = sphi 0, %s617
    %s620 = sphi 0, %s619
    %s634 = sphi 0, %s620
    %s638 = sphi 0, %s638
    %s640 = sphi 0, %s638
    %s641 = sphi 0, %s640
    %s655 = sphi 0, %s641
    %s659 = sphi 0, %s659
    %s661 = sphi 0, %s659
    %s662 = sphi 0, %s661
    %s676 = sphi 0, %s662
    %s680 = sphi 0, %s680
    %s682 = sphi 0, %s680
    %s683 = sphi 0, %s682
    %s697 = sphi 0, %s683
    %s701 = sphi 0, %s701
    %s703 = sphi 0, %s701
    %s704 = sphi 0, %s703
    %s718 = sphi 0, %s704
    %s722 = sphi 0, %s722
    %s724 = sphi 0, %s722
    %s725 = sphi 0, %s724
    %s739 = sphi 0, %s725
    %s743 = sphi 0, %s743
    %s745 = sphi 0, %s743
    %s746 = sphi 0, %s745
    %s760 = sphi 0, %s746
    %s764 = sphi 0, %s764
    %s766 = sphi 0, %s764
    %s767 = sphi 0, %s766
    %s781 = sphi 0, %s767
    %s785 = sphi 0, %s785
    %s787 = sphi 0, %s785
    %s788 = sphi 0, %s787
    %s802 = sphi 0, %s788
    %s806 = sphi 0, %s806
    %s808 = sphi 0, %s806
    %s809 = sphi 0, %s808
    %s823 = sphi 0, %s809
    %s827 = sphi 0, %s827
    %s829 = sphi 0, %s827
    %s830 = sphi 0, %s829
    %s844 = sphi 0, %s830
    %s848 = sphi 0, %s848
    %s850 = sphi 0, %s848
    %s851 = sphi 0, %s850
    %s865 = sphi 0, %s851
    %s869 = sphi 0, %s869
    %s871 = sphi 0, %s869
    %s872 = sphi 0, %s871
    %s886 = sphi 0, %s872
    %s890 = sphi 0, %s890
    %s892 = sphi 0, %s890
    %s893 = sphi 0, %s892
    %s907 = sphi 0, %s893
    %s911 = sphi 0, %s911
    %s913 = sphi 0, %s911
    %s914 = sphi 0, %s913
    %s928 = sphi 0, %s914
    %s934 = sphi 0, %s936
    %s937 = sphi 0, %s934
    %s938 = sphi 0, %s937
    %s954 = sphi 0, %s938
  $region4: #{fwd.1} parent=0 // loop_header_branch
    %88 = sbr.rel (%p86) target = $region8
  $region5: #{fwd.1} parent=0 // loop_body
    %s90 = ssub.s32 %s85, 1
    %s91 = ssub.s32 %s85, 2
    %s92 = sadd.s32 %s85, 1
    %s93 = ssub.s32 %s85, %s92
    %p94 = scmp.eq.s32.totalorder %s93, 0
    %s96 = sadd.s32 %s95, 1
    %s97 = scalar_select %p94, %s95, %s96
    %p100 = pneg %p94
    %p101 = scmp.eq.s32.totalorder %s85, 1
    %p102 = por %p100, %p101
    %p103 = scmp.ne.s32.totalorder %s95, %s98
    %p104 = scmp.eq.s32.totalorder %s85, 0
    %p105 = por %p103, %p104
    %p106 = scmp.ne.s32.totalorder %s95, %s98
    %p107 = scmp.eq.s32.totalorder %s90, 1
    %p108 = por %p106, %p107
    %p109 = scmp.ne.s32.totalorder %s98, %s99
    %p110 = scmp.eq.s32.totalorder %s90, 0
    %p111 = por %p109, %p110
    %p112 = scmp.ne.s32.totalorder %s98, %s99
    %p113 = scmp.eq.s32.totalorder %s91, 1
    %p114 = por %p112, %p113
    %p116 = scmp.ne.s32.totalorder %s99, %s115
    %p117 = scmp.eq.s32.totalorder %s91, 0
    %p118 = por %p116, %p117
    %s119 = ssub.s32 %s85, %s92
    %p120 = scmp.eq.s32.totalorder %s119, 0
    %s122 = sadd.s32 %s121, 1
    %s123 = scalar_select %p120, %s121, %s122
    %p126 = pneg %p120
    %p127 = scmp.eq.s32.totalorder %s85, 1
    %p128 = por %p126, %p127
    %p129 = scmp.ne.s32.totalorder %s121, %s124
    %p130 = scmp.eq.s32.totalorder %s85, 0
    %p131 = por %p129, %p130
    %p132 = scmp.ne.s32.totalorder %s121, %s124
    %p133 = scmp.eq.s32.totalorder %s90, 1
    %p134 = por %p132, %p133
    %p135 = scmp.ne.s32.totalorder %s124, %s125
    %p136 = scmp.eq.s32.totalorder %s90, 0
    %p137 = por %p135, %p136
    %p138 = scmp.ne.s32.totalorder %s124, %s125
    %p139 = scmp.eq.s32.totalorder %s91, 1
    %p140 = por %p138, %p139
    %p142 = scmp.ne.s32.totalorder %s125, %s141
    %p143 = scmp.eq.s32.totalorder %s91, 0
    %p144 = por %p142, %p143
    %s145 = ssub.s32 %s85, %s92
    %p146 = scmp.eq.s32.totalorder %s145, 0
    %s148 = sadd.s32 %s147, 1
    %s149 = scalar_select %p146, %s147, %s148
    %p152 = pneg %p146
    %p153 = scmp.eq.s32.totalorder %s85, 1
    %p154 = por %p152, %p153
    %p155 = scmp.ne.s32.totalorder %s147, %s150
    %p156 = scmp.eq.s32.totalorder %s85, 0
    %p157 = por %p155, %p156
    %p158 = scmp.ne.s32.totalorder %s147, %s150
    %p159 = scmp.eq.s32.totalorder %s90, 1
    %p160 = por %p158, %p159
    %p161 = scmp.ne.s32.totalorder %s150, %s151
    %p162 = scmp.eq.s32.totalorder %s90, 0
    %p163 = por %p161, %p162
    %p164 = scmp.ne.s32.totalorder %s150, %s151
    %p165 = scmp.eq.s32.totalorder %s91, 1
    %p166 = por %p164, %p165
    %p168 = scmp.ne.s32.totalorder %s151, %s167
    %p169 = scmp.eq.s32.totalorder %s91, 0
    %p170 = por %p168, %p169
    %s171 = ssub.s32 %s85, %s92
    %p172 = scmp.eq.s32.totalorder %s171, 0
    %s174 = sadd.s32 %s173, 1
    %s175 = scalar_select %p172, %s173, %s174
    %p178 = pneg %p172
    %p179 = scmp.eq.s32.totalorder %s85, 1
    %p180 = por %p178, %p179
    %p181 = scmp.ne.s32.totalorder %s173, %s176
    %p182 = scmp.eq.s32.totalorder %s85, 0
    %p183 = por %p181, %p182
    %p184 = scmp.ne.s32.totalorder %s173, %s176
    %p185 = scmp.eq.s32.totalorder %s90, 1
    %p186 = por %p184, %p185
    %p187 = scmp.ne.s32.totalorder %s176, %s177
    %p188 = scmp.eq.s32.totalorder %s90, 0
    %p189 = por %p187, %p188
    %p190 = scmp.ne.s32.totalorder %s176, %s177
    %p191 = scmp.eq.s32.totalorder %s91, 1
    %p192 = por %p190, %p191
    %p194 = scmp.ne.s32.totalorder %s177, %s193
    %p195 = scmp.eq.s32.totalorder %s91, 0
    %p196 = por %p194, %p195
    %s198 = sadd.s32 %s197, 1
    %p201 = scmp.eq.s32.totalorder %s85, 1
    %p202 = scmp.ne.s32.totalorder %s197, %s199
    %p203 = scmp.eq.s32.totalorder %s85, 0
    %p204 = por %p202, %p203
    %p205 = scmp.ne.s32.totalorder %s197, %s199
    %p206 = scmp.eq.s32.totalorder %s90, 1
    %p207 = por %p205, %p206
    %p208 = scmp.ne.s32.totalorder %s199, %s200
    %p209 = scmp.eq.s32.totalorder %s90, 0
    %p210 = por %p208, %p209
    %p211 = scmp.ne.s32.totalorder %s199, %s200
    %p212 = scmp.eq.s32.totalorder %s91, 1
    %p213 = por %p211, %p212
    %p215 = scmp.ne.s32.totalorder %s200, %s214
    %p216 = scmp.eq.s32.totalorder %s91, 0
    %p217 = por %p215, %p216
    %s219 = sadd.s32 %s218, 1
    %p222 = scmp.eq.s32.totalorder %s85, 1
    %p223 = scmp.ne.s32.totalorder %s218, %s220
    %p224 = scmp.eq.s32.totalorder %s85, 0
    %p225 = por %p223, %p224
    %p226 = scmp.ne.s32.totalorder %s218, %s220
    %p227 = scmp.eq.s32.totalorder %s90, 1
    %p228 = por %p226, %p227
    %p229 = scmp.ne.s32.totalorder %s220, %s221
    %p230 = scmp.eq.s32.totalorder %s90, 0
    %p231 = por %p229, %p230
    %p232 = scmp.ne.s32.totalorder %s220, %s221
    %p233 = scmp.eq.s32.totalorder %s91, 1
    %p234 = por %p232, %p233
    %p236 = scmp.ne.s32.totalorder %s221, %s235
    %p237 = scmp.eq.s32.totalorder %s91, 0
    %p238 = por %p236, %p237
    %s240 = sadd.s32 %s239, 1
    %p243 = scmp.eq.s32.totalorder %s85, 1
    %p244 = scmp.ne.s32.totalorder %s239, %s241
    %p245 = scmp.eq.s32.totalorder %s85, 0
    %p246 = por %p244, %p245
    %p247 = scmp.ne.s32.totalorder %s239, %s241
    %p248 = scmp.eq.s32.totalorder %s90, 1
    %p249 = por %p247, %p248
    %p250 = scmp.ne.s32.totalorder %s241, %s242
    %p251 = scmp.eq.s32.totalorder %s90, 0
    %p252 = por %p250, %p251
    %p253 = scmp.ne.s32.totalorder %s241, %s242
    %p254 = scmp.eq.s32.totalorder %s91, 1
    %p255 = por %p253, %p254
    %p257 = scmp.ne.s32.totalorder %s242, %s256
    %p258 = scmp.eq.s32.totalorder %s91, 0
    %p259 = por %p257, %p258
    %s261 = sadd.s32 %s260, 1
    %p264 = scmp.eq.s32.totalorder %s85, 1
    %p265 = scmp.ne.s32.totalorder %s260, %s262
    %p266 = scmp.eq.s32.totalorder %s85, 0
    %p267 = por %p265, %p266
    %p268 = scmp.ne.s32.totalorder %s260, %s262
    %p269 = scmp.eq.s32.totalorder %s90, 1
    %p270 = por %p268, %p269
    %p271 = scmp.ne.s32.totalorder %s262, %s263
    %p272 = scmp.eq.s32.totalorder %s90, 0
    %p273 = por %p271, %p272
    %p274 = scmp.ne.s32.totalorder %s262, %s263
    %p275 = scmp.eq.s32.totalorder %s91, 1
    %p276 = por %p274, %p275
    %p278 = scmp.ne.s32.totalorder %s263, %s277
    %p279 = scmp.eq.s32.totalorder %s91, 0
    %p280 = por %p278, %p279
    %s282 = sadd.s32 %s281, 1
    %p285 = scmp.eq.s32.totalorder %s85, 1
    %p286 = scmp.ne.s32.totalorder %s281, %s283
    %p287 = scmp.eq.s32.totalorder %s85, 0
    %p288 = por %p286, %p287
    %p289 = scmp.ne.s32.totalorder %s281, %s283
    %p290 = scmp.eq.s32.totalorder %s90, 1
    %p291 = por %p289, %p290
    %p292 = scmp.ne.s32.totalorder %s283, %s284
    %p293 = scmp.eq.s32.totalorder %s90, 0
    %p294 = por %p292, %p293
    %p295 = scmp.ne.s32.totalorder %s283, %s284
    %p296 = scmp.eq.s32.totalorder %s91, 1
    %p297 = por %p295, %p296
    %p299 = scmp.ne.s32.totalorder %s284, %s298
    %p300 = scmp.eq.s32.totalorder %s91, 0
    %p301 = por %p299, %p300
    %s303 = sadd.s32 %s302, 1
    %p306 = scmp.eq.s32.totalorder %s85, 1
    %p307 = scmp.ne.s32.totalorder %s302, %s304
    %p308 = scmp.eq.s32.totalorder %s85, 0
    %p309 = por %p307, %p308
    %p310 = scmp.ne.s32.totalorder %s302, %s304
    %p311 = scmp.eq.s32.totalorder %s90, 1
    %p312 = por %p310, %p311
    %p313 = scmp.ne.s32.totalorder %s304, %s305
    %p314 = scmp.eq.s32.totalorder %s90, 0
    %p315 = por %p313, %p314
    %p316 = scmp.ne.s32.totalorder %s304, %s305
    %p317 = scmp.eq.s32.totalorder %s91, 1
    %p318 = por %p316, %p317
    %p320 = scmp.ne.s32.totalorder %s305, %s319
    %p321 = scmp.eq.s32.totalorder %s91, 0
    %p322 = por %p320, %p321
    %s324 = sadd.s32 %s323, 1
    %p327 = scmp.eq.s32.totalorder %s85, 1
    %p328 = scmp.ne.s32.totalorder %s323, %s325
    %p329 = scmp.eq.s32.totalorder %s85, 0
    %p330 = por %p328, %p329
    %p331 = scmp.ne.s32.totalorder %s323, %s325
    %p332 = scmp.eq.s32.totalorder %s90, 1
    %p333 = por %p331, %p332
    %p334 = scmp.ne.s32.totalorder %s325, %s326
    %p335 = scmp.eq.s32.totalorder %s90, 0
    %p336 = por %p334, %p335
    %p337 = scmp.ne.s32.totalorder %s325, %s326
    %p338 = scmp.eq.s32.totalorder %s91, 1
    %p339 = por %p337, %p338
    %p341 = scmp.ne.s32.totalorder %s326, %s340
    %p342 = scmp.eq.s32.totalorder %s91, 0
    %p343 = por %p341, %p342
    %s345 = sadd.s32 %s344, 1
    %p348 = scmp.eq.s32.totalorder %s85, 1
    %p349 = scmp.ne.s32.totalorder %s344, %s346
    %p350 = scmp.eq.s32.totalorder %s85, 0
    %p351 = por %p349, %p350
    %p352 = scmp.ne.s32.totalorder %s344, %s346
    %p353 = scmp.eq.s32.totalorder %s90, 1
    %p354 = por %p352, %p353
    %p355 = scmp.ne.s32.totalorder %s346, %s347
    %p356 = scmp.eq.s32.totalorder %s90, 0
    %p357 = por %p355, %p356
    %p358 = scmp.ne.s32.totalorder %s346, %s347
    %p359 = scmp.eq.s32.totalorder %s91, 1
    %p360 = por %p358, %p359
    %p362 = scmp.ne.s32.totalorder %s347, %s361
    %p363 = scmp.eq.s32.totalorder %s91, 0
    %p364 = por %p362, %p363
    %s366 = sadd.s32 %s365, 1
    %p369 = scmp.eq.s32.totalorder %s85, 1
    %p370 = scmp.ne.s32.totalorder %s365, %s367
    %p371 = scmp.eq.s32.totalorder %s85, 0
    %p372 = por %p370, %p371
    %p373 = scmp.ne.s32.totalorder %s365, %s367
    %p374 = scmp.eq.s32.totalorder %s90, 1
    %p375 = por %p373, %p374
    %p376 = scmp.ne.s32.totalorder %s367, %s368
    %p377 = scmp.eq.s32.totalorder %s90, 0
    %p378 = por %p376, %p377
    %p379 = scmp.ne.s32.totalorder %s367, %s368
    %p380 = scmp.eq.s32.totalorder %s91, 1
    %p381 = por %p379, %p380
    %p383 = scmp.ne.s32.totalorder %s368, %s382
    %p384 = scmp.eq.s32.totalorder %s91, 0
    %p385 = por %p383, %p384
    %s387 = sadd.s32 %s386, 1
    %p390 = scmp.eq.s32.totalorder %s85, 1
    %p391 = scmp.ne.s32.totalorder %s386, %s388
    %p392 = scmp.eq.s32.totalorder %s85, 0
    %p393 = por %p391, %p392
    %p394 = scmp.ne.s32.totalorder %s386, %s388
    %p395 = scmp.eq.s32.totalorder %s90, 1
    %p396 = por %p394, %p395
    %p397 = scmp.ne.s32.totalorder %s388, %s389
    %p398 = scmp.eq.s32.totalorder %s90, 0
    %p399 = por %p397, %p398
    %p400 = scmp.ne.s32.totalorder %s388, %s389
    %p401 = scmp.eq.s32.totalorder %s91, 1
    %p402 = por %p400, %p401
    %p404 = scmp.ne.s32.totalorder %s389, %s403
    %p405 = scmp.eq.s32.totalorder %s91, 0
    %p406 = por %p404, %p405
    %s408 = sadd.s32 %s407, 1
    %p411 = scmp.eq.s32.totalorder %s85, 1
    %p412 = scmp.ne.s32.totalorder %s407, %s409
    %p413 = scmp.eq.s32.totalorder %s85, 0
    %p414 = por %p412, %p413
    %p415 = scmp.ne.s32.totalorder %s407, %s409
    %p416 = scmp.eq.s32.totalorder %s90, 1
    %p417 = por %p415, %p416
    %p418 = scmp.ne.s32.totalorder %s409, %s410
    %p419 = scmp.eq.s32.totalorder %s90, 0
    %p420 = por %p418, %p419
    %p421 = scmp.ne.s32.totalorder %s409, %s410
    %p422 = scmp.eq.s32.totalorder %s91, 1
    %p423 = por %p421, %p422
    %p425 = scmp.ne.s32.totalorder %s410, %s424
    %p426 = scmp.eq.s32.totalorder %s91, 0
    %p427 = por %p425, %p426
    %s429 = sadd.s32 %s428, 1
    %p432 = scmp.eq.s32.totalorder %s85, 1
    %p433 = scmp.ne.s32.totalorder %s428, %s430
    %p434 = scmp.eq.s32.totalorder %s85, 0
    %p435 = por %p433, %p434
    %p436 = scmp.ne.s32.totalorder %s428, %s430
    %p437 = scmp.eq.s32.totalorder %s90, 1
    %p438 = por %p436, %p437
    %p439 = scmp.ne.s32.totalorder %s430, %s431
    %p440 = scmp.eq.s32.totalorder %s90, 0
    %p441 = por %p439, %p440
    %p442 = scmp.ne.s32.totalorder %s430, %s431
    %p443 = scmp.eq.s32.totalorder %s91, 1
    %p444 = por %p442, %p443
    %p446 = scmp.ne.s32.totalorder %s431, %s445
    %p447 = scmp.eq.s32.totalorder %s91, 0
    %p448 = por %p446, %p447
    %s450 = sadd.s32 %s449, 1
    %p453 = scmp.eq.s32.totalorder %s85, 1
    %p454 = scmp.ne.s32.totalorder %s449, %s451
    %p455 = scmp.eq.s32.totalorder %s85, 0
    %p456 = por %p454, %p455
    %p457 = scmp.ne.s32.totalorder %s449, %s451
    %p458 = scmp.eq.s32.totalorder %s90, 1
    %p459 = por %p457, %p458
    %p460 = scmp.ne.s32.totalorder %s451, %s452
    %p461 = scmp.eq.s32.totalorder %s90, 0
    %p462 = por %p460, %p461
    %p463 = scmp.ne.s32.totalorder %s451, %s452
    %p464 = scmp.eq.s32.totalorder %s91, 1
    %p465 = por %p463, %p464
    %p467 = scmp.ne.s32.totalorder %s452, %s466
    %p468 = scmp.eq.s32.totalorder %s91, 0
    %p469 = por %p467, %p468
    %s471 = sadd.s32 %s470, 1
    %p474 = scmp.eq.s32.totalorder %s85, 1
    %p475 = scmp.ne.s32.totalorder %s470, %s472
    %p476 = scmp.eq.s32.totalorder %s85, 0
    %p477 = por %p475, %p476
    %p478 = scmp.ne.s32.totalorder %s470, %s472
    %p479 = scmp.eq.s32.totalorder %s90, 1
    %p480 = por %p478, %p479
    %p481 = scmp.ne.s32.totalorder %s472, %s473
    %p482 = scmp.eq.s32.totalorder %s90, 0
    %p483 = por %p481, %p482
    %p484 = scmp.ne.s32.totalorder %s472, %s473
    %p485 = scmp.eq.s32.totalorder %s91, 1
    %p486 = por %p484, %p485
    %p488 = scmp.ne.s32.totalorder %s473, %s487
    %p489 = scmp.eq.s32.totalorder %s91, 0
    %p490 = por %p488, %p489
    %s492 = sadd.s32 %s491, 1
    %p495 = scmp.eq.s32.totalorder %s85, 1
    %p496 = scmp.ne.s32.totalorder %s491, %s493
    %p497 = scmp.eq.s32.totalorder %s85, 0
    %p498 = por %p496, %p497
    %p499 = scmp.ne.s32.totalorder %s491, %s493
    %p500 = scmp.eq.s32.totalorder %s90, 1
    %p501 = por %p499, %p500
    %p502 = scmp.ne.s32.totalorder %s493, %s494
    %p503 = scmp.eq.s32.totalorder %s90, 0
    %p504 = por %p502, %p503
    %p505 = scmp.ne.s32.totalorder %s493, %s494
    %p506 = scmp.eq.s32.totalorder %s91, 1
    %p507 = por %p505, %p506
    %p509 = scmp.ne.s32.totalorder %s494, %s508
    %p510 = scmp.eq.s32.totalorder %s91, 0
    %p511 = por %p509, %p510
    %s513 = sadd.s32 %s512, 1
    %p516 = scmp.eq.s32.totalorder %s85, 1
    %p517 = scmp.ne.s32.totalorder %s512, %s514
    %p518 = scmp.eq.s32.totalorder %s85, 0
    %p519 = por %p517, %p518
    %p520 = scmp.ne.s32.totalorder %s512, %s514
    %p521 = scmp.eq.s32.totalorder %s90, 1
    %p522 = por %p520, %p521
    %p523 = scmp.ne.s32.totalorder %s514, %s515
    %p524 = scmp.eq.s32.totalorder %s90, 0
    %p525 = por %p523, %p524
    %p526 = scmp.ne.s32.totalorder %s514, %s515
    %p527 = scmp.eq.s32.totalorder %s91, 1
    %p528 = por %p526, %p527
    %p530 = scmp.ne.s32.totalorder %s515, %s529
    %p531 = scmp.eq.s32.totalorder %s91, 0
    %p532 = por %p530, %p531
    %s534 = sadd.s32 %s533, 1
    %p537 = scmp.eq.s32.totalorder %s85, 1
    %p538 = scmp.ne.s32.totalorder %s533, %s535
    %p539 = scmp.eq.s32.totalorder %s85, 0
    %p540 = por %p538, %p539
    %p541 = scmp.ne.s32.totalorder %s533, %s535
    %p542 = scmp.eq.s32.totalorder %s90, 1
    %p543 = por %p541, %p542
    %p544 = scmp.ne.s32.totalorder %s535, %s536
    %p545 = scmp.eq.s32.totalorder %s90, 0
    %p546 = por %p544, %p545
    %p547 = scmp.ne.s32.totalorder %s535, %s536
    %p548 = scmp.eq.s32.totalorder %s91, 1
    %p549 = por %p547, %p548
    %p551 = scmp.ne.s32.totalorder %s536, %s550
    %p552 = scmp.eq.s32.totalorder %s91, 0
    %p553 = por %p551, %p552
    %s555 = sadd.s32 %s554, 1
    %p558 = scmp.eq.s32.totalorder %s85, 1
    %p559 = scmp.ne.s32.totalorder %s554, %s556
    %p560 = scmp.eq.s32.totalorder %s85, 0
    %p561 = por %p559, %p560
    %p562 = scmp.ne.s32.totalorder %s554, %s556
    %p563 = scmp.eq.s32.totalorder %s90, 1
    %p564 = por %p562, %p563
    %p565 = scmp.ne.s32.totalorder %s556, %s557
    %p566 = scmp.eq.s32.totalorder %s90, 0
    %p567 = por %p565, %p566
    %p568 = scmp.ne.s32.totalorder %s556, %s557
    %p569 = scmp.eq.s32.totalorder %s91, 1
    %p570 = por %p568, %p569
    %p572 = scmp.ne.s32.totalorder %s557, %s571
    %p573 = scmp.eq.s32.totalorder %s91, 0
    %p574 = por %p572, %p573
    %s576 = sadd.s32 %s575, 1
    %p579 = scmp.eq.s32.totalorder %s85, 1
    %p580 = scmp.ne.s32.totalorder %s575, %s577
    %p581 = scmp.eq.s32.totalorder %s85, 0
    %p582 = por %p580, %p581
    %p583 = scmp.ne.s32.totalorder %s575, %s577
    %p584 = scmp.eq.s32.totalorder %s90, 1
    %p585 = por %p583, %p584
    %p586 = scmp.ne.s32.totalorder %s577, %s578
    %p587 = scmp.eq.s32.totalorder %s90, 0
    %p588 = por %p586, %p587
    %p589 = scmp.ne.s32.totalorder %s577, %s578
    %p590 = scmp.eq.s32.totalorder %s91, 1
    %p591 = por %p589, %p590
    %p593 = scmp.ne.s32.totalorder %s578, %s592
    %p594 = scmp.eq.s32.totalorder %s91, 0
    %p595 = por %p593, %p594
    %s597 = sadd.s32 %s596, 1
    %p600 = scmp.eq.s32.totalorder %s85, 1
    %p601 = scmp.ne.s32.totalorder %s596, %s598
    %p602 = scmp.eq.s32.totalorder %s85, 0
    %p603 = por %p601, %p602
    %p604 = scmp.ne.s32.totalorder %s596, %s598
    %p605 = scmp.eq.s32.totalorder %s90, 1
    %p606 = por %p604, %p605
    %p607 = scmp.ne.s32.totalorder %s598, %s599
    %p608 = scmp.eq.s32.totalorder %s90, 0
    %p609 = por %p607, %p608
    %p610 = scmp.ne.s32.totalorder %s598, %s599
    %p611 = scmp.eq.s32.totalorder %s91, 1
    %p612 = por %p610, %p611
    %p614 = scmp.ne.s32.totalorder %s599, %s613
    %p615 = scmp.eq.s32.totalorder %s91, 0
    %p616 = por %p614, %p615
    %s618 = sadd.s32 %s617, 1
    %p621 = scmp.eq.s32.totalorder %s85, 1
    %p622 = scmp.ne.s32.totalorder %s617, %s619
    %p623 = scmp.eq.s32.totalorder %s85, 0
    %p624 = por %p622, %p623
    %p625 = scmp.ne.s32.totalorder %s617, %s619
    %p626 = scmp.eq.s32.totalorder %s90, 1
    %p627 = por %p625, %p626
    %p628 = scmp.ne.s32.totalorder %s619, %s620
    %p629 = scmp.eq.s32.totalorder %s90, 0
    %p630 = por %p628, %p629
    %p631 = scmp.ne.s32.totalorder %s619, %s620
    %p632 = scmp.eq.s32.totalorder %s91, 1
    %p633 = por %p631, %p632
    %p635 = scmp.ne.s32.totalorder %s620, %s634
    %p636 = scmp.eq.s32.totalorder %s91, 0
    %p637 = por %p635, %p636
    %s639 = sadd.s32 %s638, 1
    %p642 = scmp.eq.s32.totalorder %s85, 1
    %p643 = scmp.ne.s32.totalorder %s638, %s640
    %p644 = scmp.eq.s32.totalorder %s85, 0
    %p645 = por %p643, %p644
    %p646 = scmp.ne.s32.totalorder %s638, %s640
    %p647 = scmp.eq.s32.totalorder %s90, 1
    %p648 = por %p646, %p647
    %p649 = scmp.ne.s32.totalorder %s640, %s641
    %p650 = scmp.eq.s32.totalorder %s90, 0
    %p651 = por %p649, %p650
    %p652 = scmp.ne.s32.totalorder %s640, %s641
    %p653 = scmp.eq.s32.totalorder %s91, 1
    %p654 = por %p652, %p653
    %p656 = scmp.ne.s32.totalorder %s641, %s655
    %p657 = scmp.eq.s32.totalorder %s91, 0
    %p658 = por %p656, %p657
    %s660 = sadd.s32 %s659, 1
    %p663 = scmp.eq.s32.totalorder %s85, 1
    %p664 = scmp.ne.s32.totalorder %s659, %s661
    %p665 = scmp.eq.s32.totalorder %s85, 0
    %p666 = por %p664, %p665
    %p667 = scmp.ne.s32.totalorder %s659, %s661
    %p668 = scmp.eq.s32.totalorder %s90, 1
    %p669 = por %p667, %p668
    %p670 = scmp.ne.s32.totalorder %s661, %s662
    %p671 = scmp.eq.s32.totalorder %s90, 0
    %p672 = por %p670, %p671
    %p673 = scmp.ne.s32.totalorder %s661, %s662
    %p674 = scmp.eq.s32.totalorder %s91, 1
    %p675 = por %p673, %p674
    %p677 = scmp.ne.s32.totalorder %s662, %s676
    %p678 = scmp.eq.s32.totalorder %s91, 0
    %p679 = por %p677, %p678
    %s681 = sadd.s32 %s680, 1
    %p684 = scmp.eq.s32.totalorder %s85, 1
    %p685 = scmp.ne.s32.totalorder %s680, %s682
    %p686 = scmp.eq.s32.totalorder %s85, 0
    %p687 = por %p685, %p686
    %p688 = scmp.ne.s32.totalorder %s680, %s682
    %p689 = scmp.eq.s32.totalorder %s90, 1
    %p690 = por %p688, %p689
    %p691 = scmp.ne.s32.totalorder %s682, %s683
    %p692 = scmp.eq.s32.totalorder %s90, 0
    %p693 = por %p691, %p692
    %p694 = scmp.ne.s32.totalorder %s682, %s683
    %p695 = scmp.eq.s32.totalorder %s91, 1
    %p696 = por %p694, %p695
    %p698 = scmp.ne.s32.totalorder %s683, %s697
    %p699 = scmp.eq.s32.totalorder %s91, 0
    %p700 = por %p698, %p699
    %s702 = sadd.s32 %s701, 1
    %p705 = scmp.eq.s32.totalorder %s85, 1
    %p706 = scmp.ne.s32.totalorder %s701, %s703
    %p707 = scmp.eq.s32.totalorder %s85, 0
    %p708 = por %p706, %p707
    %p709 = scmp.ne.s32.totalorder %s701, %s703
    %p710 = scmp.eq.s32.totalorder %s90, 1
    %p711 = por %p709, %p710
    %p712 = scmp.ne.s32.totalorder %s703, %s704
    %p713 = scmp.eq.s32.totalorder %s90, 0
    %p714 = por %p712, %p713
    %p715 = scmp.ne.s32.totalorder %s703, %s704
    %p716 = scmp.eq.s32.totalorder %s91, 1
    %p717 = por %p715, %p716
    %p719 = scmp.ne.s32.totalorder %s704, %s718
    %p720 = scmp.eq.s32.totalorder %s91, 0
    %p721 = por %p719, %p720
    %s723 = sadd.s32 %s722, 1
    %p726 = scmp.eq.s32.totalorder %s85, 1
    %p727 = scmp.ne.s32.totalorder %s722, %s724
    %p728 = scmp.eq.s32.totalorder %s85, 0
    %p729 = por %p727, %p728
    %p730 = scmp.ne.s32.totalorder %s722, %s724
    %p731 = scmp.eq.s32.totalorder %s90, 1
    %p732 = por %p730, %p731
    %p733 = scmp.ne.s32.totalorder %s724, %s725
    %p734 = scmp.eq.s32.totalorder %s90, 0
    %p735 = por %p733, %p734
    %p736 = scmp.ne.s32.totalorder %s724, %s725
    %p737 = scmp.eq.s32.totalorder %s91, 1
    %p738 = por %p736, %p737
    %p740 = scmp.ne.s32.totalorder %s725, %s739
    %p741 = scmp.eq.s32.totalorder %s91, 0
    %p742 = por %p740, %p741
    %s744 = sadd.s32 %s743, 1
    %p747 = scmp.eq.s32.totalorder %s85, 1
    %p748 = scmp.ne.s32.totalorder %s743, %s745
    %p749 = scmp.eq.s32.totalorder %s85, 0
    %p750 = por %p748, %p749
    %p751 = scmp.ne.s32.totalorder %s743, %s745
    %p752 = scmp.eq.s32.totalorder %s90, 1
    %p753 = por %p751, %p752
    %p754 = scmp.ne.s32.totalorder %s745, %s746
    %p755 = scmp.eq.s32.totalorder %s90, 0
    %p756 = por %p754, %p755
    %p757 = scmp.ne.s32.totalorder %s745, %s746
    %p758 = scmp.eq.s32.totalorder %s91, 1
    %p759 = por %p757, %p758
    %p761 = scmp.ne.s32.totalorder %s746, %s760
    %p762 = scmp.eq.s32.totalorder %s91, 0
    %p763 = por %p761, %p762
    %s765 = sadd.s32 %s764, 1
    %p768 = scmp.eq.s32.totalorder %s85, 1
    %p769 = scmp.ne.s32.totalorder %s764, %s766
    %p770 = scmp.eq.s32.totalorder %s85, 0
    %p771 = por %p769, %p770
    %p772 = scmp.ne.s32.totalorder %s764, %s766
    %p773 = scmp.eq.s32.totalorder %s90, 1
    %p774 = por %p772, %p773
    %p775 = scmp.ne.s32.totalorder %s766, %s767
    %p776 = scmp.eq.s32.totalorder %s90, 0
    %p777 = por %p775, %p776
    %p778 = scmp.ne.s32.totalorder %s766, %s767
    %p779 = scmp.eq.s32.totalorder %s91, 1
    %p780 = por %p778, %p779
    %p782 = scmp.ne.s32.totalorder %s767, %s781
    %p783 = scmp.eq.s32.totalorder %s91, 0
    %p784 = por %p782, %p783
    %s786 = sadd.s32 %s785, 1
    %p789 = scmp.eq.s32.totalorder %s85, 1
    %p790 = scmp.ne.s32.totalorder %s785, %s787
    %p791 = scmp.eq.s32.totalorder %s85, 0
    %p792 = por %p790, %p791
    %p793 = scmp.ne.s32.totalorder %s785, %s787
    %p794 = scmp.eq.s32.totalorder %s90, 1
    %p795 = por %p793, %p794
    %p796 = scmp.ne.s32.totalorder %s787, %s788
    %p797 = scmp.eq.s32.totalorder %s90, 0
    %p798 = por %p796, %p797
    %p799 = scmp.ne.s32.totalorder %s787, %s788
    %p800 = scmp.eq.s32.totalorder %s91, 1
    %p801 = por %p799, %p800
    %p803 = scmp.ne.s32.totalorder %s788, %s802
    %p804 = scmp.eq.s32.totalorder %s91, 0
    %p805 = por %p803, %p804
    %s807 = sadd.s32 %s806, 1
    %p810 = scmp.eq.s32.totalorder %s85, 1
    %p811 = scmp.ne.s32.totalorder %s806, %s808
    %p812 = scmp.eq.s32.totalorder %s85, 0
    %p813 = por %p811, %p812
    %p814 = scmp.ne.s32.totalorder %s806, %s808
    %p815 = scmp.eq.s32.totalorder %s90, 1
    %p816 = por %p814, %p815
    %p817 = scmp.ne.s32.totalorder %s808, %s809
    %p818 = scmp.eq.s32.totalorder %s90, 0
    %p819 = por %p817, %p818
    %p820 = scmp.ne.s32.totalorder %s808, %s809
    %p821 = scmp.eq.s32.totalorder %s91, 1
    %p822 = por %p820, %p821
    %p824 = scmp.ne.s32.totalorder %s809, %s823
    %p825 = scmp.eq.s32.totalorder %s91, 0
    %p826 = por %p824, %p825
    %s828 = sadd.s32 %s827, 1
    %p831 = scmp.eq.s32.totalorder %s85, 1
    %p832 = scmp.ne.s32.totalorder %s827, %s829
    %p833 = scmp.eq.s32.totalorder %s85, 0
    %p834 = por %p832, %p833
    %p835 = scmp.ne.s32.totalorder %s827, %s829
    %p836 = scmp.eq.s32.totalorder %s90, 1
    %p837 = por %p835, %p836
    %p838 = scmp.ne.s32.totalorder %s829, %s830
    %p839 = scmp.eq.s32.totalorder %s90, 0
    %p840 = por %p838, %p839
    %p841 = scmp.ne.s32.totalorder %s829, %s830
    %p842 = scmp.eq.s32.totalorder %s91, 1
    %p843 = por %p841, %p842
    %p845 = scmp.ne.s32.totalorder %s830, %s844
    %p846 = scmp.eq.s32.totalorder %s91, 0
    %p847 = por %p845, %p846
    %s849 = sadd.s32 %s848, 1
    %p852 = scmp.eq.s32.totalorder %s85, 1
    %p853 = scmp.ne.s32.totalorder %s848, %s850
    %p854 = scmp.eq.s32.totalorder %s85, 0
    %p855 = por %p853, %p854
    %p856 = scmp.ne.s32.totalorder %s848, %s850
    %p857 = scmp.eq.s32.totalorder %s90, 1
    %p858 = por %p856, %p857
    %p859 = scmp.ne.s32.totalorder %s850, %s851
    %p860 = scmp.eq.s32.totalorder %s90, 0
    %p861 = por %p859, %p860
    %p862 = scmp.ne.s32.totalorder %s850, %s851
    %p863 = scmp.eq.s32.totalorder %s91, 1
    %p864 = por %p862, %p863
    %p866 = scmp.ne.s32.totalorder %s851, %s865
    %p867 = scmp.eq.s32.totalorder %s91, 0
    %p868 = por %p866, %p867
    %s870 = sadd.s32 %s869, 1
    %p873 = scmp.eq.s32.totalorder %s85, 1
    %p874 = scmp.ne.s32.totalorder %s869, %s871
    %p875 = scmp.eq.s32.totalorder %s85, 0
    %p876 = por %p874, %p875
    %p877 = scmp.ne.s32.totalorder %s869, %s871
    %p878 = scmp.eq.s32.totalorder %s90, 1
    %p879 = por %p877, %p878
    %p880 = scmp.ne.s32.totalorder %s871, %s872
    %p881 = scmp.eq.s32.totalorder %s90, 0
    %p882 = por %p880, %p881
    %p883 = scmp.ne.s32.totalorder %s871, %s872
    %p884 = scmp.eq.s32.totalorder %s91, 1
    %p885 = por %p883, %p884
    %p887 = scmp.ne.s32.totalorder %s872, %s886
    %p888 = scmp.eq.s32.totalorder %s91, 0
    %p889 = por %p887, %p888
    %s891 = sadd.s32 %s890, 1
    %p894 = scmp.eq.s32.totalorder %s85, 1
    %p895 = scmp.ne.s32.totalorder %s890, %s892
    %p896 = scmp.eq.s32.totalorder %s85, 0
    %p897 = por %p895, %p896
    %p898 = scmp.ne.s32.totalorder %s890, %s892
    %p899 = scmp.eq.s32.totalorder %s90, 1
    %p900 = por %p898, %p899
    %p901 = scmp.ne.s32.totalorder %s892, %s893
    %p902 = scmp.eq.s32.totalorder %s90, 0
    %p903 = por %p901, %p902
    %p904 = scmp.ne.s32.totalorder %s892, %s893
    %p905 = scmp.eq.s32.totalorder %s91, 1
    %p906 = por %p904, %p905
    %p908 = scmp.ne.s32.totalorder %s893, %s907
    %p909 = scmp.eq.s32.totalorder %s91, 0
    %p910 = por %p908, %p909
    %s912 = sadd.s32 %s911, 1
    %p915 = scmp.eq.s32.totalorder %s85, 1
    %p916 = scmp.ne.s32.totalorder %s911, %s913
    %p917 = scmp.eq.s32.totalorder %s85, 0
    %p918 = por %p916, %p917
    %p919 = scmp.ne.s32.totalorder %s911, %s913
    %p920 = scmp.eq.s32.totalorder %s90, 1
    %p921 = por %p919, %p920
    %p922 = scmp.ne.s32.totalorder %s913, %s914
    %p923 = scmp.eq.s32.totalorder %s90, 0
    %p924 = por %p922, %p923
    %p925 = scmp.ne.s32.totalorder %s913, %s914
    %p926 = scmp.eq.s32.totalorder %s91, 1
    %p927 = por %p925, %p926
    %p929 = scmp.ne.s32.totalorder %s914, %s928
    %p930 = scmp.eq.s32.totalorder %s91, 0
    %p931 = por %p929, %p930
    %s932 = ssub.s32 %s85, %s92
    %p933 = scmp.eq.s32.totalorder %s932, 0
    %s935 = sadd.s32 %s934, 1
    %s936 = scalar_select %p933, %s934, %s935
    %p939 = pneg %p933
    %p940 = scmp.eq.s32.totalorder %s85, 1
    %p941 = por %p939, %p940
    %p942 = scmp.ne.s32.totalorder %s934, %s937
    %p943 = scmp.eq.s32.totalorder %s85, 0
    %p944 = por %p942, %p943
    %p945 = scmp.ne.s32.totalorder %s934, %s937
    %p946 = scmp.eq.s32.totalorder %s90, 1
    %p947 = por %p945, %p946
    %p948 = scmp.ne.s32.totalorder %s937, %s938
    %p949 = scmp.eq.s32.totalorder %s90, 0
    %p950 = por %p948, %p949
    %p951 = scmp.ne.s32.totalorder %s937, %s938
    %p952 = scmp.eq.s32.totalorder %s91, 1
    %p953 = por %p951, %p952
    %p955 = scmp.ne.s32.totalorder %s938, %s954
    %p956 = scmp.eq.s32.totalorder %s91, 0
    %p957 = por %p955, %p956
    %p958 = scmp.le.s32.totalorder 1, %s85
    %p959 = scmp.lt.s32.totalorder %s85, 3
    %p960 = pnand %p958, %p959
    %p961 = pneg %p960
    // Predicated region
    $region9: #{fwd.1} parent=5 // pred_check
      _
    $region10: #{fwd.1} parent=5 // pred_check_branch
      %963 = sbr.rel (%p960) target = $region12
    $region11: #{fwd.1} parent=5 // pred_region
      %s964 = ssub.s32 %s85, 1
      // Predicated region
      $region13: #{fwd.1} parent=11 // pred_check
        %p965 = pneg %p210
      $region14: #{fwd.1} parent=11 // pred_check_branch
        %967 = sbr.rel (%p965) target = $region16
      $region15: #{fwd.1} parent=11 // pred_region
        _
      $region16: #{fwd.1} parent=11 // pred_fallthru
        _
      // Predicated region
      $region17: #{fwd.1} parent=11 // pred_check
        %p968 = pneg %p231
      $region18: #{fwd.1} parent=11 // pred_check_branch
        %970 = sbr.rel (%p968) target = $region20
      $region19: #{fwd.1} parent=11 // pred_region
        _
      $region20: #{fwd.1} parent=11 // pred_fallthru
        _
      // Predicated region
      $region21: #{fwd.1} parent=11 // pred_check
        %p971 = pneg %p252
      $region22: #{fwd.1} parent=11 // pred_check_branch
        %973 = sbr.rel (%p971) target = $region24
      $region23: #{fwd.1} parent=11 // pred_region
        _
      $region24: #{fwd.1} parent=11 // pred_fallthru
        _
      // Predicated region
      $region25: #{fwd.1} parent=11 // pred_check
        %p974 = pneg %p273
      $region26: #{fwd.1} parent=11 // pred_check_branch
        %976 = sbr.rel (%p974) target = $region28
      $region27: #{fwd.1} parent=11 // pred_region
        _
      $region28: #{fwd.1} parent=11 // pred_fallthru
        _
      // Predicated region
      $region29: #{fwd.1} parent=11 // pred_check
        %p977 = pneg %p294
      $region30: #{fwd.1} parent=11 // pred_check_branch
        %979 = sbr.rel (%p977) target = $region32
      $region31: #{fwd.1} parent=11 // pred_region
        _
      $region32: #{fwd.1} parent=11 // pred_fallthru
        _
      // Predicated region
      $region33: #{fwd.1} parent=11 // pred_check
        %p980 = pneg %p315
      $region34: #{fwd.1} parent=11 // pred_check_branch
        %982 = sbr.rel (%p980) target = $region36
      $region35: #{fwd.1} parent=11 // pred_region
        _
      $region36: #{fwd.1} parent=11 // pred_fallthru
        _
      // Predicated region
      $region37: #{fwd.1} parent=11 // pred_check
        %p983 = pneg %p336
      $region38: #{fwd.1} parent=11 // pred_check_branch
        %985 = sbr.rel (%p983) target = $region40
      $region39: #{fwd.1} parent=11 // pred_region
        _
      $region40: #{fwd.1} parent=11 // pred_fallthru
        _
      // Predicated region
      $region41: #{fwd.1} parent=11 // pred_check
        %p986 = pneg %p357
      $region42: #{fwd.1} parent=11 // pred_check_branch
        %988 = sbr.rel (%p986) target = $region44
      $region43: #{fwd.1} parent=11 // pred_region
        _
      $region44: #{fwd.1} parent=11 // pred_fallthru
        _
      // Predicated region
      $region45: #{fwd.1} parent=11 // pred_check
        %p989 = pneg %p378
      $region46: #{fwd.1} parent=11 // pred_check_branch
        %991 = sbr.rel (%p989) target = $region48
      $region47: #{fwd.1} parent=11 // pred_region
        _
      $region48: #{fwd.1} parent=11 // pred_fallthru
        _
      // Predicated region
      $region49: #{fwd.1} parent=11 // pred_check
        %p992 = pneg %p399
      $region50: #{fwd.1} parent=11 // pred_check_branch
        %994 = sbr.rel (%p992) target = $region52
      $region51: #{fwd.1} parent=11 // pred_region
        _
      $region52: #{fwd.1} parent=11 // pred_fallthru
        _
      // Predicated region
      $region53: #{fwd.1} parent=11 // pred_check
        %p995 = pneg %p420
      $region54: #{fwd.1} parent=11 // pred_check_branch
        %997 = sbr.rel (%p995) target = $region56
      $region55: #{fwd.1} parent=11 // pred_region
        _
      $region56: #{fwd.1} parent=11 // pred_fallthru
        _
      // Predicated region
      $region57: #{fwd.1} parent=11 // pred_check
        %p998 = pneg %p441
      $region58: #{fwd.1} parent=11 // pred_check_branch
        %1000 = sbr.rel (%p998) target = $region60
      $region59: #{fwd.1} parent=11 // pred_region
        _
      $region60: #{fwd.1} parent=11 // pred_fallthru
        _
      // Predicated region
      $region61: #{fwd.1} parent=11 // pred_check
        %p1001 = pneg %p462
      $region62: #{fwd.1} parent=11 // pred_check_branch
        %1003 = sbr.rel (%p1001) target = $region64
      $region63: #{fwd.1} parent=11 // pred_region
        _
      $region64: #{fwd.1} parent=11 // pred_fallthru
        _
      // Predicated region
      $region65: #{fwd.1} parent=11 // pred_check
        %p1004 = pneg %p483
      $region66: #{fwd.1} parent=11 // pred_check_branch
        %1006 = sbr.rel (%p1004) target = $region68
      $region67: #{fwd.1} parent=11 // pred_region
        _
      $region68: #{fwd.1} parent=11 // pred_fallthru
        _
      // Predicated region
      $region69: #{fwd.1} parent=11 // pred_check
        %p1007 = pneg %p504
      $region70: #{fwd.1} parent=11 // pred_check_branch
        %1009 = sbr.rel (%p1007) target = $region72
      $region71: #{fwd.1} parent=11 // pred_region
        _
      $region72: #{fwd.1} parent=11 // pred_fallthru
        _
      // Predicated region
      $region73: #{fwd.1} parent=11 // pred_check
        %p1010 = pneg %p525
      $region74: #{fwd.1} parent=11 // pred_check_branch
        %1012 = sbr.rel (%p1010) target = $region76
      $region75: #{fwd.1} parent=11 // pred_region
        _
      $region76: #{fwd.1} parent=11 // pred_fallthru
        _
      // Predicated region
      $region77: #{fwd.1} parent=11 // pred_check
        %p1013 = pneg %p546
      $region78: #{fwd.1} parent=11 // pred_check_branch
        %1015 = sbr.rel (%p1013) target = $region80
      $region79: #{fwd.1} parent=11 // pred_region
        _
      $region80: #{fwd.1} parent=11 // pred_fallthru
        _
      // Predicated region
      $region81: #{fwd.1} parent=11 // pred_check
        %p1016 = pneg %p567
      $region82: #{fwd.1} parent=11 // pred_check_branch
        %1018 = sbr.rel (%p1016) target = $region84
      $region83: #{fwd.1} parent=11 // pred_region
        _
      $region84: #{fwd.1} parent=11 // pred_fallthru
        _
      // Predicated region
      $region85: #{fwd.1} parent=11 // pred_check
        %p1019 = pneg %p588
      $region86: #{fwd.1} parent=11 // pred_check_branch
        %1021 = sbr.rel (%p1019) target = $region88
      $region87: #{fwd.1} parent=11 // pred_region
        _
      $region88: #{fwd.1} parent=11 // pred_fallthru
        _
      // Predicated region
      $region89: #{fwd.1} parent=11 // pred_check
        %p1022 = pneg %p609
      $region90: #{fwd.1} parent=11 // pred_check_branch
        %1024 = sbr.rel (%p1022) target = $region92
      $region91: #{fwd.1} parent=11 // pred_region
        _
      $region92: #{fwd.1} parent=11 // pred_fallthru
        _
      // Predicated region
      $region93: #{fwd.1} parent=11 // pred_check
        %p1025 = pneg %p630
      $region94: #{fwd.1} parent=11 // pred_check_branch
        %1027 = sbr.rel (%p1025) target = $region96
      $region95: #{fwd.1} parent=11 // pred_region
        _
      $region96: #{fwd.1} parent=11 // pred_fallthru
        _
      // Predicated region
      $region97: #{fwd.1} parent=11 // pred_check
        %p1028 = pneg %p651
      $region98: #{fwd.1} parent=11 // pred_check_branch
        %1030 = sbr.rel (%p1028) target = $region100
      $region99: #{fwd.1} parent=11 // pred_region
        _
      $region100: #{fwd.1} parent=11 // pred_fallthru
        _
      // Predicated region
      $region101: #{fwd.1} parent=11 // pred_check
        %p1031 = pneg %p672
      $region102: #{fwd.1} parent=11 // pred_check_branch
        %1033 = sbr.rel (%p1031) target = $region104
      $region103: #{fwd.1} parent=11 // pred_region
        _
      $region104: #{fwd.1} parent=11 // pred_fallthru
        _
      // Predicated region
      $region105: #{fwd.1} parent=11 // pred_check
        %p1034 = pneg %p693
      $region106: #{fwd.1} parent=11 // pred_check_branch
        %1036 = sbr.rel (%p1034) target = $region108
      $region107: #{fwd.1} parent=11 // pred_region
        _
      $region108: #{fwd.1} parent=11 // pred_fallthru
        _
      // Predicated region
      $region109: #{fwd.1} parent=11 // pred_check
        %p1037 = pneg %p714
      $region110: #{fwd.1} parent=11 // pred_check_branch
        %1039 = sbr.rel (%p1037) target = $region112
      $region111: #{fwd.1} parent=11 // pred_region
        _
      $region112: #{fwd.1} parent=11 // pred_fallthru
        _
      // Predicated region
      $region113: #{fwd.1} parent=11 // pred_check
        %p1040 = pneg %p735
      $region114: #{fwd.1} parent=11 // pred_check_branch
        %1042 = sbr.rel (%p1040) target = $region116
      $region115: #{fwd.1} parent=11 // pred_region
        _
      $region116: #{fwd.1} parent=11 // pred_fallthru
        _
      // Predicated region
      $region117: #{fwd.1} parent=11 // pred_check
        %p1043 = pneg %p756
      $region118: #{fwd.1} parent=11 // pred_check_branch
        %1045 = sbr.rel (%p1043) target = $region120
      $region119: #{fwd.1} parent=11 // pred_region
        _
      $region120: #{fwd.1} parent=11 // pred_fallthru
        _
      // Predicated region
      $region121: #{fwd.1} parent=11 // pred_check
        %p1046 = pneg %p777
      $region122: #{fwd.1} parent=11 // pred_check_branch
        %1048 = sbr.rel (%p1046) target = $region124
      $region123: #{fwd.1} parent=11 // pred_region
        _
      $region124: #{fwd.1} parent=11 // pred_fallthru
        _
      // Predicated region
      $region125: #{fwd.1} parent=11 // pred_check
        %p1049 = pneg %p798
      $region126: #{fwd.1} parent=11 // pred_check_branch
        %1051 = sbr.rel (%p1049) target = $region128
      $region127: #{fwd.1} parent=11 // pred_region
        _
      $region128: #{fwd.1} parent=11 // pred_fallthru
        _
      // Predicated region
      $region129: #{fwd.1} parent=11 // pred_check
        %p1052 = pneg %p819
      $region130: #{fwd.1} parent=11 // pred_check_branch
        %1054 = sbr.rel (%p1052) target = $region132
      $region131: #{fwd.1} parent=11 // pred_region
        _
      $region132: #{fwd.1} parent=11 // pred_fallthru
        _
      // Predicated region
      $region133: #{fwd.1} parent=11 // pred_check
        %p1055 = pneg %p840
      $region134: #{fwd.1} parent=11 // pred_check_branch
        %1057 = sbr.rel (%p1055) target = $region136
      $region135: #{fwd.1} parent=11 // pred_region
        _
      $region136: #{fwd.1} parent=11 // pred_fallthru
        _
      // Predicated region
      $region137: #{fwd.1} parent=11 // pred_check
        %p1058 = pneg %p861
      $region138: #{fwd.1} parent=11 // pred_check_branch
        %1060 = sbr.rel (%p1058) target = $region140
      $region139: #{fwd.1} parent=11 // pred_region
        _
      $region140: #{fwd.1} parent=11 // pred_fallthru
        _
      // Predicated region
      $region141: #{fwd.1} parent=11 // pred_check
        %p1061 = pneg %p882
      $region142: #{fwd.1} parent=11 // pred_check_branch
        %1063 = sbr.rel (%p1061) target = $region144
      $region143: #{fwd.1} parent=11 // pred_region
        _
      $region144: #{fwd.1} parent=11 // pred_fallthru
        _
      // Predicated region
      $region145: #{fwd.1} parent=11 // pred_check
        %p1064 = pneg %p903
      $region146: #{fwd.1} parent=11 // pred_check_branch
        %1066 = sbr.rel (%p1064) target = $region148
      $region147: #{fwd.1} parent=11 // pred_region
        _
      $region148: #{fwd.1} parent=11 // pred_fallthru
        _
      // Predicated region
      $region149: #{fwd.1} parent=11 // pred_check
        %p1067 = pneg %p924
      $region150: #{fwd.1} parent=11 // pred_check_branch
        %1069 = sbr.rel (%p1067) target = $region152
      $region151: #{fwd.1} parent=11 // pred_region
        _
      $region152: #{fwd.1} parent=11 // pred_fallthru
        _
    $region12: #{fwd.1} parent=5 // pred_fallthru
      _
    %p1070 = scmp.lt.s32.totalorder %s85, 2
    // Predicated region
    $region153: #{fwd.1} parent=5 // pred_check
      %p1071 = pneg %p1070
    $region154: #{fwd.1} parent=5 // pred_check_branch
      %1073 = sbr.rel (%p1071) target = $region156
    $region155: #{fwd.1} parent=5 // pred_region
      // Predicated region
      $region157: #{fwd.1} parent=155 // pred_check
        %p1074 = pneg %p105
      $region158: #{fwd.1} parent=155 // pred_check_branch
        %1076 = sbr.rel (%p1074) target = $region160
      $region159: #{fwd.1} parent=155 // pred_region
        %p1077 = scmp.lt.s32.totalorder %s85, 1
        %s1078 = scalar_select %p1077, %s85, 1
        %s1079 = smul.addr %s1078, 8
        %s1080 = scalar_lea.vmem %s1, %s1079
      $region160: #{fwd.1} parent=155 // pred_fallthru
        _
      // Predicated region
      $region161: #{fwd.1} parent=155 // pred_check
        %p1081 = pneg %p131
      $region162: #{fwd.1} parent=155 // pred_check_branch
        %1083 = sbr.rel (%p1081) target = $region164
      $region163: #{fwd.1} parent=155 // pred_region
        %p1084 = scmp.lt.s32.totalorder %s85, 1
        %s1085 = scalar_select %p1084, %s85, 1
        %s1086 = smul.addr %s1085, 8
        %s1087 = scalar_lea.vmem %s3, %s1086
      $region164: #{fwd.1} parent=155 // pred_fallthru
        _
      // Predicated region
      $region165: #{fwd.1} parent=155 // pred_check
        %p1088 = pneg %p157
      $region166: #{fwd.1} parent=155 // pred_check_branch
        %1090 = sbr.rel (%p1088) target = $region168
      $region167: #{fwd.1} parent=155 // pred_region
        %p1091 = scmp.lt.s32.totalorder %s85, 1
        %s1092 = scalar_select %p1091, %s85, 1
        %s1093 = smul.addr %s1092, 8
        %s1094 = scalar_lea.vmem %s5, %s1093
      $region168: #{fwd.1} parent=155 // pred_fallthru
        _
      // Predicated region
      $region169: #{fwd.1} parent=155 // pred_check
        %p1095 = pneg %p183
      $region170: #{fwd.1} parent=155 // pred_check_branch
        %1097 = sbr.rel (%p1095) target = $region172
      $region171: #{fwd.1} parent=155 // pred_region
        %p1098 = scmp.lt.s32.totalorder %s85, 1
        %s1099 = scalar_select %p1098, %s85, 1
        %s1100 = smul.addr %s1099, 8
        %s1101 = scalar_lea.vmem %s7, %s1100
      $region172: #{fwd.1} parent=155 // pred_fallthru
        _
    $region156: #{fwd.1} parent=5 // pred_fallthru
      _
    %p1102 = scmp.le.s32.totalorder 1, %s85
    %p1103 = scmp.lt.s32.totalorder %s85, 3
    %p1104 = pnand %p1102, %p1103
    %p1105 = pneg %p1104
    // Predicated region
    $region173: #{fwd.1} parent=5 // pred_check
      _
    $region174: #{fwd.1} parent=5 // pred_check_branch
      %1107 = sbr.rel (%p1104) target = $region176
    $region175: #{fwd.1} parent=5 // pred_region
      %s1108 = ssub.s32 %s85, 1
      %p1109 = scmp.lt.s32.totalorder %s90, 1
      %s1110 = scalar_select %p1109, %s90, 1
      %s1111 = smul.addr %s1110, 8
      %s1112 = scalar_lea.vmem %s1, %s1111
      %p1113 = pneg %p111
      %p1114 = pneg %p108
      %p1115 = scmp.lt.s32.totalorder %s90, 1
      %s1116 = scalar_select %p1115, %s90, 1
      %s1117 = smul.addr %s1116, 8
      %s1118 = scalar_lea.vmem %s3, %s1117
      %p1119 = pneg %p137
      %p1120 = pneg %p134
      %p1121 = scmp.lt.s32.totalorder %s90, 1
      %s1122 = scalar_select %p1121, %s90, 1
      %s1123 = smul.addr %s1122, 8
      %s1124 = scalar_lea.vmem %s5, %s1123
      %p1125 = pneg %p163
      %p1126 = pneg %p160
      %p1127 = scmp.lt.s32.totalorder %s90, 1
      %s1128 = scalar_select %p1127, %s90, 1
      %s1129 = smul.addr %s1128, 8
      %s1130 = scalar_lea.vmem %s7, %s1129
      %p1131 = pneg %p189
      %p1132 = pneg %p186
      %p1133 = pneg %p210
      %p1134 = pneg %p207
      %p1135 = pneg %p231
      %p1136 = pneg %p228
      %p1137 = pneg %p252
      %p1138 = pneg %p249
      %p1139 = pneg %p273
      %p1140 = pneg %p270
      %p1141 = pneg %p294
      %p1142 = pneg %p291
      %p1143 = pneg %p315
      %p1144 = pneg %p312
      %p1145 = pneg %p336
      %p1146 = pneg %p333
      %p1147 = pneg %p357
      %p1148 = pneg %p354
      %p1149 = pneg %p378
      %p1150 = pneg %p375
      %p1151 = pneg %p399
      %p1152 = pneg %p396
      %p1153 = pneg %p420
      %p1154 = pneg %p417
      %p1155 = pneg %p441
      %p1156 = pneg %p438
      %p1157 = pneg %p462
      %p1158 = pneg %p459
      %p1159 = pneg %p483
      %p1160 = pneg %p480
      %p1161 = pneg %p504
      %p1162 = pneg %p501
      %p1163 = pneg %p525
      %p1164 = pneg %p522
      %p1165 = pneg %p546
      %p1166 = pneg %p543
      %p1167 = pneg %p567
      %p1168 = pneg %p564
      %p1169 = pneg %p588
      %p1170 = pneg %p585
      %p1171 = pneg %p609
      %p1172 = pneg %p606
      %p1173 = pneg %p630
      %p1174 = pneg %p627
      %p1175 = pneg %p651
      %p1176 = pneg %p648
      %p1177 = pneg %p672
      %p1178 = pneg %p669
      %p1179 = pneg %p693
      %p1180 = pneg %p690
      %p1181 = pneg %p714
      %p1182 = pneg %p711
      %p1183 = pneg %p735
      %p1184 = pneg %p732
      %p1185 = pneg %p756
      %p1186 = pneg %p753
      %p1187 = pneg %p777
      %p1188 = pneg %p774
      %p1189 = pneg %p798
      %p1190 = pneg %p795
      %p1191 = pneg %p819
      %p1192 = pneg %p816
      %p1193 = pneg %p840
      %p1194 = pneg %p837
      %p1195 = pneg %p861
      %p1196 = pneg %p858
      %p1197 = pneg %p882
      %p1198 = pneg %p879
      %p1199 = pneg %p903
      %p1200 = pneg %p900
      %p1201 = pneg %p924
      %p1202 = pneg %p921
      %p1203 = pneg %p950
      %p1204 = pneg %p947
      %p1205 = scmp.lt.s32.totalorder %s90, 1
      %s1206 = scalar_select %p1205, %s90, 1
      %s1207 = smul.addr %s1206, 8
      %s1208 = scalar_lea.vmem %s79, %s1207
      %p1209 = scmp.lt.s32.totalorder %s90, 1
      %s1210 = scalar_select %p1209, %s90, 1
      %s1211 = smul.addr %s1210, 8
      %s1212 = scalar_lea.vmem %s1, %s1211
      %p1213 = scmp.lt.s32.totalorder %s90, 1
      %s1214 = scalar_select %p1213, %s90, 1
      %s1215 = smul.addr %s1214, 8
      %s1216 = scalar_lea.vmem %s3, %s1215
      %p1217 = scmp.lt.s32.totalorder %s90, 1
      %s1218 = scalar_select %p1217, %s90, 1
      %s1219 = smul.addr %s1218, 8
      %s1220 = scalar_lea.vmem %s5, %s1219
      %p1221 = scmp.lt.s32.totalorder %s90, 1
      %s1222 = scalar_select %p1221, %s90, 1
      %s1223 = smul.addr %s1222, 8
      %s1224 = scalar_lea.vmem %s7, %s1223
      %p1225 = scmp.lt.s32.totalorder %s90, 1
      %s1226 = scalar_select %p1225, %s90, 1
      %s1227 = smul.addr %s1226, 8
      %s1228 = scalar_lea.vmem %s79, %s1227
      %v1229 = vld [vmem:[%s1212] sm:$0xff]
      %v1230 = vld [vmem:[%s9] sm:$0xff]
      %v1231 = vld [vmem:[%s9 + $0x8] sm:$0xff]
      %v1232 = vld [vmem:[%s9 + $0x10] sm:$0xff]
      %v1233 = vld [vmem:[%s9 + $0x18] sm:$0xff]
      %v1234 = vld [vmem:[%s11] sm:$0x1]
      %v1236 = vperm.slane %v1234, 0
      %vm1238 = vcmask 261120
      %v1240 = vsel %vm1238, %v1229, 0
      %1242 = vmatpush.msra.mxu0 0.0
      %1243 = vmatpush.msra.mxu0 0.0
      %1244 = vmatpush.msra.mxu0 0.0
      %1245 = vmatpush.msra.mxu0 0.0
      %1246 = vmatpush.msra.mxu0 0.0
      %1247 = vmatpush.msra.mxu0 0.0
      %1248 = vmatpush.msra.mxu0 0.0
      %1249 = vmatpush.msra.mxu0 0.0
      %1250 = vmatpush.msra.mxu0 0.0
      %1251 = vmatpush.msra.mxu0 0.0
      %1252 = vmatpush.msra.mxu0 0.0
      %1253 = vmatpush.msra.mxu0 0.0
      %1254 = vmatpush.msra.mxu0 %v1233
      %1255 = vmatpush.msra.mxu0 %v1232
      %1256 = vmatpush.msra.mxu0 %v1231
      %1257 = vmatpush.msra.mxu0 %v1230
      %1258 = vmatmul.f32.gmra.mxu0 %v1240
      %v1259 = vpop.f32.mrf.mxu0
      %v1260 = vadd.f32 %v1236, %v1259
      %1261 = vdwg.mxu0
      %v1262 = vld [vmem:[%s13] sm:$0xff]
      %v1263 = vld [vmem:[%s13 + $0x8] sm:$0xff]
      %v1264 = vld [vmem:[%s13 + $0x10] sm:$0xff]
      %v1265 = vld [vmem:[%s13 + $0x18] sm:$0xff]
      %v1266 = vld [vmem:[%s15] sm:$0x1]
      %v1267 = vld [vmem:[%s17] sm:$0xff]
      %v1268 = vld [vmem:[%s17 + $0x8] sm:$0xff]
      %v1269 = vld [vmem:[%s17 + $0x10] sm:$0xff]
      %v1270 = vld [vmem:[%s17 + $0x18] sm:$0xff]
      %v1271 = vld [vmem:[%s19] sm:$0x1]
      %v1272 = vld [vmem:[%s21] sm:$0x1]
      %v1273 = vld [vmem:[%s23] sm:$0x1]
      %v1275 = vperm.slane %v1266, 0
      %v1278 = vsel %vm1238, %v1260, 0
      %1280 = vmatpush.msra.mxu0 0.0
      %1281 = vmatpush.msra.mxu0 0.0
      %1282 = vmatpush.msra.mxu0 0.0
      %1283 = vmatpush.msra.mxu0 0.0
      %1284 = vmatpush.msra.mxu0 0.0
      %1285 = vmatpush.msra.mxu0 0.0
      %1286 = vmatpush.msra.mxu0 0.0
      %1287 = vmatpush.msra.mxu0 0.0
      %1288 = vmatpush.msra.mxu0 0.0
      %1289 = vmatpush.msra.mxu0 0.0
      %1290 = vmatpush.msra.mxu0 0.0
      %1291 = vmatpush.msra.mxu0 0.0
      %1292 = vmatpush.msra.mxu0 %v1265
      %1293 = vmatpush.msra.mxu0 %v1264
      %1294 = vmatpush.msra.mxu0 %v1263
      %1295 = vmatpush.msra.mxu0 %v1262
      %1296 = vmatmul.f32.gmra.mxu0 %v1278
      %v1297 = vpop.f32.mrf.mxu0
      %v1298 = vadd.f32 %v1275, %v1297
      %1299 = vdwg.mxu0
      %1301 = vrot.lane.b32.xlu0 %v1298, 96
      %v1302 = vpop.permute.xlu0 %1301
      %vm1303 = vcmask 130048
      %v1304 = vsel %vm1303, %v1298, 0
      %v1306 = vsel %vm1303, %v1302, 0
      %1308 = vmatpush.xpose.msra.mxu0 0.0
      %1309 = vmatpush.xpose.msra.mxu0 0.0
      %1310 = vmatpush.xpose.msra.mxu0 0.0
      %1311 = vmatpush.xpose.msra.mxu0 0.0
      %1312 = vmatpush.xpose.msra.mxu0 0.0
      %1313 = vmatpush.xpose.msra.mxu0 0.0
      %1314 = vmatpush.xpose.msra.mxu0 0.0
      %1315 = vmatpush.xpose.msra.mxu0 0.0
      %1316 = vmatpush.xpose.msra.mxu0 0.0
      %1317 = vmatpush.xpose.msra.mxu0 0.0
      %1318 = vmatpush.xpose.msra.mxu0 0.0
      %1319 = vmatpush.xpose.msra.mxu0 0.0
      %1320 = vmatpush.xpose.msra.mxu0 0.0
      %1321 = vmatpush.xpose.msra.mxu0 0.0
      %1322 = vmatpush.xpose.msra.mxu0 0.0
      %1323 = vmatpush.xpose.msra.mxu0 %v1306
      %1324 = vmatmul.f32.gmra.mxu0 %v1304
      %v1325 = vpop.f32.mrf.mxu0
      %v1326 = vadd.f32 0.0, %v1325
      %1327 = vdwg.mxu0
      %v1328 = vmul.f32 %v1326, 0.25
      %vm1329 = vcmask 64512
      %v1330 = vsel %vm1329, %v1328, -inf
      %1331 = vmax.xlane.f32.xlu0 %v1330
      %v1332 = vpop.xlane.xlu0 %1331
      %v1333 = vsub.f32 %v1328, %v1332
      %v1334 = vmul.f32 %v1333, 1.442695
      %v1335 = vpow.pop %v1334
      %v1336 = vsel %vm1329, %v1335, 0.0
      %1337 = vadd.xlane.f32.xlu0 %v1336
      %v1338 = vpop.xlane.xlu0 %1337
      %v1339 = vrcp.pop %v1338
      %v1340 = vmul.f32 %v1335, %v1339
      %1341 = vrot.lane.b32.xlu0 %v1298, 64
      %v1342 = vpop.permute.xlu0 %1341
      %v1345 = vsel %vm1329, %v1340, 0
      %1347 = vmatpush.msra.mxu0 0.0
      %1348 = vmatpush.msra.mxu0 0.0
      %1349 = vmatpush.msra.mxu0 0.0
      %1350 = vmatpush.msra.mxu0 0.0
      %1351 = vmatpush.msra.mxu0 0.0
      %1352 = vmatpush.msra.mxu0 0.0
      %1353 = vmatpush.msra.mxu0 0.0
      %1354 = vmatpush.msra.mxu0 0.0
      %1355 = vmatpush.msra.mxu0 0.0
      %1356 = vmatpush.msra.mxu0 0.0
      %1357 = vmatpush.msra.mxu0 0.0
      %1358 = vmatpush.msra.mxu0 0.0
      %1359 = vmatpush.msra.mxu0 0.0
      %1360 = vmatpush.msra.mxu0 0.0
      %1361 = vmatpush.msra.mxu0 0.0
      %1362 = vmatpush.msra.mxu0 %v1342
      %1363 = vmatmul.f32.gmra.mxu0 %v1345
      %v1364 = vpop.f32.mrf.mxu0
      %v1365 = vadd.f32 0.0, %v1364
      %1366 = vdwg.mxu0
      %1367 = vrot.lane.b32.xlu0 %v1298, 112
      %v1368 = vpop.permute.xlu0 %1367
      %1369 = vrot.lane.b32.xlu0 %v1298, 80
      %v1370 = vpop.permute.xlu0 %1369
      %v1371 = vsel %vm1303, %v1368, 0
      %v1373 = vsel %vm1303, %v1370, 0
      %1375 = vmatpush.xpose.msra.mxu0 0.0
      %1376 = vmatpush.xpose.msra.mxu0 0.0
      %1377 = vmatpush.xpose.msra.mxu0 0.0
      %1378 = vmatpush.xpose.msra.mxu0 0.0
      %1379 = vmatpush.xpose.msra.mxu0 0.0
      %1380 = vmatpush.xpose.msra.mxu0 0.0
      %1381 = vmatpush.xpose.msra.mxu0 0.0
      %1382 = vmatpush.xpose.msra.mxu0 0.0
      %1383 = vmatpush.xpose.msra.mxu0 0.0
      %1384 = vmatpush.xpose.msra.mxu0 0.0
      %1385 = vmatpush.xpose.msra.mxu0 0.0
      %1386 = vmatpush.xpose.msra.mxu0 0.0
      %1387 = vmatpush.xpose.msra.mxu0 0.0
      %1388 = vmatpush.xpose.msra.mxu0 0.0
      %1389 = vmatpush.xpose.msra.mxu0 0.0
      %1390 = vmatpush.xpose.msra.mxu0 %v1373
      %1391 = vmatmul.f32.gmra.mxu0 %v1371
      %v1392 = vpop.f32.mrf.mxu0
      %v1393 = vadd.f32 0.0, %v1392
      %1394 = vdwg.mxu0
      %v1395 = vmul.f32 %v1393, 0.25
      %v1396 = vsel %vm1329, %v1395, -inf
      %1397 = vmax.xlane.f32.xlu0 %v1396
      %v1398 = vpop.xlane.xlu0 %1397
      %v1399 = vsub.f32 %v1395, %v1398
      %v1400 = vmul.f32 %v1399, 1.442695
      %v1401 = vpow.pop %v1400
      %v1402 = vsel %vm1329, %v1401, 0.0
      %1403 = vadd.xlane.f32.xlu0 %v1402
      %v1404 = vpop.xlane.xlu0 %1403
      %v1405 = vrcp.pop %v1404
      %v1406 = vmul.f32 %v1401, %v1405
      %1407 = vrot.lane.b32.xlu0 %v1298, 48
      %v1408 = vpop.permute.xlu0 %1407
      %v1411 = vsel %vm1329, %v1406, 0
      %1413 = vmatpush.msra.mxu0 0.0
      %1414 = vmatpush.msra.mxu0 0.0
      %1415 = vmatpush.msra.mxu0 0.0
      %1416 = vmatpush.msra.mxu0 0.0
      %1417 = vmatpush.msra.mxu0 0.0
      %1418 = vmatpush.msra.mxu0 0.0
      %1419 = vmatpush.msra.mxu0 0.0
      %1420 = vmatpush.msra.mxu0 0.0
      %1421 = vmatpush.msra.mxu0 0.0
      %1422 = vmatpush.msra.mxu0 0.0
      %1423 = vmatpush.msra.mxu0 0.0
      %1424 = vmatpush.msra.mxu0 0.0
      %1425 = vmatpush.msra.mxu0 0.0
      %1426 = vmatpush.msra.mxu0 0.0
      %1427 = vmatpush.msra.mxu0 0.0
      %1428 = vmatpush.msra.mxu0 %v1408
      %1429 = vmatmul.f32.gmra.mxu0 %v1411
      %v1430 = vpop.f32.mrf.mxu0
      %v1431 = vadd.f32 0.0, %v1430
      %1432 = vdwg.mxu0
      %1434 = vrot.lane.b32.xlu0 %v1431, 16
      %v1435 = vpop.permute.xlu0 %1434
      %v1437 = vsel %vm1303, %v1365, %v1435
      %v1439 = vperm.slane %v1271, 0
      %v1442 = vsel %vm1238, %v1437, 0
      %1444 = vmatpush.msra.mxu0 0.0
      %1445 = vmatpush.msra.mxu0 0.0
      %1446 = vmatpush.msra.mxu0 0.0
      %1447 = vmatpush.msra.mxu0 0.0
      %1448 = vmatpush.msra.mxu0 0.0
      %1449 = vmatpush.msra.mxu0 0.0
      %1450 = vmatpush.msra.mxu0 0.0
      %1451 = vmatpush.msra.mxu0 0.0
      %1452 = vmatpush.msra.mxu0 0.0
      %1453 = vmatpush.msra.mxu0 0.0
      %1454 = vmatpush.msra.mxu0 0.0
      %1455 = vmatpush.msra.mxu0 0.0
      %1456 = vmatpush.msra.mxu0 %v1270
      %1457 = vmatpush.msra.mxu0 %v1269
      %1458 = vmatpush.msra.mxu0 %v1268
      %1459 = vmatpush.msra.mxu0 %v1267
      %1460 = vmatmul.f32.gmra.mxu0 %v1442
      %v1461 = vpop.f32.mrf.mxu0
      %v1462 = vadd.f32 %v1439, %v1461
      %1463 = vdwg.mxu0
      %v1464 = vadd.f32 %v1462, %v1260
      %v1465 = vsel %vm1238, %v1464, 0.0
      %1466 = vadd.xlane.f32.xlu0 %v1465
      %v1467 = vpop.xlane.xlu0 %1466
      %v1468 = vrcp.pop 32.0
      %v1469 = vmul.f32 32.0, %v1468
      %v1470 = vsub.f32 1.0, %v1469
      %v1471 = vmul.f32 %v1468, %v1470
      %v1472 = vadd.f32 %v1468, %v1471
      %vm1473 = vweird.f32 %v1468
      %v1474 = vsel %vm1473, %v1468, %v1472
      %v1475 = vmul.f32 %v1467, %v1474
      %v1476 = vsub.f32 %v1464, %v1475
      %v1477 = vmul.f32 %v1476, %v1476
      %v1478 = vsel %vm1238, %v1477, 0.0
      %1479 = vadd.xlane.f32.xlu0 %v1478
      %v1480 = vpop.xlane.xlu0 %1479
      %v1481 = vmul.f32 %v1480, %v1474
      %v1482 = vadd.f32 %v1481, 1e-05
      %v1483 = vrsqrt.pop %v1482
      %v1484 = vmul.f32 %v1483, %v1482
      %v1485 = vmul.f32 %v1484, %v1483
      %v1486 = vmul.f32 0.5, %v1485
      %v1487 = vsub.f32 1.5, %v1486
      %v1488 = vmul.f32 %v1483, %v1487
      %vm1489 = vweird.f32 %v1482
      %vm1490 = vweird.f32 %v1483
      %vm1491 = vmor %vm1489, %vm1490
      %v1492 = vsel %vm1491, %v1483, %v1488
      %v1493 = vmul.f32 %v1476, %v1492
      %v1495 = vperm.slane %v1272, 0
      %v1497 = vmul.f32 %v1493, %v1495
      %v1499 = vperm.slane %v1273, 0
      %v1501 = vadd.f32 %v1497, %v1499
      %v1502 = vld [vmem:[%s25] sm:$0xff]
      %v1503 = vld [vmem:[%s25 + $0x8] sm:$0xff]
      %v1504 = vld [vmem:[%s25 + $0x10] sm:$0xff]
      %v1505 = vld [vmem:[%s25 + $0x18] sm:$0xff]
      %v1506 = vld [vmem:[%s27] sm:$0x1]
      %v1507 = vld [vmem:[%s29] sm:$0xff]
      %v1508 = vld [vmem:[%s29 + $0x8] sm:$0xff]
      %v1509 = vld [vmem:[%s29 + $0x10] sm:$0xff]
      %v1510 = vld [vmem:[%s29 + $0x18] sm:$0xff]
      %v1511 = vld [vmem:[%s29 + $0x20] sm:$0xff]
      %v1512 = vld [vmem:[%s29 + $0x28] sm:$0xff]
      %v1513 = vld [vmem:[%s29 + $0x30] sm:$0xff]
      %v1514 = vld [vmem:[%s29 + $0x38] sm:$0xff]
      %v1515 = vld [vmem:[%s31] sm:$0x1]
      %v1516 = vld [vmem:[%s33] sm:$0x1]
      %v1517 = vld [vmem:[%s35] sm:$0x1]
      %v1519 = vperm.slane %v1506, 0
      %v1522 = vsel %vm1238, %v1501, 0
      %1524 = vmatpush.msra.mxu0 0.0
      %1525 = vmatpush.msra.mxu0 0.0
      %1526 = vmatpush.msra.mxu0 0.0
      %1527 = vmatpush.msra.mxu0 0.0
      %1528 = vmatpush.msra.mxu0 0.0
      %1529 = vmatpush.msra.mxu0 0.0
      %1530 = vmatpush.msra.mxu0 0.0
      %1531 = vmatpush.msra.mxu0 0.0
      %1532 = vmatpush.msra.mxu0 0.0
      %1533 = vmatpush.msra.mxu0 0.0
      %1534 = vmatpush.msra.mxu0 0.0
      %1535 = vmatpush.msra.mxu0 0.0
      %1536 = vmatpush.msra.mxu0 %v1505
      %1537 = vmatpush.msra.mxu0 %v1504
      %1538 = vmatpush.msra.mxu0 %v1503
      %1539 = vmatpush.msra.mxu0 %v1502
      %1540 = vmatmul.f32.gmra.mxu0 %v1522
      %v1541 = vpop.f32.mrf.mxu0
      %v1542 = vadd.f32 %v1519, %v1541
      %1543 = vdwg.mxu0
      %v1544 = vmax.f32 %v1542, 0.0
      %v1546 = vperm.slane %v1515, 0
      %vm1548 = vcmask 523264
      %v1550 = vsel %vm1548, %v1544, 0
      %1552 = vmatpush.msra.mxu0 0.0
      %1553 = vmatpush.msra.mxu0 0.0
      %1554 = vmatpush.msra.mxu0 0.0
      %1555 = vmatpush.msra.mxu0 0.0
      %1556 = vmatpush.msra.mxu0 0.0
      %1557 = vmatpush.msra.mxu0 0.0
      %1558 = vmatpush.msra.mxu0 0.0
      %1559 = vmatpush.msra.mxu0 0.0
      %1560 = vmatpush.msra.mxu0 %v1514
      %1561 = vmatpush.msra.mxu0 %v1513
      %1562 = vmatpush.msra.mxu0 %v1512
      %1563 = vmatpush.msra.mxu0 %v1511
      %1564 = vmatpush.msra.mxu0 %v1510
      %1565 = vmatpush.msra.mxu0 %v1509
      %1566 = vmatpush.msra.mxu0 %v1508
      %1567 = vmatpush.msra.mxu0 %v1507
      %1568 = vmatmul.f32.gmra.mxu0 %v1550
      %v1569 = vpop.f32.mrf.mxu0
      %v1570 = vadd.f32 %v1546, %v1569
      %1571 = vdwg.mxu0
      %v1572 = vadd.f32 %v1570, %v1501
      %v1573 = vsel %vm1238, %v1572, 0.0
      %1574 = vadd.xlane.f32.xlu0 %v1573
      %v1575 = vpop.xlane.xlu0 %1574
      %v1576 = vmul.f32 %v1575, %v1474
      %v1577 = vsub.f32 %v1572, %v1576
      %v1578 = vmul.f32 %v1577, %v1577
      %v1579 = vsel %vm1238, %v1578, 0.0
      %1580 = vadd.xlane.f32.xlu0 %v1579
      %v1581 = vpop.xlane.xlu0 %1580
      %v1582 = vmul.f32 %v1581, %v1474
      %v1583 = vadd.f32 %v1582, 1e-05
      %v1584 = vrsqrt.pop %v1583
      %v1585 = vmul.f32 %v1584, %v1583
      %v1586 = vmul.f32 %v1585, %v1584
      %v1587 = vmul.f32 0.5, %v1586
      %v1588 = vsub.f32 1.5, %v1587
      %v1589 = vmul.f32 %v1584, %v1588
      %vm1590 = vweird.f32 %v1583
      %vm1591 = vweird.f32 %v1584
      %vm1592 = vmor %vm1590, %vm1591
      %v1593 = vsel %vm1592, %v1584, %v1589
      %v1594 = vmul.f32 %v1577, %v1593
      %v1596 = vperm.slane %v1516, 0
      %v1598 = vmul.f32 %v1594, %v1596
      %v1600 = vperm.slane %v1517, 0
      %v1602 = vadd.f32 %v1598, %v1600
      %s1603 = scalar_lea.vmem %s13, 32
      %v1604 = vld [vmem:[%s1603] sm:$0xff]
      %v1605 = vld [vmem:[%s1603 + $0x8] sm:$0xff]
      %v1606 = vld [vmem:[%s1603 + $0x10] sm:$0xff]
      %v1607 = vld [vmem:[%s1603 + $0x18] sm:$0xff]
      %s1608 = scalar_lea.vmem %s15, 1
      %v1609 = vld [vmem:[%s1608] sm:$0x1]
      %s1610 = scalar_lea.vmem %s17, 32
      %v1611 = vld [vmem:[%s1610] sm:$0xff]
      %v1612 = vld [vmem:[%s1610 + $0x8] sm:$0xff]
      %v1613 = vld [vmem:[%s1610 + $0x10] sm:$0xff]
      %v1614 = vld [vmem:[%s1610 + $0x18] sm:$0xff]
      %s1615 = scalar_lea.vmem %s19, 1
      %v1616 = vld [vmem:[%s1615] sm:$0x1]
      %s1617 = scalar_lea.vmem %s21, 1
      %v1618 = vld [vmem:[%s1617] sm:$0x1]
      %s1619 = scalar_lea.vmem %s23, 1
      %v1620 = vld [vmem:[%s1619] sm:$0x1]
      %v1622 = vperm.slane %v1609, 0
      %v1625 = vsel %vm1238, %v1602, 0
      %1627 = vmatpush.msra.mxu0 0.0
      %1628 = vmatpush.msra.mxu0 0.0
      %1629 = vmatpush.msra.mxu0 0.0
      %1630 = vmatpush.msra.mxu0 0.0
      %1631 = vmatpush.msra.mxu0 0.0
      %1632 = vmatpush.msra.mxu0 0.0
      %1633 = vmatpush.msra.mxu0 0.0
      %1634 = vmatpush.msra.mxu0 0.0
      %1635 = vmatpush.msra.mxu0 0.0
      %1636 = vmatpush.msra.mxu0 0.0
      %1637 = vmatpush.msra.mxu0 0.0
      %1638 = vmatpush.msra.mxu0 0.0
      %1639 = vmatpush.msra.mxu0 %v1607
      %1640 = vmatpush.msra.mxu0 %v1606
      %1641 = vmatpush.msra.mxu0 %v1605
      %1642 = vmatpush.msra.mxu0 %v1604
      %1643 = vmatmul.f32.gmra.mxu0 %v1625
      %v1644 = vpop.f32.mrf.mxu0
      %v1645 = vadd.f32 %v1622, %v1644
      %1646 = vdwg.mxu0
      %1648 = vrot.lane.b32.xlu0 %v1645, 96
      %v1649 = vpop.permute.xlu0 %1648
      %v1650 = vsel %vm1303, %v1645, 0
      %v1652 = vsel %vm1303, %v1649, 0
      %1654 = vmatpush.xpose.msra.mxu0 0.0
      %1655 = vmatpush.xpose.msra.mxu0 0.0
      %1656 = vmatpush.xpose.msra.mxu0 0.0
      %1657 = vmatpush.xpose.msra.mxu0 0.0
      %1658 = vmatpush.xpose.msra.mxu0 0.0
      %1659 = vmatpush.xpose.msra.mxu0 0.0
      %1660 = vmatpush.xpose.msra.mxu0 0.0
      %1661 = vmatpush.xpose.msra.mxu0 0.0
      %1662 = vmatpush.xpose.msra.mxu0 0.0
      %1663 = vmatpush.xpose.msra.mxu0 0.0
      %1664 = vmatpush.xpose.msra.mxu0 0.0
      %1665 = vmatpush.xpose.msra.mxu0 0.0
      %1666 = vmatpush.xpose.msra.mxu0 0.0
      %1667 = vmatpush.xpose.msra.mxu0 0.0
      %1668 = vmatpush.xpose.msra.mxu0 0.0
      %1669 = vmatpush.xpose.msra.mxu0 %v1652
      %1670 = vmatmul.f32.gmra.mxu0 %v1650
      %v1671 = vpop.f32.mrf.mxu0
      %v1672 = vadd.f32 0.0, %v1671
      %1673 = vdwg.mxu0
      %v1674 = vmul.f32 %v1672, 0.25
      %v1675 = vsel %vm1329, %v1674, -inf
      %1676 = vmax.xlane.f32.xlu0 %v1675
      %v1677 = vpop.xlane.xlu0 %1676
      %v1678 = vsub.f32 %v1674, %v1677
      %v1679 = vmul.f32 %v1678, 1.442695
      %v1680 = vpow.pop %v1679
      %v1681 = vsel %vm1329, %v1680, 0.0
      %1682 = vadd.xlane.f32.xlu0 %v1681
      %v1683 = vpop.xlane.xlu0 %1682
      %v1684 = vrcp.pop %v1683
      %v1685 = vmul.f32 %v1680, %v1684
      %1686 = vrot.lane.b32.xlu0 %v1645, 64
      %v1687 = vpop.permute.xlu0 %1686
      %v1690 = vsel %vm1329, %v1685, 0
      %1692 = vmatpush.msra.mxu0 0.0
      %1693 = vmatpush.msra.mxu0 0.0
      %1694 = vmatpush.msra.mxu0 0.0
      %1695 = vmatpush.msra.mxu0 0.0
      %1696 = vmatpush.msra.mxu0 0.0
      %1697 = vmatpush.msra.mxu0 0.0
      %1698 = vmatpush.msra.mxu0 0.0
      %1699 = vmatpush.msra.mxu0 0.0
      %1700 = vmatpush.msra.mxu0 0.0
      %1701 = vmatpush.msra.mxu0 0.0
      %1702 = vmatpush.msra.mxu0 0.0
      %1703 = vmatpush.msra.mxu0 0.0
      %1704 = vmatpush.msra.mxu0 0.0
      %1705 = vmatpush.msra.mxu0 0.0
      %1706 = vmatpush.msra.mxu0 0.0
      %1707 = vmatpush.msra.mxu0 %v1687
      %1708 = vmatmul.f32.gmra.mxu0 %v1690
      %v1709 = vpop.f32.mrf.mxu0
      %v1710 = vadd.f32 0.0, %v1709
      %1711 = vdwg.mxu0
      %1712 = vrot.lane.b32.xlu0 %v1645, 112
      %v1713 = vpop.permute.xlu0 %1712
      %1714 = vrot.lane.b32.xlu0 %v1645, 80
      %v1715 = vpop.permute.xlu0 %1714
      %v1716 = vsel %vm1303, %v1713, 0
      %v1718 = vsel %vm1303, %v1715, 0
      %1720 = vmatpush.xpose.msra.mxu0 0.0
      %1721 = vmatpush.xpose.msra.mxu0 0.0
      %1722 = vmatpush.xpose.msra.mxu0 0.0
      %1723 = vmatpush.xpose.msra.mxu0 0.0
      %1724 = vmatpush.xpose.msra.mxu0 0.0
      %1725 = vmatpush.xpose.msra.mxu0 0.0
      %1726 = vmatpush.xpose.msra.mxu0 0.0
      %1727 = vmatpush.xpose.msra.mxu0 0.0
      %1728 = vmatpush.xpose.msra.mxu0 0.0
      %1729 = vmatpush.xpose.msra.mxu0 0.0
      %1730 = vmatpush.xpose.msra.mxu0 0.0
      %1731 = vmatpush.xpose.msra.mxu0 0.0
      %1732 = vmatpush.xpose.msra.mxu0 0.0
      %1733 = vmatpush.xpose.msra.mxu0 0.0
      %1734 = vmatpush.xpose.msra.mxu0 0.0
      %1735 = vmatpush.xpose.msra.mxu0 %v1718
      %1736 = vmatmul.f32.gmra.mxu0 %v1716
      %v1737 = vpop.f32.mrf.mxu0
      %v1738 = vadd.f32 0.0, %v1737
      %1739 = vdwg.mxu0
      %v1740 = vmul.f32 %v1738, 0.25
      %v1741 = vsel %vm1329, %v1740, -inf
      %1742 = vmax.xlane.f32.xlu0 %v1741
      %v1743 = vpop.xlane.xlu0 %1742
      %v1744 = vsub.f32 %v1740, %v1743
      %v1745 = vmul.f32 %v1744, 1.442695
      %v1746 = vpow.pop %v1745
      %v1747 = vsel %vm1329, %v1746, 0.0
      %1748 = vadd.xlane.f32.xlu0 %v1747
      %v1749 = vpop.xlane.xlu0 %1748
      %v1750 = vrcp.pop %v1749
      %v1751 = vmul.f32 %v1746, %v1750
      %1752 = vrot.lane.b32.xlu0 %v1645, 48
      %v1753 = vpop.permute.xlu0 %1752
      %v1756 = vsel %vm1329, %v1751, 0
      %1758 = vmatpush.msra.mxu0 0.0
      %1759 = vmatpush.msra.mxu0 0.0
      %1760 = vmatpush.msra.mxu0 0.0
      %1761 = vmatpush.msra.mxu0 0.0
      %1762 = vmatpush.msra.mxu0 0.0
      %1763 = vmatpush.msra.mxu0 0.0
      %1764 = vmatpush.msra.mxu0 0.0
      %1765 = vmatpush.msra.mxu0 0.0
      %1766 = vmatpush.msra.mxu0 0.0
      %1767 = vmatpush.msra.mxu0 0.0
      %1768 = vmatpush.msra.mxu0 0.0
      %1769 = vmatpush.msra.mxu0 0.0
      %1770 = vmatpush.msra.mxu0 0.0
      %1771 = vmatpush.msra.mxu0 0.0
      %1772 = vmatpush.msra.mxu0 0.0
      %1773 = vmatpush.msra.mxu0 %v1753
      %1774 = vmatmul.f32.gmra.mxu0 %v1756
      %v1775 = vpop.f32.mrf.mxu0
      %v1776 = vadd.f32 0.0, %v1775
      %1777 = vdwg.mxu0
      %1779 = vrot.lane.b32.xlu0 %v1776, 16
      %v1780 = vpop.permute.xlu0 %1779
      %v1782 = vsel %vm1303, %v1710, %v1780
      %v1784 = vperm.slane %v1616, 0
      %v1787 = vsel %vm1238, %v1782, 0
      %1789 = vmatpush.msra.mxu0 0.0
      %1790 = vmatpush.msra.mxu0 0.0
      %1791 = vmatpush.msra.mxu0 0.0
      %1792 = vmatpush.msra.mxu0 0.0
      %1793 = vmatpush.msra.mxu0 0.0
      %1794 = vmatpush.msra.mxu0 0.0
      %1795 = vmatpush.msra.mxu0 0.0
      %1796 = vmatpush.msra.mxu0 0.0
      %1797 = vmatpush.msra.mxu0 0.0
      %1798 = vmatpush.msra.mxu0 0.0
      %1799 = vmatpush.msra.mxu0 0.0
      %1800 = vmatpush.msra.mxu0 0.0
      %1801 = vmatpush.msra.mxu0 %v1614
      %1802 = vmatpush.msra.mxu0 %v1613
      %1803 = vmatpush.msra.mxu0 %v1612
      %1804 = vmatpush.msra.mxu0 %v1611
      %1805 = vmatmul.f32.gmra.mxu0 %v1787
      %v1806 = vpop.f32.mrf.mxu0
      %v1807 = vadd.f32 %v1784, %v1806
      %1808 = vdwg.mxu0
      %v1809 = vadd.f32 %v1807, %v1602
      %v1810 = vsel %vm1238, %v1809, 0.0
      %1811 = vadd.xlane.f32.xlu0 %v1810
      %v1812 = vpop.xlane.xlu0 %1811
      %v1813 = vmul.f32 %v1812, %v1474
      %v1814 = vsub.f32 %v1809, %v1813
      %v1815 = vmul.f32 %v1814, %v1814
      %v1816 = vsel %vm1238, %v1815, 0.0
      %1817 = vadd.xlane.f32.xlu0 %v1816
      %v1818 = vpop.xlane.xlu0 %1817
      %v1819 = vmul.f32 %v1818, %v1474
      %v1820 = vadd.f32 %v1819, 1e-05
      %v1821 = vrsqrt.pop %v1820
      %v1822 = vmul.f32 %v1821, %v1820
      %v1823 = vmul.f32 %v1822, %v1821
      %v1824 = vmul.f32 0.5, %v1823
      %v1825 = vsub.f32 1.5, %v1824
      %v1826 = vmul.f32 %v1821, %v1825
      %vm1827 = vweird.f32 %v1820
      %vm1828 = vweird.f32 %v1821
      %vm1829 = vmor %vm1827, %vm1828
      %v1830 = vsel %vm1829, %v1821, %v1826
      %v1831 = vmul.f32 %v1814, %v1830
      %v1833 = vperm.slane %v1618, 0
      %v1835 = vmul.f32 %v1831, %v1833
      %v1837 = vperm.slane %v1620, 0
      %v1839 = vadd.f32 %v1835, %v1837
      %s1840 = scalar_lea.vmem %s25, 32
      %v1841 = vld [vmem:[%s1840] sm:$0xff]
      %v1842 = vld [vmem:[%s1840 + $0x8] sm:$0xff]
      %v1843 = vld [vmem:[%s1840 + $0x10] sm:$0xff]
      %v1844 = vld [vmem:[%s1840 + $0x18] sm:$0xff]
      %s1845 = scalar_lea.vmem %s27, 1
      %v1846 = vld [vmem:[%s1845] sm:$0x1]
      %s1847 = scalar_lea.vmem %s29, 64
      %v1848 = vld [vmem:[%s1847] sm:$0xff]
      %v1849 = vld [vmem:[%s1847 + $0x8] sm:$0xff]
      %v1850 = vld [vmem:[%s1847 + $0x10] sm:$0xff]
      %v1851 = vld [vmem:[%s1847 + $0x18] sm:$0xff]
      %v1852 = vld [vmem:[%s1847 + $0x20] sm:$0xff]
      %v1853 = vld [vmem:[%s1847 + $0x28] sm:$0xff]
      %v1854 = vld [vmem:[%s1847 + $0x30] sm:$0xff]
      %v1855 = vld [vmem:[%s1847 + $0x38] sm:$0xff]
      %s1856 = scalar_lea.vmem %s31, 1
      %v1857 = vld [vmem:[%s1856] sm:$0x1]
      %s1858 = scalar_lea.vmem %s33, 1
      %v1859 = vld [vmem:[%s1858] sm:$0x1]
      %s1860 = scalar_lea.vmem %s35, 1
      %v1861 = vld [vmem:[%s1860] sm:$0x1]
      %v1863 = vperm.slane %v1846, 0
      %v1866 = vsel %vm1238, %v1839, 0
      %1868 = vmatpush.msra.mxu0 0.0
      %1869 = vmatpush.msra.mxu0 0.0
      %1870 = vmatpush.msra.mxu0 0.0
      %1871 = vmatpush.msra.mxu0 0.0
      %1872 = vmatpush.msra.mxu0 0.0
      %1873 = vmatpush.msra.mxu0 0.0
      %1874 = vmatpush.msra.mxu0 0.0
      %1875 = vmatpush.msra.mxu0 0.0
      %1876 = vmatpush.msra.mxu0 0.0
      %1877 = vmatpush.msra.mxu0 0.0
      %1878 = vmatpush.msra.mxu0 0.0
      %1879 = vmatpush.msra.mxu0 0.0
      %1880 = vmatpush.msra.mxu0 %v1844
      %1881 = vmatpush.msra.mxu0 %v1843
      %1882 = vmatpush.msra.mxu0 %v1842
      %1883 = vmatpush.msra.mxu0 %v1841
      %1884 = vmatmul.f32.gmra.mxu0 %v1866
      %v1885 = vpop.f32.mrf.mxu0
      %v1886 = vadd.f32 %v1863, %v1885
      %1887 = vdwg.mxu0
      %v1888 = vmax.f32 %v1886, 0.0
      %v1890 = vperm.slane %v1857, 0
      %v1893 = vsel %vm1548, %v1888, 0
      %1895 = vmatpush.msra.mxu0 0.0
      %1896 = vmatpush.msra.mxu0 0.0
      %1897 = vmatpush.msra.mxu0 0.0
      %1898 = vmatpush.msra.mxu0 0.0
      %1899 = vmatpush.msra.mxu0 0.0
      %1900 = vmatpush.msra.mxu0 0.0
      %1901 = vmatpush.msra.mxu0 0.0
      %1902 = vmatpush.msra.mxu0 0.0
      %1903 = vmatpush.msra.mxu0 %v1855
      %1904 = vmatpush.msra.mxu0 %v1854
      %1905 = vmatpush.msra.mxu0 %v1853
      %1906 = vmatpush.msra.mxu0 %v1852
      %1907 = vmatpush.msra.mxu0 %v1851
      %1908 = vmatpush.msra.mxu0 %v1850
      %1909 = vmatpush.msra.mxu0 %v1849
      %1910 = vmatpush.msra.mxu0 %v1848
      %1911 = vmatmul.f32.gmra.mxu0 %v1893
      %v1912 = vpop.f32.mrf.mxu0
      %v1913 = vadd.f32 %v1890, %v1912
      %1914 = vdwg.mxu0
      %v1915 = vadd.f32 %v1913, %v1839
      %v1916 = vsel %vm1238, %v1915, 0.0
      %1917 = vadd.xlane.f32.xlu0 %v1916
      %v1918 = vpop.xlane.xlu0 %1917
      %v1919 = vmul.f32 %v1918, %v1474
      %v1920 = vsub.f32 %v1915, %v1919
      %v1921 = vmul.f32 %v1920, %v1920
      %v1922 = vsel %vm1238, %v1921, 0.0
      %1923 = vadd.xlane.f32.xlu0 %v1922
      %v1924 = vpop.xlane.xlu0 %1923
      %v1925 = vmul.f32 %v1924, %v1474
      %v1926 = vadd.f32 %v1925, 1e-05
      %v1927 = vrsqrt.pop %v1926
      %v1928 = vmul.f32 %v1927, %v1926
      %v1929 = vmul.f32 %v1928, %v1927
      %v1930 = vmul.f32 0.5, %v1929
      %v1931 = vsub.f32 1.5, %v1930
      %v1932 = vmul.f32 %v1927, %v1931
      %vm1933 = vweird.f32 %v1926
      %vm1934 = vweird.f32 %v1927
      %vm1935 = vmor %vm1933, %vm1934
      %v1936 = vsel %vm1935, %v1927, %v1932
      %v1937 = vmul.f32 %v1920, %v1936
      %v1939 = vperm.slane %v1859, 0
      %v1941 = vmul.f32 %v1937, %v1939
      %v1943 = vperm.slane %v1861, 0
      %v1945 = vadd.f32 %v1941, %v1943
      %v1946 = vld [vmem:[%s1220] sm:$0x7f]
      %v1947 = vld [vmem:[%s1224] sm:$0x7f]
      %v1948 = vld [vmem:[%s1216] sm:$0x7f]
      %v1949 = vld [vmem:[%s37] sm:$0xff]
      %v1950 = vld [vmem:[%s37 + $0x8] sm:$0xff]
      %v1951 = vld [vmem:[%s37 + $0x10] sm:$0xff]
      %v1952 = vld [vmem:[%s37 + $0x18] sm:$0xff]
      %v1953 = vld [vmem:[%s39] sm:$0x1]
      %v1954 = vld [vmem:[%s41] sm:$0xff]
      %v1955 = vld [vmem:[%s41 + $0x8] sm:$0xff]
      %v1956 = vld [vmem:[%s41 + $0x10] sm:$0xff]
      %v1957 = vld [vmem:[%s41 + $0x18] sm:$0xff]
      %v1958 = vld [vmem:[%s43] sm:$0x1]
      %v1959 = vld [vmem:[%s45] sm:$0x1]
      %v1960 = vld [vmem:[%s47] sm:$0x1]
      %v1962 = vperm.slane %v1953, 0
      %v1965 = vsel %vm1238, %v1948, 0
      %1967 = vmatpush.msra.mxu0 0.0
      %1968 = vmatpush.msra.mxu0 0.0
      %1969 = vmatpush.msra.mxu0 0.0
      %1970 = vmatpush.msra.mxu0 0.0
      %1971 = vmatpush.msra.mxu0 0.0
      %1972 = vmatpush.msra.mxu0 0.0
      %1973 = vmatpush.msra.mxu0 0.0
      %1974 = vmatpush.msra.mxu0 0.0
      %1975 = vmatpush.msra.mxu0 0.0
      %1976 = vmatpush.msra.mxu0 0.0
      %1977 = vmatpush.msra.mxu0 0.0
      %1978 = vmatpush.msra.mxu0 0.0
      %1979 = vmatpush.msra.mxu0 %v1952
      %1980 = vmatpush.msra.mxu0 %v1951
      %1981 = vmatpush.msra.mxu0 %v1950
      %1982 = vmatpush.msra.mxu0 %v1949
      %1983 = vmatmul.f32.gmra.mxu0 %v1965
      %v1984 = vpop.f32.mrf.mxu0
      %v1985 = vadd.f32 %v1962, %v1984
      %1986 = vdwg.mxu0
      %1988 = vrot.lane.b32.xlu0 %v1985, 96
      %v1989 = vpop.permute.xlu0 %1988
      %v1990 = vsel %vm1303, %v1985, 0
      %v1992 = vsel %vm1303, %v1989, 0
      %1994 = vmatpush.xpose.msra.mxu0 0.0
      %1995 = vmatpush.xpose.msra.mxu0 0.0
      %1996 = vmatpush.xpose.msra.mxu0 0.0
      %1997 = vmatpush.xpose.msra.mxu0 0.0
      %1998 = vmatpush.xpose.msra.mxu0 0.0
      %1999 = vmatpush.xpose.msra.mxu0 0.0
      %2000 = vmatpush.xpose.msra.mxu0 0.0
      %2001 = vmatpush.xpose.msra.mxu0 0.0
      %2002 = vmatpush.xpose.msra.mxu0 0.0
      %2003 = vmatpush.xpose.msra.mxu0 0.0
      %2004 = vmatpush.xpose.msra.mxu0 0.0
      %2005 = vmatpush.xpose.msra.mxu0 0.0
      %2006 = vmatpush.xpose.msra.mxu0 0.0
      %2007 = vmatpush.xpose.msra.mxu0 0.0
      %2008 = vmatpush.xpose.msra.mxu0 0.0
      %2009 = vmatpush.xpose.msra.mxu0 %v1992
      %2010 = vmatmul.f32.gmra.mxu0 %v1990
      %v2011 = vpop.f32.mrf.mxu0
      %v2012 = vadd.f32 0.0, %v2011
      %2013 = vdwg.mxu0
      %v2014 = vmul.f32 %v2012, 0.25
      %v2015 = vadd.f32 %v2014, %v1946
      %vm2016 = vcmask 55296
      %v2017 = vsel %vm2016, %v2015, -inf
      %2018 = vmax.xlane.f32.xlu0 %v2017
      %v2019 = vpop.xlane.xlu0 %2018
      %v2020 = vsub.f32 %v2015, %v2019
      %v2021 = vmul.f32 %v2020, 1.442695
      %v2022 = vpow.pop %v2021
      %v2023 = vsel %vm2016, %v2022, 0.0
      %2024 = vadd.xlane.f32.xlu0 %v2023
      %v2025 = vpop.xlane.xlu0 %2024
      %v2026 = vrcp.pop %v2025
      %v2027 = vmul.f32 %v2022, %v2026
      %2028 = vrot.lane.b32.xlu0 %v1985, 64
      %v2029 = vpop.permute.xlu0 %2028
      %vm2030 = vcmask 56320
      %v2032 = vsel %vm2030, %v2027, 0
      %vm2034 = vcmask 1046528
      %v2035 = vsel %vm2034, %v2029, 0
      %2037 = vmatpush.msra.mxu0 0.0
      %2038 = vmatpush.msra.mxu0 0.0
      %2039 = vmatpush.msra.mxu0 0.0
      %2040 = vmatpush.msra.mxu0 0.0
      %2041 = vmatpush.msra.mxu0 0.0
      %2042 = vmatpush.msra.mxu0 0.0
      %2043 = vmatpush.msra.mxu0 0.0
      %2044 = vmatpush.msra.mxu0 0.0
      %2045 = vmatpush.msra.mxu0 0.0
      %2046 = vmatpush.msra.mxu0 0.0
      %2047 = vmatpush.msra.mxu0 0.0
      %2048 = vmatpush.msra.mxu0 0.0
      %2049 = vmatpush.msra.mxu0 0.0
      %2050 = vmatpush.msra.mxu0 0.0
      %2051 = vmatpush.msra.mxu0 0.0
      %2052 = vmatpush.msra.mxu0 %v2035
      %2053 = vmatmul.f32.gmra.mxu0 %v2032
      %v2054 = vpop.f32.mrf.mxu0
      %v2055 = vadd.f32 0.0, %v2054
      %2056 = vdwg.mxu0
      %2057 = vrot.lane.b32.xlu0 %v1985, 112
      %v2058 = vpop.permute.xlu0 %2057
      %2059 = vrot.lane.b32.xlu0 %v1985, 80
      %v2060 = vpop.permute.xlu0 %2059
      %v2061 = vsel %vm1303, %v2058, 0
      %v2063 = vsel %vm1303, %v2060, 0
      %2065 = vmatpush.xpose.msra.mxu0 0.0
      %2066 = vmatpush.xpose.msra.mxu0 0.0
      %2067 = vmatpush.xpose.msra.mxu0 0.0
      %2068 = vmatpush.xpose.msra.mxu0 0.0
      %2069 = vmatpush.xpose.msra.mxu0 0.0
      %2070 = vmatpush.xpose.msra.mxu0 0.0
      %2071 = vmatpush.xpose.msra.mxu0 0.0
      %2072 = vmatpush.xpose.msra.mxu0 0.0
      %2073 = vmatpush.xpose.msra.mxu0 0.0
      %2074 = vmatpush.xpose.msra.mxu0 0.0
      %2075 = vmatpush.xpose.msra.mxu0 0.0
      %2076 = vmatpush.xpose.msra.mxu0 0.0
      %2077 = vmatpush.xpose.msra.mxu0 0.0
      %2078 = vmatpush.xpose.msra.mxu0 0.0
      %2079 = vmatpush.xpose.msra.mxu0 0.0
      %2080 = vmatpush.xpose.msra.mxu0 %v2063
      %2081 = vmatmul.f32.gmra.mxu0 %v2061
      %v2082 = vpop.f32.mrf.mxu0
      %v2083 = vadd.f32 0.0, %v2082
      %2084 = vdwg.mxu0
      %v2085 = vmul.f32 %v2083, 0.25
      %v2086 = vadd.f32 %v2085, %v1946
      %v2087 = vsel %vm2016, %v2086, -inf
      %2088 = vmax.xlane.f32.xlu0 %v2087
      %v2089 = vpop.xlane.xlu0 %2088
      %v2090 = vsub.f32 %v2086, %v2089
      %v2091 = vmul.f32 %v2090, 1.442695
      %v2092 = vpow.pop %v2091
      %v2093 = vsel %vm2016, %v2092, 0.0
      %2094 = vadd.xlane.f32.xlu0 %v2093
      %v2095 = vpop.xlane.xlu0 %2094
      %v2096 = vrcp.pop %v2095
      %v2097 = vmul.f32 %v2092, %v2096
      %2098 = vrot.lane.b32.xlu0 %v1985, 48
      %v2099 = vpop.permute.xlu0 %2098
      %v2101 = vsel %vm2030, %v2097, 0
      %v2103 = vsel %vm2034, %v2099, 0
      %2105 = vmatpush.msra.mxu0 0.0
      %2106 = vmatpush.msra.mxu0 0.0
      %2107 = vmatpush.msra.mxu0 0.0
      %2108 = vmatpush.msra.mxu0 0.0
      %2109 = vmatpush.msra.mxu0 0.0
      %2110 = vmatpush.msra.mxu0 0.0
      %2111 = vmatpush.msra.mxu0 0.0
      %2112 = vmatpush.msra.mxu0 0.0
      %2113 = vmatpush.msra.mxu0 0.0
      %2114 = vmatpush.msra.mxu0 0.0
      %2115 = vmatpush.msra.mxu0 0.0
      %2116 = vmatpush.msra.mxu0 0.0
      %2117 = vmatpush.msra.mxu0 0.0
      %2118 = vmatpush.msra.mxu0 0.0
      %2119 = vmatpush.msra.mxu0 0.0
      %2120 = vmatpush.msra.mxu0 %v2103
      %2121 = vmatmul.f32.gmra.mxu0 %v2101
      %v2122 = vpop.f32.mrf.mxu0
      %v2123 = vadd.f32 0.0, %v2122
      %2124 = vdwg.mxu0
      %2126 = vrot.lane.b32.xlu0 %v2123, 16
      %v2127 = vpop.permute.xlu0 %2126
      %v2129 = vsel %vm1303, %v2055, %v2127
      %v2131 = vperm.slane %v1958, 0
      %v2134 = vsel %vm1238, %v2129, 0
      %2136 = vmatpush.msra.mxu0 0.0
      %2137 = vmatpush.msra.mxu0 0.0
      %2138 = vmatpush.msra.mxu0 0.0
      %2139 = vmatpush.msra.mxu0 0.0
      %2140 = vmatpush.msra.mxu0 0.0
      %2141 = vmatpush.msra.mxu0 0.0
      %2142 = vmatpush.msra.mxu0 0.0
      %2143 = vmatpush.msra.mxu0 0.0
      %2144 = vmatpush.msra.mxu0 0.0
      %2145 = vmatpush.msra.mxu0 0.0
      %2146 = vmatpush.msra.mxu0 0.0
      %2147 = vmatpush.msra.mxu0 0.0
      %2148 = vmatpush.msra.mxu0 %v1957
      %2149 = vmatpush.msra.mxu0 %v1956
      %2150 = vmatpush.msra.mxu0 %v1955
      %2151 = vmatpush.msra.mxu0 %v1954
      %2152 = vmatmul.f32.gmra.mxu0 %v2134
      %v2153 = vpop.f32.mrf.mxu0
      %v2154 = vadd.f32 %v2131, %v2153
      %2155 = vdwg.mxu0
      %v2156 = vadd.f32 %v2154, %v1948
      %vm2157 = vcmask 260096
      %v2158 = vsel %vm2157, %v2156, 0.0
      %2159 = vadd.xlane.f32.xlu0 %v2158
      %v2160 = vpop.xlane.xlu0 %2159
      %v2161 = vmul.f32 %v2160, %v1474
      %v2162 = vsub.f32 %v2156, %v2161
      %v2163 = vmul.f32 %v2162, %v2162
      %v2164 = vsel %vm2157, %v2163, 0.0
      %2165 = vadd.xlane.f32.xlu0 %v2164
      %v2166 = vpop.xlane.xlu0 %2165
      %v2167 = vmul.f32 %v2166, %v1474
      %v2168 = vadd.f32 %v2167, 1e-05
      %v2169 = vrsqrt.pop %v2168
      %v2170 = vmul.f32 %v2169, %v2168
      %v2171 = vmul.f32 %v2170, %v2169
      %v2172 = vmul.f32 0.5, %v2171
      %v2173 = vsub.f32 1.5, %v2172
      %v2174 = vmul.f32 %v2169, %v2173
      %vm2175 = vweird.f32 %v2168
      %vm2176 = vweird.f32 %v2169
      %vm2177 = vmor %vm2175, %vm2176
      %v2178 = vsel %vm2177, %v2169, %v2174
      %v2179 = vmul.f32 %v2162, %v2178
      %v2181 = vperm.slane %v1959, 0
      %v2183 = vmul.f32 %v2179, %v2181
      %v2185 = vperm.slane %v1960, 0
      %v2187 = vadd.f32 %v2183, %v2185
      %2189 = vset.pattern.permute.xlu0 0
      %2190 = vperm.xlu0 %2189, %v1947
      %v2191 = vpop.permute.xlu0 %2190
      %v2193 = vmul.f32 %v2187, %v2191
      %v2194 = vld [vmem:[%s49] sm:$0xff]
      %v2195 = vld [vmem:[%s49 + $0x8] sm:$0xff]
      %v2196 = vld [vmem:[%s49 + $0x10] sm:$0xff]
      %v2197 = vld [vmem:[%s49 + $0x18] sm:$0xff]
      %v2198 = vld [vmem:[%s51] sm:$0x1]
      %v2199 = vld [vmem:[%s53] sm:$0xff]
      %v2200 = vld [vmem:[%s53 + $0x8] sm:$0xff]
      %v2201 = vld [vmem:[%s53 + $0x10] sm:$0xff]
      %v2202 = vld [vmem:[%s53 + $0x18] sm:$0xff]
      %v2203 = vld [vmem:[%s55] sm:$0x1]
      %v2204 = vld [vmem:[%s57] sm:$0xff]
      %v2205 = vld [vmem:[%s57 + $0x8] sm:$0xff]
      %v2206 = vld [vmem:[%s57 + $0x10] sm:$0xff]
      %v2207 = vld [vmem:[%s57 + $0x18] sm:$0xff]
      %v2208 = vld [vmem:[%s59] sm:$0x1]
      %v2209 = vld [vmem:[%s61] sm:$0x1]
      %v2210 = vld [vmem:[%s63] sm:$0x1]
      %v2212 = vperm.slane %v2198, 0
      %v2215 = vsel %vm1238, %v2193, 0
      %2217 = vmatpush.msra.mxu0 0.0
      %2218 = vmatpush.msra.mxu0 0.0
      %2219 = vmatpush.msra.mxu0 0.0
      %2220 = vmatpush.msra.mxu0 0.0
      %2221 = vmatpush.msra.mxu0 0.0
      %2222 = vmatpush.msra.mxu0 0.0
      %2223 = vmatpush.msra.mxu0 0.0
      %2224 = vmatpush.msra.mxu0 0.0
      %2225 = vmatpush.msra.mxu0 0.0
      %2226 = vmatpush.msra.mxu0 0.0
      %2227 = vmatpush.msra.mxu0 0.0
      %2228 = vmatpush.msra.mxu0 0.0
      %2229 = vmatpush.msra.mxu0 %v2197
      %2230 = vmatpush.msra.mxu0 %v2196
      %2231 = vmatpush.msra.mxu0 %v2195
      %2232 = vmatpush.msra.mxu0 %v2194
      %2233 = vmatmul.f32.gmra.mxu0 %v2215
      %v2234 = vpop.f32.mrf.mxu0
      %v2235 = vadd.f32 %v2212, %v2234
      %2236 = vdwg.mxu0
      %v2238 = vperm.slane %v2203, 0
      %v2241 = vsel %vm1238, %v1945, 0
      %2243 = vmatpush.msra.mxu0 0.0
      %2244 = vmatpush.msra.mxu0 0.0
      %2245 = vmatpush.msra.mxu0 0.0
      %2246 = vmatpush.msra.mxu0 0.0
      %2247 = vmatpush.msra.mxu0 0.0
      %2248 = vmatpush.msra.mxu0 0.0
      %2249 = vmatpush.msra.mxu0 0.0
      %2250 = vmatpush.msra.mxu0 0.0
      %2251 = vmatpush.msra.mxu0 0.0
      %2252 = vmatpush.msra.mxu0 0.0
      %2253 = vmatpush.msra.mxu0 0.0
      %2254 = vmatpush.msra.mxu0 0.0
      %2255 = vmatpush.msra.mxu0 %v2202
      %2256 = vmatpush.msra.mxu0 %v2201
      %2257 = vmatpush.msra.mxu0 %v2200
      %2258 = vmatpush.msra.mxu0 %v2199
      %2259 = vmatmul.f32.gmra.mxu0 %v2241
      %v2260 = vpop.f32.mrf.mxu0
      %v2261 = vadd.f32 %v2238, %v2260
      %2262 = vdwg.mxu0
      %v2264 = vsel %vm1303, %v2235, 0
      %v2267 = vsel %vm1303, %v2261, 0
      %2269 = vmatpush.xpose.msra.mxu0 0.0
      %2270 = vmatpush.xpose.msra.mxu0 0.0
      %2271 = vmatpush.xpose.msra.mxu0 0.0
      %2272 = vmatpush.xpose.msra.mxu0 0.0
      %2273 = vmatpush.xpose.msra.mxu0 0.0
      %2274 = vmatpush.xpose.msra.mxu0 0.0
      %2275 = vmatpush.xpose.msra.mxu0 0.0
      %2276 = vmatpush.xpose.msra.mxu0 0.0
      %2277 = vmatpush.xpose.msra.mxu0 0.0
      %2278 = vmatpush.xpose.msra.mxu0 0.0
      %2279 = vmatpush.xpose.msra.mxu0 0.0
      %2280 = vmatpush.xpose.msra.mxu0 0.0
      %2281 = vmatpush.xpose.msra.mxu0 0.0
      %2282 = vmatpush.xpose.msra.mxu0 0.0
      %2283 = vmatpush.xpose.msra.mxu0 0.0
      %2284 = vmatpush.xpose.msra.mxu0 %v2267
      %2285 = vmatmul.f32.gmra.mxu0 %v2264
      %v2286 = vpop.f32.mrf.mxu0
      %v2287 = vadd.f32 0.0, %v2286
      %2288 = vdwg.mxu0
      %v2289 = vmul.f32 %v2287, 0.25
      %vm2290 = vcmask 63488
      %v2291 = vsel %vm2290, %v2289, -inf
      %2292 = vmax.xlane.f32.xlu0 %v2291
      %v2293 = vpop.xlane.xlu0 %2292
      %v2294 = vsub.f32 %v2289, %v2293
      %v2295 = vmul.f32 %v2294, 1.442695
      %v2296 = vpow.pop %v2295
      %v2297 = vsel %vm2290, %v2296, 0.0
      %2298 = vadd.xlane.f32.xlu0 %v2297
      %v2299 = vpop.xlane.xlu0 %2298
      %v2300 = vrcp.pop %v2299
      %v2301 = vmul.f32 %v2296, %v2300
      %2302 = vrot.lane.b32.xlu0 %v2261, 96
      %v2303 = vpop.permute.xlu0 %2302
      %v2306 = vsel %vm1329, %v2301, 0
      %2308 = vmatpush.msra.mxu0 0.0
      %2309 = vmatpush.msra.mxu0 0.0
      %2310 = vmatpush.msra.mxu0 0.0
      %2311 = vmatpush.msra.mxu0 0.0
      %2312 = vmatpush.msra.mxu0 0.0
      %2313 = vmatpush.msra.mxu0 0.0
      %2314 = vmatpush.msra.mxu0 0.0
      %2315 = vmatpush.msra.mxu0 0.0
      %2316 = vmatpush.msra.mxu0 0.0
      %2317 = vmatpush.msra.mxu0 0.0
      %2318 = vmatpush.msra.mxu0 0.0
      %2319 = vmatpush.msra.mxu0 0.0
      %2320 = vmatpush.msra.mxu0 0.0
      %2321 = vmatpush.msra.mxu0 0.0
      %2322 = vmatpush.msra.mxu0 0.0
      %2323 = vmatpush.msra.mxu0 %v2303
      %2324 = vmatmul.f32.gmra.mxu0 %v2306
      %v2325 = vpop.f32.mrf.mxu0
      %v2326 = vadd.f32 0.0, %v2325
      %2327 = vdwg.mxu0
      %2328 = vrot.lane.b32.xlu0 %v2235, 112
      %v2329 = vpop.permute.xlu0 %2328
      %2330 = vrot.lane.b32.xlu0 %v2261, 112
      %v2331 = vpop.permute.xlu0 %2330
      %v2332 = vsel %vm1303, %v2329, 0
      %v2334 = vsel %vm1303, %v2331, 0
      %2336 = vmatpush.xpose.msra.mxu0 0.0
      %2337 = vmatpush.xpose.msra.mxu0 0.0
      %2338 = vmatpush.xpose.msra.mxu0 0.0
      %2339 = vmatpush.xpose.msra.mxu0 0.0
      %2340 = vmatpush.xpose.msra.mxu0 0.0
      %2341 = vmatpush.xpose.msra.mxu0 0.0
      %2342 = vmatpush.xpose.msra.mxu0 0.0
      %2343 = vmatpush.xpose.msra.mxu0 0.0
      %2344 = vmatpush.xpose.msra.mxu0 0.0
      %2345 = vmatpush.xpose.msra.mxu0 0.0
      %2346 = vmatpush.xpose.msra.mxu0 0.0
      %2347 = vmatpush.xpose.msra.mxu0 0.0
      %2348 = vmatpush.xpose.msra.mxu0 0.0
      %2349 = vmatpush.xpose.msra.mxu0 0.0
      %2350 = vmatpush.xpose.msra.mxu0 0.0
      %2351 = vmatpush.xpose.msra.mxu0 %v2334
      %2352 = vmatmul.f32.gmra.mxu0 %v2332
      %v2353 = vpop.f32.mrf.mxu0
      %v2354 = vadd.f32 0.0, %v2353
      %2355 = vdwg.mxu0
      %v2356 = vmul.f32 %v2354, 0.25
      %v2357 = vsel %vm2290, %v2356, -inf
      %2358 = vmax.xlane.f32.xlu0 %v2357
      %v2359 = vpop.xlane.xlu0 %2358
      %v2360 = vsub.f32 %v2356, %v2359
      %v2361 = vmul.f32 %v2360, 1.442695
      %v2362 = vpow.pop %v2361
      %v2363 = vsel %vm2290, %v2362, 0.0
      %2364 = vadd.xlane.f32.xlu0 %v2363
      %v2365 = vpop.xlane.xlu0 %2364
      %v2366 = vrcp.pop %v2365
      %v2367 = vmul.f32 %v2362, %v2366
      %2368 = vrot.lane.b32.xlu0 %v2261, 80
      %v2369 = vpop.permute.xlu0 %2368
      %v2372 = vsel %vm1329, %v2367, 0
      %2374 = vmatpush.msra.mxu0 0.0
      %2375 = vmatpush.msra.mxu0 0.0
      %2376 = vmatpush.msra.mxu0 0.0
      %2377 = vmatpush.msra.mxu0 0.0
      %2378 = vmatpush.msra.mxu0 0.0
      %2379 = vmatpush.msra.mxu0 0.0
      %2380 = vmatpush.msra.mxu0 0.0
      %2381 = vmatpush.msra.mxu0 0.0
      %2382 = vmatpush.msra.mxu0 0.0
      %2383 = vmatpush.msra.mxu0 0.0
      %2384 = vmatpush.msra.mxu0 0.0
      %2385 = vmatpush.msra.mxu0 0.0
      %2386 = vmatpush.msra.mxu0 0.0
      %2387 = vmatpush.msra.mxu0 0.0
      %2388 = vmatpush.msra.mxu0 0.0
      %2389 = vmatpush.msra.mxu0 %v2369
      %2390 = vmatmul.f32.gmra.mxu0 %v2372
      %v2391 = vpop.f32.mrf.mxu0
      %v2392 = vadd.f32 0.0, %v2391
      %2393 = vdwg.mxu0
      %2395 = vrot.lane.b32.xlu0 %v2392, 16
      %v2396 = vpop.permute.xlu0 %2395
      %v2398 = vsel %vm1303, %v2326, %v2396
      %v2400 = vperm.slane %v2208, 0
      %v2403 = vsel %vm1238, %v2398, 0
      %2405 = vmatpush.msra.mxu0 0.0
      %2406 = vmatpush.msra.mxu0 0.0
      %2407 = vmatpush.msra.mxu0 0.0
      %2408 = vmatpush.msra.mxu0 0.0
      %2409 = vmatpush.msra.mxu0 0.0
      %2410 = vmatpush.msra.mxu0 0.0
      %2411 = vmatpush.msra.mxu0 0.0
      %2412 = vmatpush.msra.mxu0 0.0
      %2413 = vmatpush.msra.mxu0 0.0
      %2414 = vmatpush.msra.mxu0 0.0
      %2415 = vmatpush.msra.mxu0 0.0
      %2416 = vmatpush.msra.mxu0 0.0
      %2417 = vmatpush.msra.mxu0 %v2207
      %2418 = vmatpush.msra.mxu0 %v2206
      %2419 = vmatpush.msra.mxu0 %v2205
      %2420 = vmatpush.msra.mxu0 %v2204
      %2421 = vmatmul.f32.gmra.mxu0 %v2403
      %v2422 = vpop.f32.mrf.mxu0
      %v2423 = vadd.f32 %v2400, %v2422
      %2424 = vdwg.mxu0
      %v2425 = vadd.f32 %v2423, %v2193
      %v2426 = vsel %vm2157, %v2425, 0.0
      %2427 = vadd.xlane.f32.xlu0 %v2426
      %v2428 = vpop.xlane.xlu0 %2427
      %v2429 = vmul.f32 %v2428, %v1474
      %v2430 = vsub.f32 %v2425, %v2429
      %v2431 = vmul.f32 %v2430, %v2430
      %v2432 = vsel %vm2157, %v2431, 0.0
      %2433 = vadd.xlane.f32.xlu0 %v2432
      %v2434 = vpop.xlane.xlu0 %2433
      %v2435 = vmul.f32 %v2434, %v1474
      %v2436 = vadd.f32 %v2435, 1e-05
      %v2437 = vrsqrt.pop %v2436
      %v2438 = vmul.f32 %v2437, %v2436
      %v2439 = vmul.f32 %v2438, %v2437
      %v2440 = vmul.f32 0.5, %v2439
      %v2441 = vsub.f32 1.5, %v2440
      %v2442 = vmul.f32 %v2437, %v2441
      %vm2443 = vweird.f32 %v2436
      %vm2444 = vweird.f32 %v2437
      %vm2445 = vmor %vm2443, %vm2444
      %v2446 = vsel %vm2445, %v2437, %v2442
      %v2447 = vmul.f32 %v2430, %v2446
      %v2449 = vperm.slane %v2209, 0
      %v2451 = vmul.f32 %v2447, %v2449
      %v2453 = vperm.slane %v2210, 0
      %v2455 = vadd.f32 %v2451, %v2453
      %v2456 = vmul.f32 %v2455, %v2191
      %v2457 = vld [vmem:[%s65] sm:$0xff]
      %v2458 = vld [vmem:[%s65 + $0x8] sm:$0xff]
      %v2459 = vld [vmem:[%s65 + $0x10] sm:$0xff]
      %v2460 = vld [vmem:[%s65 + $0x18] sm:$0xff]
      %v2461 = vld [vmem:[%s67] sm:$0x1]
      %v2462 = vld [vmem:[%s69] sm:$0xff]
      %v2463 = vld [vmem:[%s69 + $0x8] sm:$0xff]
      %v2464 = vld [vmem:[%s69 + $0x10] sm:$0xff]
      %v2465 = vld [vmem:[%s69 + $0x18] sm:$0xff]
      %v2466 = vld [vmem:[%s69 + $0x20] sm:$0xff]
      %v2467 = vld [vmem:[%s69 + $0x28] sm:$0xff]
      %v2468 = vld [vmem:[%s69 + $0x30] sm:$0xff]
      %v2469 = vld [vmem:[%s69 + $0x38] sm:$0xff]
      %v2470 = vld [vmem:[%s71] sm:$0x1]
      %v2471 = vld [vmem:[%s73] sm:$0x1]
      %v2472 = vld [vmem:[%s75] sm:$0x1]
      %v2474 = vperm.slane %v2461, 0
      %v2477 = vsel %vm1238, %v2456, 0
      %2479 = vmatpush.msra.mxu0 0.0
      %2480 = vmatpush.msra.mxu0 0.0
      %2481 = vmatpush.msra.mxu0 0.0
      %2482 = vmatpush.msra.mxu0 0.0
      %2483 = vmatpush.msra.mxu0 0.0
      %2484 = vmatpush.msra.mxu0 0.0
      %2485 = vmatpush.msra.mxu0 0.0
      %2486 = vmatpush.msra.mxu0 0.0
      %2487 = vmatpush.msra.mxu0 0.0
      %2488 = vmatpush.msra.mxu0 0.0
      %2489 = vmatpush.msra.mxu0 0.0
      %2490 = vmatpush.msra.mxu0 0.0
      %2491 = vmatpush.msra.mxu0 %v2460
      %2492 = vmatpush.msra.mxu0 %v2459
      %2493 = vmatpush.msra.mxu0 %v2458
      %2494 = vmatpush.msra.mxu0 %v2457
      %2495 = vmatmul.f32.gmra.mxu0 %v2477
      %v2496 = vpop.f32.mrf.mxu0
      %v2497 = vadd.f32 %v2474, %v2496
      %2498 = vdwg.mxu0
      %v2499 = vmax.f32 %v2497, 0.0
      %v2501 = vperm.slane %v2470, 0
      %v2504 = vsel %vm1548, %v2499, 0
      %2506 = vmatpush.msra.mxu0 0.0
      %2507 = vmatpush.msra.mxu0 0.0
      %2508 = vmatpush.msra.mxu0 0.0
      %2509 = vmatpush.msra.mxu0 0.0
      %2510 = vmatpush.msra.mxu0 0.0
      %2511 = vmatpush.msra.mxu0 0.0
      %2512 = vmatpush.msra.mxu0 0.0
      %2513 = vmatpush.msra.mxu0 0.0
      %2514 = vmatpush.msra.mxu0 %v2469
      %2515 = vmatpush.msra.mxu0 %v2468
      %2516 = vmatpush.msra.mxu0 %v2467
      %2517 = vmatpush.msra.mxu0 %v2466
      %2518 = vmatpush.msra.mxu0 %v2465
      %2519 = vmatpush.msra.mxu0 %v2464
      %2520 = vmatpush.msra.mxu0 %v2463
      %2521 = vmatpush.msra.mxu0 %v2462
      %2522 = vmatmul.f32.gmra.mxu0 %v2504
      %v2523 = vpop.f32.mrf.mxu0
      %v2524 = vadd.f32 %v2501, %v2523
      %2525 = vdwg.mxu0
      %v2526 = vadd.f32 %v2524, %v2456
      %v2527 = vsel %vm2157, %v2526, 0.0
      %2528 = vadd.xlane.f32.xlu0 %v2527
      %v2529 = vpop.xlane.xlu0 %2528
      %v2530 = vmul.f32 %v2529, %v1474
      %v2531 = vsub.f32 %v2526, %v2530
      %v2532 = vmul.f32 %v2531, %v2531
      %v2533 = vsel %vm2157, %v2532, 0.0
      %2534 = vadd.xlane.f32.xlu0 %v2533
      %v2535 = vpop.xlane.xlu0 %2534
      %v2536 = vmul.f32 %v2535, %v1474
      %v2537 = vadd.f32 %v2536, 1e-05
      %v2538 = vrsqrt.pop %v2537
      %v2539 = vmul.f32 %v2538, %v2537
      %v2540 = vmul.f32 %v2539, %v2538
      %v2541 = vmul.f32 0.5, %v2540
      %v2542 = vsub.f32 1.5, %v2541
      %v2543 = vmul.f32 %v2538, %v2542
      %vm2544 = vweird.f32 %v2537
      %vm2545 = vweird.f32 %v2538
      %vm2546 = vmor %vm2544, %vm2545
      %v2547 = vsel %vm2546, %v2538, %v2543
      %v2548 = vmul.f32 %v2531, %v2547
      %v2550 = vperm.slane %v2471, 0
      %v2552 = vmul.f32 %v2548, %v2550
      %v2554 = vperm.slane %v2472, 0
      %v2556 = vadd.f32 %v2552, %v2554
      %v2557 = vmul.f32 %v2556, %v2191
      %s2558 = scalar_lea.vmem %s37, 32
      %v2559 = vld [vmem:[%s2558] sm:$0xff]
      %v2560 = vld [vmem:[%s2558 + $0x8] sm:$0xff]
      %v2561 = vld [vmem:[%s2558 + $0x10] sm:$0xff]
      %v2562 = vld [vmem:[%s2558 + $0x18] sm:$0xff]
      %s2563 = scalar_lea.vmem %s39, 1
      %v2564 = vld [vmem:[%s2563] sm:$0x1]
      %s2565 = scalar_lea.vmem %s41, 32
      %v2566 = vld [vmem:[%s2565] sm:$0xff]
      %v2567 = vld [vmem:[%s2565 + $0x8] sm:$0xff]
      %v2568 = vld [vmem:[%s2565 + $0x10] sm:$0xff]
      %v2569 = vld [vmem:[%s2565 + $0x18] sm:$0xff]
      %s2570 = scalar_lea.vmem %s43, 1
      %v2571 = vld [vmem:[%s2570] sm:$0x1]
      %s2572 = scalar_lea.vmem %s45, 1
      %v2573 = vld [vmem:[%s2572] sm:$0x1]
      %s2574 = scalar_lea.vmem %s47, 1
      %v2575 = vld [vmem:[%s2574] sm:$0x1]
      %v2577 = vperm.slane %v2564, 0
      %v2580 = vsel %vm1238, %v2557, 0
      %2582 = vmatpush.msra.mxu0 0.0
      %2583 = vmatpush.msra.mxu0 0.0
      %2584 = vmatpush.msra.mxu0 0.0
      %2585 = vmatpush.msra.mxu0 0.0
      %2586 = vmatpush.msra.mxu0 0.0
      %2587 = vmatpush.msra.mxu0 0.0
      %2588 = vmatpush.msra.mxu0 0.0
      %2589 = vmatpush.msra.mxu0 0.0
      %2590 = vmatpush.msra.mxu0 0.0
      %2591 = vmatpush.msra.mxu0 0.0
      %2592 = vmatpush.msra.mxu0 0.0
      %2593 = vmatpush.msra.mxu0 0.0
      %2594 = vmatpush.msra.mxu0 %v2562
      %2595 = vmatpush.msra.mxu0 %v2561
      %2596 = vmatpush.msra.mxu0 %v2560
      %2597 = vmatpush.msra.mxu0 %v2559
      %2598 = vmatmul.f32.gmra.mxu0 %v2580
      %v2599 = vpop.f32.mrf.mxu0
      %v2600 = vadd.f32 %v2577, %v2599
      %2601 = vdwg.mxu0
      %2603 = vrot.lane.b32.xlu0 %v2600, 96
      %v2604 = vpop.permute.xlu0 %2603
      %v2605 = vsel %vm1303, %v2600, 0
      %v2607 = vsel %vm1303, %v2604, 0
      %2609 = vmatpush.xpose.msra.mxu0 0.0
      %2610 = vmatpush.xpose.msra.mxu0 0.0
      %2611 = vmatpush.xpose.msra.mxu0 0.0
      %2612 = vmatpush.xpose.msra.mxu0 0.0
      %2613 = vmatpush.xpose.msra.mxu0 0.0
      %2614 = vmatpush.xpose.msra.mxu0 0.0
      %2615 = vmatpush.xpose.msra.mxu0 0.0
      %2616 = vmatpush.xpose.msra.mxu0 0.0
      %2617 = vmatpush.xpose.msra.mxu0 0.0
      %2618 = vmatpush.xpose.msra.mxu0 0.0
      %2619 = vmatpush.xpose.msra.mxu0 0.0
      %2620 = vmatpush.xpose.msra.mxu0 0.0
      %2621 = vmatpush.xpose.msra.mxu0 0.0
      %2622 = vmatpush.xpose.msra.mxu0 0.0
      %2623 = vmatpush.xpose.msra.mxu0 0.0
      %2624 = vmatpush.xpose.msra.mxu0 %v2607
      %2625 = vmatmul.f32.gmra.mxu0 %v2605
      %v2626 = vpop.f32.mrf.mxu0
      %v2627 = vadd.f32 0.0, %v2626
      %2628 = vdwg.mxu0
      %v2629 = vmul.f32 %v2627, 0.25
      %v2630 = vadd.f32 %v2629, %v1946
      %v2631 = vsel %vm2016, %v2630, -inf
      %2632 = vmax.xlane.f32.xlu0 %v2631
      %v2633 = vpop.xlane.xlu0 %2632
      %v2634 = vsub.f32 %v2630, %v2633
      %v2635 = vmul.f32 %v2634, 1.442695
      %v2636 = vpow.pop %v2635
      %v2637 = vsel %vm2016, %v2636, 0.0
      %2638 = vadd.xlane.f32.xlu0 %v2637
      %v2639 = vpop.xlane.xlu0 %2638
      %v2640 = vrcp.pop %v2639
      %v2641 = vmul.f32 %v2636, %v2640
      %2642 = vrot.lane.b32.xlu0 %v2600, 64
      %v2643 = vpop.permute.xlu0 %2642
      %v2645 = vsel %vm2030, %v2641, 0
      %v2647 = vsel %vm2034, %v2643, 0
      %2649 = vmatpush.msra.mxu0 0.0
      %2650 = vmatpush.msra.mxu0 0.0
      %2651 = vmatpush.msra.mxu0 0.0
      %2652 = vmatpush.msra.mxu0 0.0
      %2653 = vmatpush.msra.mxu0 0.0
      %2654 = vmatpush.msra.mxu0 0.0
      %2655 = vmatpush.msra.mxu0 0.0
      %2656 = vmatpush.msra.mxu0 0.0
      %2657 = vmatpush.msra.mxu0 0.0
      %2658 = vmatpush.msra.mxu0 0.0
      %2659 = vmatpush.msra.mxu0 0.0
      %2660 = vmatpush.msra.mxu0 0.0
      %2661 = vmatpush.msra.mxu0 0.0
      %2662 = vmatpush.msra.mxu0 0.0
      %2663 = vmatpush.msra.mxu0 0.0
      %2664 = vmatpush.msra.mxu0 %v2647
      %2665 = vmatmul.f32.gmra.mxu0 %v2645
      %v2666 = vpop.f32.mrf.mxu0
      %v2667 = vadd.f32 0.0, %v2666
      %2668 = vdwg.mxu0
      %2669 = vrot.lane.b32.xlu0 %v2600, 112
      %v2670 = vpop.permute.xlu0 %2669
      %2671 = vrot.lane.b32.xlu0 %v2600, 80
      %v2672 = vpop.permute.xlu0 %2671
      %v2673 = vsel %vm1303, %v2670, 0
      %v2675 = vsel %vm1303, %v2672, 0
      %2677 = vmatpush.xpose.msra.mxu0 0.0
      %2678 = vmatpush.xpose.msra.mxu0 0.0
      %2679 = vmatpush.xpose.msra.mxu0 0.0
      %2680 = vmatpush.xpose.msra.mxu0 0.0
      %2681 = vmatpush.xpose.msra.mxu0 0.0
      %2682 = vmatpush.xpose.msra.mxu0 0.0
      %2683 = vmatpush.xpose.msra.mxu0 0.0
      %2684 = vmatpush.xpose.msra.mxu0 0.0
      %2685 = vmatpush.xpose.msra.mxu0 0.0
      %2686 = vmatpush.xpose.msra.mxu0 0.0
      %2687 = vmatpush.xpose.msra.mxu0 0.0
      %2688 = vmatpush.xpose.msra.mxu0 0.0
      %2689 = vmatpush.xpose.msra.mxu0 0.0
      %2690 = vmatpush.xpose.msra.mxu0 0.0
      %2691 = vmatpush.xpose.msra.mxu0 0.0
      %2692 = vmatpush.xpose.msra.mxu0 %v2675
      %2693 = vmatmul.f32.gmra.mxu0 %v2673
      %v2694 = vpop.f32.mrf.mxu0
      %v2695 = vadd.f32 0.0, %v2694
      %2696 = vdwg.mxu0
      %v2697 = vmul.f32 %v2695, 0.25
      %v2698 = vadd.f32 %v2697, %v1946
      %v2699 = vsel %vm2016, %v2698, -inf
      %2700 = vmax.xlane.f32.xlu0 %v2699
      %v2701 = vpop.xlane.xlu0 %2700
      %v2702 = vsub.f32 %v2698, %v2701
      %v2703 = vmul.f32 %v2702, 1.442695
      %v2704 = vpow.pop %v2703
      %v2705 = vsel %vm2016, %v2704, 0.0
      %2706 = vadd.xlane.f32.xlu0 %v2705
      %v2707 = vpop.xlane.xlu0 %2706
      %v2708 = vrcp.pop %v2707
      %v2709 = vmul.f32 %v2704, %v2708
      %2710 = vrot.lane.b32.xlu0 %v2600, 48
      %v2711 = vpop.permute.xlu0 %2710
      %v2713 = vsel %vm2030, %v2709, 0
      %v2715 = vsel %vm2034, %v2711, 0
      %2717 = vmatpush.msra.mxu0 0.0
      %2718 = vmatpush.msra.mxu0 0.0
      %2719 = vmatpush.msra.mxu0 0.0
      %2720 = vmatpush.msra.mxu0 0.0
      %2721 = vmatpush.msra.mxu0 0.0
      %2722 = vmatpush.msra.mxu0 0.0
      %2723 = vmatpush.msra.mxu0 0.0
      %2724 = vmatpush.msra.mxu0 0.0
      %2725 = vmatpush.msra.mxu0 0.0
      %2726 = vmatpush.msra.mxu0 0.0
      %2727 = vmatpush.msra.mxu0 0.0
      %2728 = vmatpush.msra.mxu0 0.0
      %2729 = vmatpush.msra.mxu0 0.0
      %2730 = vmatpush.msra.mxu0 0.0
      %2731 = vmatpush.msra.mxu0 0.0
      %2732 = vmatpush.msra.mxu0 %v2715
      %2733 = vmatmul.f32.gmra.mxu0 %v2713
      %v2734 = vpop.f32.mrf.mxu0
      %v2735 = vadd.f32 0.0, %v2734
      %2736 = vdwg.mxu0
      %2738 = vrot.lane.b32.xlu0 %v2735, 16
      %v2739 = vpop.permute.xlu0 %2738
      %v2741 = vsel %vm1303, %v2667, %v2739
      %v2743 = vperm.slane %v2571, 0
      %v2746 = vsel %vm1238, %v2741, 0
      %2748 = vmatpush.msra.mxu0 0.0
      %2749 = vmatpush.msra.mxu0 0.0
      %2750 = vmatpush.msra.mxu0 0.0
      %2751 = vmatpush.msra.mxu0 0.0
      %2752 = vmatpush.msra.mxu0 0.0
      %2753 = vmatpush.msra.mxu0 0.0
      %2754 = vmatpush.msra.mxu0 0.0
      %2755 = vmatpush.msra.mxu0 0.0
      %2756 = vmatpush.msra.mxu0 0.0
      %2757 = vmatpush.msra.mxu0 0.0
      %2758 = vmatpush.msra.mxu0 0.0
      %2759 = vmatpush.msra.mxu0 0.0
      %2760 = vmatpush.msra.mxu0 %v2569
      %2761 = vmatpush.msra.mxu0 %v2568
      %2762 = vmatpush.msra.mxu0 %v2567
      %2763 = vmatpush.msra.mxu0 %v2566
      %2764 = vmatmul.f32.gmra.mxu0 %v2746
      %v2765 = vpop.f32.mrf.mxu0
      %v2766 = vadd.f32 %v2743, %v2765
      %2767 = vdwg.mxu0
      %v2768 = vadd.f32 %v2766, %v2557
      %v2769 = vsel %vm2157, %v2768, 0.0
      %2770 = vadd.xlane.f32.xlu0 %v2769
      %v2771 = vpop.xlane.xlu0 %2770
      %v2772 = vmul.f32 %v2771, %v1474
      %v2773 = vsub.f32 %v2768, %v2772
      %v2774 = vmul.f32 %v2773, %v2773
      %v2775 = vsel %vm2157, %v2774, 0.0
      %2776 = vadd.xlane.f32.xlu0 %v2775
      %v2777 = vpop.xlane.xlu0 %2776
      %v2778 = vmul.f32 %v2777, %v1474
      %v2779 = vadd.f32 %v2778, 1e-05
      %v2780 = vrsqrt.pop %v2779
      %v2781 = vmul.f32 %v2780, %v2779
      %v2782 = vmul.f32 %v2781, %v2780
      %v2783 = vmul.f32 0.5, %v2782
      %v2784 = vsub.f32 1.5, %v2783
      %v2785 = vmul.f32 %v2780, %v2784
      %vm2786 = vweird.f32 %v2779
      %vm2787 = vweird.f32 %v2780
      %vm2788 = vmor %vm2786, %vm2787
      %v2789 = vsel %vm2788, %v2780, %v2785
      %v2790 = vmul.f32 %v2773, %v2789
      %v2792 = vperm.slane %v2573, 0
      %v2794 = vmul.f32 %v2790, %v2792
      %v2796 = vperm.slane %v2575, 0
      %v2798 = vadd.f32 %v2794, %v2796
      %v2799 = vmul.f32 %v2798, %v2191
      %s2800 = scalar_lea.vmem %s49, 32
      %v2801 = vld [vmem:[%s2800] sm:$0xff]
      %v2802 = vld [vmem:[%s2800 + $0x8] sm:$0xff]
      %v2803 = vld [vmem:[%s2800 + $0x10] sm:$0xff]
      %v2804 = vld [vmem:[%s2800 + $0x18] sm:$0xff]
      %s2805 = scalar_lea.vmem %s51, 1
      %v2806 = vld [vmem:[%s2805] sm:$0x1]
      %s2807 = scalar_lea.vmem %s53, 32
      %v2808 = vld [vmem:[%s2807] sm:$0xff]
      %v2809 = vld [vmem:[%s2807 + $0x8] sm:$0xff]
      %v2810 = vld [vmem:[%s2807 + $0x10] sm:$0xff]
      %v2811 = vld [vmem:[%s2807 + $0x18] sm:$0xff]
      %s2812 = scalar_lea.vmem %s55, 1
      %v2813 = vld [vmem:[%s2812] sm:$0x1]
      %s2814 = scalar_lea.vmem %s57, 32
      %v2815 = vld [vmem:[%s2814] sm:$0xff]
      %v2816 = vld [vmem:[%s2814 + $0x8] sm:$0xff]
      %v2817 = vld [vmem:[%s2814 + $0x10] sm:$0xff]
      %v2818 = vld [vmem:[%s2814 + $0x18] sm:$0xff]
      %s2819 = scalar_lea.vmem %s59, 1
      %v2820 = vld [vmem:[%s2819] sm:$0x1]
      %s2821 = scalar_lea.vmem %s61, 1
      %v2822 = vld [vmem:[%s2821] sm:$0x1]
      %s2823 = scalar_lea.vmem %s63, 1
      %v2824 = vld [vmem:[%s2823] sm:$0x1]
      %v2826 = vperm.slane %v2806, 0
      %v2829 = vsel %vm1238, %v2799, 0
      %2831 = vmatpush.msra.mxu0 0.0
      %2832 = vmatpush.msra.mxu0 0.0
      %2833 = vmatpush.msra.mxu0 0.0
      %2834 = vmatpush.msra.mxu0 0.0
      %2835 = vmatpush.msra.mxu0 0.0
      %2836 = vmatpush.msra.mxu0 0.0
      %2837 = vmatpush.msra.mxu0 0.0
      %2838 = vmatpush.msra.mxu0 0.0
      %2839 = vmatpush.msra.mxu0 0.0
      %2840 = vmatpush.msra.mxu0 0.0
      %2841 = vmatpush.msra.mxu0 0.0
      %2842 = vmatpush.msra.mxu0 0.0
      %2843 = vmatpush.msra.mxu0 %v2804
      %2844 = vmatpush.msra.mxu0 %v2803
      %2845 = vmatpush.msra.mxu0 %v2802
      %2846 = vmatpush.msra.mxu0 %v2801
      %2847 = vmatmul.f32.gmra.mxu0 %v2829
      %v2848 = vpop.f32.mrf.mxu0
      %v2849 = vadd.f32 %v2826, %v2848
      %2850 = vdwg.mxu0
      %v2852 = vperm.slane %v2813, 0
      %2854 = vmatpush.msra.mxu0 0.0
      %2855 = vmatpush.msra.mxu0 0.0
      %2856 = vmatpush.msra.mxu0 0.0
      %2857 = vmatpush.msra.mxu0 0.0
      %2858 = vmatpush.msra.mxu0 0.0
      %2859 = vmatpush.msra.mxu0 0.0
      %2860 = vmatpush.msra.mxu0 0.0
      %2861 = vmatpush.msra.mxu0 0.0
      %2862 = vmatpush.msra.mxu0 0.0
      %2863 = vmatpush.msra.mxu0 0.0
      %2864 = vmatpush.msra.mxu0 0.0
      %2865 = vmatpush.msra.mxu0 0.0
      %2866 = vmatpush.msra.mxu0 %v2811
      %2867 = vmatpush.msra.mxu0 %v2810
      %2868 = vmatpush.msra.mxu0 %v2809
      %2869 = vmatpush.msra.mxu0 %v2808
      %2870 = vmatmul.f32.gmra.mxu0 %v2241
      %v2871 = vpop.f32.mrf.mxu0
      %v2872 = vadd.f32 %v2852, %v2871
      %2873 = vdwg.mxu0
      %v2875 = vsel %vm1303, %v2849, 0
      %v2878 = vsel %vm1303, %v2872, 0
      %2880 = vmatpush.xpose.msra.mxu0 0.0
      %2881 = vmatpush.xpose.msra.mxu0 0.0
      %2882 = vmatpush.xpose.msra.mxu0 0.0
      %2883 = vmatpush.xpose.msra.mxu0 0.0
      %2884 = vmatpush.xpose.msra.mxu0 0.0
      %2885 = vmatpush.xpose.msra.mxu0 0.0
      %2886 = vmatpush.xpose.msra.mxu0 0.0
      %2887 = vmatpush.xpose.msra.mxu0 0.0
      %2888 = vmatpush.xpose.msra.mxu0 0.0
      %2889 = vmatpush.xpose.msra.mxu0 0.0
      %2890 = vmatpush.xpose.msra.mxu0 0.0
      %2891 = vmatpush.xpose.msra.mxu0 0.0
      %2892 = vmatpush.xpose.msra.mxu0 0.0
      %2893 = vmatpush.xpose.msra.mxu0 0.0
      %2894 = vmatpush.xpose.msra.mxu0 0.0
      %2895 = vmatpush.xpose.msra.mxu0 %v2878
      %2896 = vmatmul.f32.gmra.mxu0 %v2875
      %v2897 = vpop.f32.mrf.mxu0
      %v2898 = vadd.f32 0.0, %v2897
      %2899 = vdwg.mxu0
      %v2900 = vmul.f32 %v2898, 0.25
      %v2901 = vsel %vm2290, %v2900, -inf
      %2902 = vmax.xlane.f32.xlu0 %v2901
      %v2903 = vpop.xlane.xlu0 %2902
      %v2904 = vsub.f32 %v2900, %v2903
      %v2905 = vmul.f32 %v2904, 1.442695
      %v2906 = vpow.pop %v2905
      %v2907 = vsel %vm2290, %v2906, 0.0
      %2908 = vadd.xlane.f32.xlu0 %v2907
      %v2909 = vpop.xlane.xlu0 %2908
      %v2910 = vrcp.pop %v2909
      %v2911 = vmul.f32 %v2906, %v2910
      %2912 = vrot.lane.b32.xlu0 %v2872, 96
      %v2913 = vpop.permute.xlu0 %2912
      %v2916 = vsel %vm1329, %v2911, 0
      %2918 = vmatpush.msra.mxu0 0.0
      %2919 = vmatpush.msra.mxu0 0.0
      %2920 = vmatpush.msra.mxu0 0.0
      %2921 = vmatpush.msra.mxu0 0.0
      %2922 = vmatpush.msra.mxu0 0.0
      %2923 = vmatpush.msra.mxu0 0.0
      %2924 = vmatpush.msra.mxu0 0.0
      %2925 = vmatpush.msra.mxu0 0.0
      %2926 = vmatpush.msra.mxu0 0.0
      %2927 = vmatpush.msra.mxu0 0.0
      %2928 = vmatpush.msra.mxu0 0.0
      %2929 = vmatpush.msra.mxu0 0.0
      %2930 = vmatpush.msra.mxu0 0.0
      %2931 = vmatpush.msra.mxu0 0.0
      %2932 = vmatpush.msra.mxu0 0.0
      %2933 = vmatpush.msra.mxu0 %v2913
      %2934 = vmatmul.f32.gmra.mxu0 %v2916
      %v2935 = vpop.f32.mrf.mxu0
      %v2936 = vadd.f32 0.0, %v2935
      %2937 = vdwg.mxu0
      %2938 = vrot.lane.b32.xlu0 %v2849, 112
      %v2939 = vpop.permute.xlu0 %2938
      %2940 = vrot.lane.b32.xlu0 %v2872, 112
      %v2941 = vpop.permute.xlu0 %2940
      %v2942 = vsel %vm1303, %v2939, 0
      %v2944 = vsel %vm1303, %v2941, 0
      %2946 = vmatpush.xpose.msra.mxu0 0.0
      %2947 = vmatpush.xpose.msra.mxu0 0.0
      %2948 = vmatpush.xpose.msra.mxu0 0.0
      %2949 = vmatpush.xpose.msra.mxu0 0.0
      %2950 = vmatpush.xpose.msra.mxu0 0.0
      %2951 = vmatpush.xpose.msra.mxu0 0.0
      %2952 = vmatpush.xpose.msra.mxu0 0.0
      %2953 = vmatpush.xpose.msra.mxu0 0.0
      %2954 = vmatpush.xpose.msra.mxu0 0.0
      %2955 = vmatpush.xpose.msra.mxu0 0.0
      %2956 = vmatpush.xpose.msra.mxu0 0.0
      %2957 = vmatpush.xpose.msra.mxu0 0.0
      %2958 = vmatpush.xpose.msra.mxu0 0.0
      %2959 = vmatpush.xpose.msra.mxu0 0.0
      %2960 = vmatpush.xpose.msra.mxu0 0.0
      %2961 = vmatpush.xpose.msra.mxu0 %v2944
      %2962 = vmatmul.f32.gmra.mxu0 %v2942
      %v2963 = vpop.f32.mrf.mxu0
      %v2964 = vadd.f32 0.0, %v2963
      %2965 = vdwg.mxu0
      %v2966 = vmul.f32 %v2964, 0.25
      %v2967 = vsel %vm2290, %v2966, -inf
      %2968 = vmax.xlane.f32.xlu0 %v2967
      %v2969 = vpop.xlane.xlu0 %2968
      %v2970 = vsub.f32 %v2966, %v2969
      %v2971 = vmul.f32 %v2970, 1.442695
      %v2972 = vpow.pop %v2971
      %v2973 = vsel %vm2290, %v2972, 0.0
      %2974 = vadd.xlane.f32.xlu0 %v2973
      %v2975 = vpop.xlane.xlu0 %2974
      %v2976 = vrcp.pop %v2975
      %v2977 = vmul.f32 %v2972, %v2976
      %2978 = vrot.lane.b32.xlu0 %v2872, 80
      %v2979 = vpop.permute.xlu0 %2978
      %v2982 = vsel %vm1329, %v2977, 0
      %2984 = vmatpush.msra.mxu0 0.0
      %2985 = vmatpush.msra.mxu0 0.0
      %2986 = vmatpush.msra.mxu0 0.0
      %2987 = vmatpush.msra.mxu0 0.0
      %2988 = vmatpush.msra.mxu0 0.0
      %2989 = vmatpush.msra.mxu0 0.0
      %2990 = vmatpush.msra.mxu0 0.0
      %2991 = vmatpush.msra.mxu0 0.0
      %2992 = vmatpush.msra.mxu0 0.0
      %2993 = vmatpush.msra.mxu0 0.0
      %2994 = vmatpush.msra.mxu0 0.0
      %2995 = vmatpush.msra.mxu0 0.0
      %2996 = vmatpush.msra.mxu0 0.0
      %2997 = vmatpush.msra.mxu0 0.0
      %2998 = vmatpush.msra.mxu0 0.0
      %2999 = vmatpush.msra.mxu0 %v2979
      %3000 = vmatmul.f32.gmra.mxu0 %v2982
      %v3001 = vpop.f32.mrf.mxu0
      %v3002 = vadd.f32 0.0, %v3001
      %3003 = vdwg.mxu0
      %3005 = vrot.lane.b32.xlu0 %v3002, 16
      %v3006 = vpop.permute.xlu0 %3005
      %v3008 = vsel %vm1303, %v2936, %v3006
      %v3010 = vperm.slane %v2820, 0
      %v3013 = vsel %vm1238, %v3008, 0
      %3015 = vmatpush.msra.mxu0 0.0
      %3016 = vmatpush.msra.mxu0 0.0
      %3017 = vmatpush.msra.mxu0 0.0
      %3018 = vmatpush.msra.mxu0 0.0
      %3019 = vmatpush.msra.mxu0 0.0
      %3020 = vmatpush.msra.mxu0 0.0
      %3021 = vmatpush.msra.mxu0 0.0
      %3022 = vmatpush.msra.mxu0 0.0
      %3023 = vmatpush.msra.mxu0 0.0
      %3024 = vmatpush.msra.mxu0 0.0
      %3025 = vmatpush.msra.mxu0 0.0
      %3026 = vmatpush.msra.mxu0 0.0
      %3027 = vmatpush.msra.mxu0 %v2818
      %3028 = vmatpush.msra.mxu0 %v2817
      %3029 = vmatpush.msra.mxu0 %v2816
      %3030 = vmatpush.msra.mxu0 %v2815
      %3031 = vmatmul.f32.gmra.mxu0 %v3013
      %v3032 = vpop.f32.mrf.mxu0
      %v3033 = vadd.f32 %v3010, %v3032
      %3034 = vdwg.mxu0
      %v3035 = vadd.f32 %v3033, %v2799
      %v3036 = vsel %vm2157, %v3035, 0.0
      %3037 = vadd.xlane.f32.xlu0 %v3036
      %v3038 = vpop.xlane.xlu0 %3037
      %v3039 = vmul.f32 %v3038, %v1474
      %v3040 = vsub.f32 %v3035, %v3039
      %v3041 = vmul.f32 %v3040, %v3040
      %v3042 = vsel %vm2157, %v3041, 0.0
      %3043 = vadd.xlane.f32.xlu0 %v3042
      %v3044 = vpop.xlane.xlu0 %3043
      %v3045 = vmul.f32 %v3044, %v1474
      %v3046 = vadd.f32 %v3045, 1e-05
      %v3047 = vrsqrt.pop %v3046
      %v3048 = vmul.f32 %v3047, %v3046
      %v3049 = vmul.f32 %v3048, %v3047
      %v3050 = vmul.f32 0.5, %v3049
      %v3051 = vsub.f32 1.5, %v3050
      %v3052 = vmul.f32 %v3047, %v3051
      %vm3053 = vweird.f32 %v3046
      %vm3054 = vweird.f32 %v3047
      %vm3055 = vmor %vm3053, %vm3054
      %v3056 = vsel %vm3055, %v3047, %v3052
      %v3057 = vmul.f32 %v3040, %v3056
      %v3059 = vperm.slane %v2822, 0
      %v3061 = vmul.f32 %v3057, %v3059
      %v3063 = vperm.slane %v2824, 0
      %v3065 = vadd.f32 %v3061, %v3063
      %v3066 = vmul.f32 %v3065, %v2191
      %s3067 = scalar_lea.vmem %s65, 32
      %v3068 = vld [vmem:[%s3067] sm:$0xff]
      %v3069 = vld [vmem:[%s3067 + $0x8] sm:$0xff]
      %v3070 = vld [vmem:[%s3067 + $0x10] sm:$0xff]
      %v3071 = vld [vmem:[%s3067 + $0x18] sm:$0xff]
      %s3072 = scalar_lea.vmem %s67, 1
      %v3073 = vld [vmem:[%s3072] sm:$0x1]
      %s3074 = scalar_lea.vmem %s69, 64
      %v3075 = vld [vmem:[%s3074] sm:$0xff]
      %v3076 = vld [vmem:[%s3074 + $0x8] sm:$0xff]
      %v3077 = vld [vmem:[%s3074 + $0x10] sm:$0xff]
      %v3078 = vld [vmem:[%s3074 + $0x18] sm:$0xff]
      %v3079 = vld [vmem:[%s3074 + $0x20] sm:$0xff]
      %v3080 = vld [vmem:[%s3074 + $0x28] sm:$0xff]
      %v3081 = vld [vmem:[%s3074 + $0x30] sm:$0xff]
      %v3082 = vld [vmem:[%s3074 + $0x38] sm:$0xff]
      %s3083 = scalar_lea.vmem %s71, 1
      %v3084 = vld [vmem:[%s3083] sm:$0x1]
      %s3085 = scalar_lea.vmem %s73, 1
      %v3086 = vld [vmem:[%s3085] sm:$0x1]
      %s3087 = scalar_lea.vmem %s75, 1
      %v3088 = vld [vmem:[%s3087] sm:$0x1]
      %v3090 = vperm.slane %v3073, 0
      %v3093 = vsel %vm1238, %v3066, 0
      %3095 = vmatpush.msra.mxu0 0.0
      %3096 = vmatpush.msra.mxu0 0.0
      %3097 = vmatpush.msra.mxu0 0.0
      %3098 = vmatpush.msra.mxu0 0.0
      %3099 = vmatpush.msra.mxu0 0.0
      %3100 = vmatpush.msra.mxu0 0.0
      %3101 = vmatpush.msra.mxu0 0.0
      %3102 = vmatpush.msra.mxu0 0.0
      %3103 = vmatpush.msra.mxu0 0.0
      %3104 = vmatpush.msra.mxu0 0.0
      %3105 = vmatpush.msra.mxu0 0.0
      %3106 = vmatpush.msra.mxu0 0.0
      %3107 = vmatpush.msra.mxu0 %v3071
      %3108 = vmatpush.msra.mxu0 %v3070
      %3109 = vmatpush.msra.mxu0 %v3069
      %3110 = vmatpush.msra.mxu0 %v3068
      %3111 = vmatmul.f32.gmra.mxu0 %v3093
      %v3112 = vpop.f32.mrf.mxu0
      %v3113 = vadd.f32 %v3090, %v3112
      %3114 = vdwg.mxu0
      %v3115 = vmax.f32 %v3113, 0.0
      %v3117 = vperm.slane %v3084, 0
      %v3120 = vsel %vm1548, %v3115, 0
      %3122 = vmatpush.msra.mxu0 0.0
      %3123 = vmatpush.msra.mxu0 0.0
      %3124 = vmatpush.msra.mxu0 0.0
      %3125 = vmatpush.msra.mxu0 0.0
      %3126 = vmatpush.msra.mxu0 0.0
      %3127 = vmatpush.msra.mxu0 0.0
      %3128 = vmatpush.msra.mxu0 0.0
      %3129 = vmatpush.msra.mxu0 0.0
      %3130 = vmatpush.msra.mxu0 %v3082
      %3131 = vmatpush.msra.mxu0 %v3081
      %3132 = vmatpush.msra.mxu0 %v3080
      %3133 = vmatpush.msra.mxu0 %v3079
      %3134 = vmatpush.msra.mxu0 %v3078
      %3135 = vmatpush.msra.mxu0 %v3077
      %3136 = vmatpush.msra.mxu0 %v3076
      %3137 = vmatpush.msra.mxu0 %v3075
      %3138 = vmatmul.f32.gmra.mxu0 %v3120
      %v3139 = vpop.f32.mrf.mxu0
      %v3140 = vadd.f32 %v3117, %v3139
      %3141 = vdwg.mxu0
      %v3142 = vadd.f32 %v3140, %v3066
      %v3143 = vsel %vm2157, %v3142, 0.0
      %3144 = vadd.xlane.f32.xlu0 %v3143
      %v3145 = vpop.xlane.xlu0 %3144
      %v3146 = vmul.f32 %v3145, %v1474
      %v3147 = vsub.f32 %v3142, %v3146
      %v3148 = vmul.f32 %v3147, %v3147
      %v3149 = vsel %vm2157, %v3148, 0.0
      %3150 = vadd.xlane.f32.xlu0 %v3149
      %v3151 = vpop.xlane.xlu0 %3150
      %v3152 = vmul.f32 %v3151, %v1474
      %v3153 = vadd.f32 %v3152, 1e-05
      %v3154 = vrsqrt.pop %v3153
      %v3155 = vmul.f32 %v3154, %v3153
      %v3156 = vmul.f32 %v3155, %v3154
      %v3157 = vmul.f32 0.5, %v3156
      %v3158 = vsub.f32 1.5, %v3157
      %v3159 = vmul.f32 %v3154, %v3158
      %vm3160 = vweird.f32 %v3153
      %vm3161 = vweird.f32 %v3154
      %vm3162 = vmor %vm3160, %vm3161
      %v3163 = vsel %vm3162, %v3154, %v3159
      %v3164 = vmul.f32 %v3147, %v3163
      %v3166 = vperm.slane %v3086, 0
      %v3168 = vmul.f32 %v3164, %v3166
      %v3170 = vperm.slane %v3088, 0
      %v3172 = vadd.f32 %v3168, %v3170
      %v3173 = vmul.f32 %v3172, %v2191
      %v3174 = vld [vmem:[%s77] sm:$0xff]
      %v3175 = vld [vmem:[%s77 + $0x8] sm:$0xff]
      %v3176 = vld [vmem:[%s77 + $0x10] sm:$0xff]
      %v3177 = vld [vmem:[%s77 + $0x18] sm:$0xff]
      %v3179 = vsel %vm1238, %v3173, 0
      %3181 = vmatpush.msra.mxu0 0.0
      %3182 = vmatpush.msra.mxu0 0.0
      %3183 = vmatpush.msra.mxu0 0.0
      %3184 = vmatpush.msra.mxu0 0.0
      %3185 = vmatpush.msra.mxu0 0.0
      %3186 = vmatpush.msra.mxu0 0.0
      %3187 = vmatpush.msra.mxu0 0.0
      %3188 = vmatpush.msra.mxu0 0.0
      %3189 = vmatpush.msra.mxu0 0.0
      %3190 = vmatpush.msra.mxu0 0.0
      %3191 = vmatpush.msra.mxu0 0.0
      %3192 = vmatpush.msra.mxu0 0.0
      %3193 = vmatpush.msra.mxu0 %v3177
      %3194 = vmatpush.msra.mxu0 %v3176
      %3195 = vmatpush.msra.mxu0 %v3175
      %3196 = vmatpush.msra.mxu0 %v3174
      %3197 = vmatmul.f32.gmra.mxu0 %v3179
      %v3198 = vpop.f32.mrf.mxu0
      %v3199 = vadd.f32 0.0, %v3198
      %3200 = vdwg.mxu0
      %v3201 = vmul.f32 %v3199, 0.17677669
      %3202 = vst [vmem:[%s1228] sm:$0x7f] %v3201
      %p3203 = scmp.lt.s32.totalorder %s90, 1
      %s3204 = scalar_select %p3203, %s90, 1
      %s3205 = smul.addr %s3204, 8
      %s3206 = scalar_lea.vmem %s79, %s3205
      // Predicated region
      $region177: #{fwd.1} parent=175 // pred_check
        %p3207 = pneg %p947
      $region178: #{fwd.1} parent=175 // pred_check_branch
        %3209 = sbr.rel (%p3207) target = $region180
      $region179: #{fwd.1} parent=175 // pred_region
        _
      $region180: #{fwd.1} parent=175 // pred_fallthru
        _
    $region176: #{fwd.1} parent=5 // pred_fallthru
      _
    %p3210 = scmp.le.s32.totalorder 2, %s85
    // Predicated region
    $region181: #{fwd.1} parent=5 // pred_check
      %p3211 = pneg %p3210
    $region182: #{fwd.1} parent=5 // pred_check_branch
      %3213 = sbr.rel (%p3211) target = $region184
    $region183: #{fwd.1} parent=5 // pred_region
      %s3214 = ssub.s32 %s85, 2
      // Predicated region
      $region185: #{fwd.1} parent=183 // pred_check
        %p3215 = pneg %p953
      $region186: #{fwd.1} parent=183 // pred_check_branch
        %3217 = sbr.rel (%p3215) target = $region188
      $region187: #{fwd.1} parent=183 // pred_region
        %p3218 = scmp.lt.s32.totalorder %s91, 1
        %s3219 = scalar_select %p3218, %s91, 1
        %s3220 = smul.addr %s3219, 8
        %s3221 = scalar_lea.vmem %s79, %s3220
      $region188: #{fwd.1} parent=183 // pred_fallthru
        _
    $region184: #{fwd.1} parent=5 // pred_fallthru
      _
  $region6: #{fwd.1} parent=0 // loop_footer
    %s89 = sadd.s32 1, %s85
  $region7: #{fwd.1} parent=0 // loop_footer_branch
    %84 = sbr.rel target = $region3
  $region8: #{fwd.1} parent=0 // loop_exit
    _

</llo_original>
